<compile_context>
chip_gen: v5e
topology: v5e:2x2
jax: 0.10.0
libtpu: 0.0.40
codegen_flags: <defaults>
</compile_context>

<pallas_src>
import functools

import jax
import jax.numpy as jnp
from jax import lax
from jax.experimental import pallas as pl
from jax.experimental.pallas import tpu as pltpu


def _vin_kernel(mask_ref, x_ref, wh_ref, bh_ref, wr_ref, wq_ref, ww_ref,
                wfc_ref, out_ref, *, k, W, pad):
    f32 = jnp.float32
    b_tile = x_ref.shape[0]
    lq_out = out_ref.shape[1]

    # Tiny weights (a few KiB) -- loaded once per grid step, no HxW broadcast.
    m_left = mask_ref[0:1, :]     # 0 where w == 0     (for the dx = -1 taps)
    m_right = mask_ref[1:2, :]    # 0 where w == W - 1 (for the dx = +1 taps)
    wh = wh_ref[...]              # [l_h, 9*l_i]
    bh = bh_ref[...]              # [l_h, 1]
    wr = wr_ref[...]              # [1, l_h]
    wq = wq_ref[...]              # [l_q, 9]
    ww = ww_ref[...]              # [l_q, 9]

    def shift_stack(a):
        """[C, HW] -> [9*C, HW]: the 9 zero-padded 3x3-neighbourhood shifts.

        Row (tap*C + c) holds a[c, p + dy*W + dx] (tap = (dy+1)*3 + (dx+1)),
        zero outside the HxW image. Vertical out-of-range falls into the
        128-aligned lane padding; horizontal wrap is masked out.
        """
        C, HW = a.shape
        z = jnp.zeros((C, pad), a.dtype)
        ap = jnp.concatenate([z, a, z], axis=-1)   # 128-aligned lane concat
        pieces = []
        for dy in (-1, 0, 1):
            for dx in (-1, 0, 1):
                s = dy * W + dx
                sl = ap[:, pad + s: pad + s + HW]  # static lane slice
                if dx == -1:
                    sl = sl * m_left
                elif dx == 1:
                    sl = sl * m_right
                pieces.append(sl)
        return jnp.concatenate(pieces, axis=0)     # [9*C, HW]

    n_iter = max(int(k), 1)
    qs = []
    for b in range(b_tile):
        x = x_ref[b]                                              # [l_i, HW]
        # h = Conv2d(l_i -> l_h, 3x3, pad=1) + bias      (one MXU matmul, K=9*l_i)
        h = jnp.dot(wh, shift_stack(x), preferred_element_type=f32) + bh
        # r = Conv2d(l_h -> 1, 1x1, no bias)
        r = jnp.dot(wr, h, preferred_element_type=f32)            # [1, HW]
        # loop-invariant part: conv(r, Wq)
        qr = jnp.dot(wq, shift_stack(r), preferred_element_type=f32)  # [l_q, HW]

        def vi_step(q):
            v = jnp.max(q, axis=0, keepdims=True)                 # [1, HW]
            return qr + jnp.dot(ww, shift_stack(v),
                                preferred_element_type=f32)

        # value iteration: q0 = qr; then k x {v = max(q); q = qr + conv(v, Ww)}
        q = qr
        if n_iter <= 8:
            for _ in range(n_iter):          # small k: unroll (LLO visibility)
                q = vi_step(q)
        else:                                # large k: bounded trace/live ranges
            q = lax.fori_loop(0, n_iter, lambda _, qq: vi_step(qq), q)
        qs.append(q)                                              # [l_q, HW]

    # fc on the MXU, batched over the examples of this grid step:
    # logits[b, o] = sum_{c, p} q_b[c, p] * Wfc[o, c*HW + p]
    acc = jnp.zeros((b_tile, lq_out), f32)
    for c in range(qs[0].shape[0]):
        qc = jnp.concatenate([qs[b][c:c + 1, :] for b in range(b_tile)],
                             axis=0)                              # [b_tile, HW]
        acc = acc + jnp.dot(qc, wfc_ref[c], preferred_element_type=f32)
    out_ref[...] = acc                                            # [b_tile, l_q]


def vin_pallas(X, Wh, bh, Wr, Wq, Ww, Wfc, *, k):
    """X: [N, l_i, H, W] (NCHW like PyTorch). Returns logits [N, l_q]."""
    N, l_i, H, W = X.shape
    l_h = Wh.shape[0]
    l_q = Wq.shape[0]
    HW = H * W
    pad = ((W + 1 + 127) // 128) * 128   # lane padding, 128-aligned, >= W+1

    # Flattened NCHW activations [N, C, H*W]: spatial goes to the lane dim so
    # every per-pixel channel mix is a dense [Cout, K] x [K, H*W] MXU matmul.
    x_flat = X.reshape(N, l_i, HW).astype(jnp.float32)

    # Tiny, un-broadcast weights.
    wh_mat = jnp.transpose(Wh, (0, 2, 3, 1)).reshape(l_h, 9 * l_i).astype(jnp.float32)
    bh_col = bh.reshape(l_h, 1).astype(jnp.float32)
    wr_row = Wr.reshape(1, l_h).astype(jnp.float32)
    wq_mat = Wq.reshape(l_q, 9).astype(jnp.float32)
    ww_mat = Ww.reshape(l_q, 9).astype(jnp.float32)
    # fc weight permuted so the kernel's (C, H*W) q layout contracts directly.
    wfc3 = jnp.transpose(Wfc.reshape(l_q, l_q, HW), (1, 2, 0)).astype(jnp.float32)

    # Column-validity masks for the horizontal taps of the flattened spatial
    # axis (vertical out-of-range is handled by the lane zero-padding).
    col = jnp.arange(HW, dtype=jnp.int32) % W
    masks = jnp.stack([(col != 0).astype(jnp.float32),       # dx = -1
                       (col != W - 1).astype(jnp.float32)],  # dx = +1
                      axis=0)                                 # [2, HW]

    if N <= 8:
        b_tile = N
    elif N % 8 == 0:
        b_tile = 8
    else:
        b_tile = max(d for d in range(1, 9) if N % d == 0)
    grid = (N // b_tile,)
    const2 = lambda g: (0, 0)
    const3 = lambda g: (0, 0, 0)

    out = pl.pallas_call(
        functools.partial(_vin_kernel, k=k, W=W, pad=pad),
        grid=grid,
        in_specs=[
            pl.BlockSpec((2, HW), const2),                         # masks
            pl.BlockSpec((b_tile, l_i, HW), lambda g: (g, 0, 0)),  # x
            pl.BlockSpec((l_h, 9 * l_i), const2),                  # Wh
            pl.BlockSpec((l_h, 1), const2),                        # bh
            pl.BlockSpec((1, l_h), const2),                        # Wr
            pl.BlockSpec((l_q, 9), const2),                        # Wq
            pl.BlockSpec((l_q, 9), const2),                        # self.w
            pl.BlockSpec((l_q, HW, l_q), const3),                  # fc weight
        ],
        out_specs=pl.BlockSpec((b_tile, l_q), lambda g: (g, 0)),
        out_shape=jax.ShapeDtypeStruct((N, l_q), jnp.float32),
        compiler_params=pltpu.CompilerParams(
            dimension_semantics=("parallel",)),  # independent batch tiles
    )(masks, x_flat, wh_mat, bh_col, wr_row, wq_mat, ww_mat, wfc3)
    return out


def vin_reference(X, Wh, bh, Wr, Wq, Ww, Wfc, *, k):
    """Pure-JAX reference matching the PyTorch forward exactly (NCHW)."""
    dn = ("NCHW", "OIHW", "NCHW")
    prec = lax.Precision.HIGHEST
    conv = lambda lhs, rhs, pad: lax.conv_general_dilated(
        lhs, rhs, (1, 1), ((pad, pad), (pad, pad)),
        dimension_numbers=dn, precision=prec)
    h = conv(X, Wh, 1) + bh[None, :, None, None]
    r = conv(h, Wr, 0)
    q = conv(r, Wq, 1)
    v = jnp.max(q, axis=1, keepdims=True)
    w_cat = jnp.concatenate([Wq, Ww], axis=1)
    for _ in range(k - 1):
        q = conv(jnp.concatenate([r, v], axis=1), w_cat, 1)
        v = jnp.max(q, axis=1, keepdims=True)
    q = conv(jnp.concatenate([r, v], axis=1), w_cat, 1)
    q_flat = q.reshape(q.shape[0], -1)
    return jnp.dot(q_flat, Wfc.T, precision=prec)


if __name__ == "__main__":
    # Small config consistent with VIN.__init__: (l_i, l_h, l_q, k), spatial H=W.
    N, l_i, l_h, l_q, K = 2, 4, 8, 8, 3
    H = W = 16

    key = jax.random.PRNGKey(0)
    ks = jax.random.split(key, 7)
    X = jax.random.normal(ks[0], (N, l_i, H, W), jnp.float32)
    Wh = 0.1 * jax.random.normal(ks[1], (l_h, l_i, 3, 3), jnp.float32)
    bh = 0.1 * jax.random.normal(ks[2], (l_h,), jnp.float32)
    Wr = 0.1 * jax.random.normal(ks[3], (1, l_h, 1, 1), jnp.float32)
    Wq = 0.1 * jax.random.normal(ks[4], (l_q, 1, 3, 3), jnp.float32)
    # PyTorch initializes self.w to zeros; random here to exercise the path.
    Ww = 0.1 * jax.random.normal(ks[5], (l_q, 1, 3, 3), jnp.float32)
    # fc in_features = l_q*H*W at these small shapes (original hardcodes 302400).
    Wfc = 0.1 * jax.random.normal(ks[6], (l_q, l_q * H * W), jnp.float32)

    logits = vin_pallas(X, Wh, bh, Wr, Wq, Ww, Wfc, k=K)
    jax.block_until_ready(logits)

    ref = vin_reference(X, Wh, bh, Wr, Wq, Ww, Wfc, k=K)
    assert logits.shape == (N, l_q)
    max_err = float(jnp.max(jnp.abs(logits - ref)))
    # MXU f32 matmul passes may round slightly differently from the
    # HIGHEST-precision conv reference; any structural/indexing bug would be
    # O(0.1+), so 1e-2 still catches real errors.
    assert bool(jnp.allclose(logits, ref, rtol=1e-2, atol=1e-2)), max_err
    print("KERNEL_OK")
</pallas_src>

<mosaic_0001>
module attributes {stable_mosaic.version = 11 : i64} {
  func.func @_vin_kernel(%arg0: i32, %arg1: memref<2x256xf32, #tpu.memory_space<vmem>>, %arg2: memref<2x4x256xf32, #tpu.memory_space<vmem>>, %arg3: memref<8x36xf32, #tpu.memory_space<vmem>>, %arg4: memref<8x1xf32, #tpu.memory_space<vmem>>, %arg5: memref<1x8xf32, #tpu.memory_space<vmem>>, %arg6: memref<8x9xf32, #tpu.memory_space<vmem>>, %arg7: memref<8x9xf32, #tpu.memory_space<vmem>>, %arg8: memref<8x256x8xf32, #tpu.memory_space<vmem>>, %arg9: memref<2x8xf32, #tpu.memory_space<vmem>>) attributes {dimension_semantics = [#tpu.dimension_semantics<parallel>], iteration_bounds = array<i64: 1>, scalar_prefetch = 0 : i64, scratch_operands = 0 : i64, tpu.core_type = #tpu.core_type<tc>, window_params = [{pipeline_mode = #tpu.pipeline_mode<synchronous>, transform_indices = @transform_0, window_bounds = array<i64: 2, 256>}, {transform_indices = @transform_1, window_bounds = array<i64: 2, 4, 256>}, {pipeline_mode = #tpu.pipeline_mode<synchronous>, transform_indices = @transform_2, window_bounds = array<i64: 8, 36>}, {pipeline_mode = #tpu.pipeline_mode<synchronous>, transform_indices = @transform_3, window_bounds = array<i64: 8, 1>}, {pipeline_mode = #tpu.pipeline_mode<synchronous>, transform_indices = @transform_4, window_bounds = array<i64: 1, 8>}, {pipeline_mode = #tpu.pipeline_mode<synchronous>, transform_indices = @transform_5, window_bounds = array<i64: 8, 9>}, {pipeline_mode = #tpu.pipeline_mode<synchronous>, transform_indices = @transform_6, window_bounds = array<i64: 8, 9>}, {pipeline_mode = #tpu.pipeline_mode<synchronous>, transform_indices = @transform_7, window_bounds = array<i64: 8, 256, 8>}, {transform_indices = @transform_8, window_bounds = array<i64: 2, 8>}]} {
    %c0 = arith.constant 0 : index
    %c0_0 = arith.constant 0 : index
    %0 = vector.load %arg1[%c0, %c0_0] : memref<2x256xf32, #tpu.memory_space<vmem>>, vector<1x256xf32>
    %c1 = arith.constant 1 : index
    %c0_1 = arith.constant 0 : index
    %1 = vector.load %arg1[%c1, %c0_1] : memref<2x256xf32, #tpu.memory_space<vmem>>, vector<1x256xf32>
    %c0_2 = arith.constant 0 : index
    %c0_3 = arith.constant 0 : index
    %2 = vector.load %arg3[%c0_2, %c0_3] : memref<8x36xf32, #tpu.memory_space<vmem>>, vector<8x36xf32>
    %c0_4 = arith.constant 0 : index
    %c0_5 = arith.constant 0 : index
    %3 = vector.load %arg4[%c0_4, %c0_5] : memref<8x1xf32, #tpu.memory_space<vmem>>, vector<8x1xf32>
    %c0_6 = arith.constant 0 : index
    %c0_7 = arith.constant 0 : index
    %4 = vector.load %arg5[%c0_6, %c0_7] : memref<1x8xf32, #tpu.memory_space<vmem>>, vector<1x8xf32>
    %c0_8 = arith.constant 0 : index
    %c0_9 = arith.constant 0 : index
    %5 = vector.load %arg6[%c0_8, %c0_9] : memref<8x9xf32, #tpu.memory_space<vmem>>, vector<8x9xf32>
    %c0_10 = arith.constant 0 : index
    %c0_11 = arith.constant 0 : index
    %6 = vector.load %arg7[%c0_10, %c0_11] : memref<8x9xf32, #tpu.memory_space<vmem>>, vector<8x9xf32>
    %c0_12 = arith.constant 0 : index
    %c0_13 = arith.constant 0 : index
    %c0_14 = arith.constant 0 : index
    %7 = vector.load %arg2[%c0_12, %c0_13, %c0_14] : memref<2x4x256xf32, #tpu.memory_space<vmem>>, vector<1x4x256xf32>
    %8 = vector.shape_cast %7 : vector<1x4x256xf32> to vector<4x256xf32>
    %cst = arith.constant 0.000000e+00 : f32
    %9 = vector.broadcast %cst : f32 to vector<4x128xf32>
    %10 = tpu.concatenate %9, %8, %9 in 1 : vector<4x128xf32>, vector<4x256xf32>, vector<4x128xf32> -> vector<4x512xf32>
    %11 = vector.extract_strided_slice %10 {offsets = [0, 111], sizes = [4, 256], strides = [1, 1]} : vector<4x512xf32> to vector<4x256xf32>
    %12 = vector.broadcast %0 : vector<1x256xf32> to vector<4x256xf32>
    %13 = arith.mulf %11, %12 : vector<4x256xf32>
    %14 = vector.extract_strided_slice %10 {offsets = [0, 112], sizes = [4, 256], strides = [1, 1]} : vector<4x512xf32> to vector<4x256xf32>
    %15 = vector.extract_strided_slice %10 {offsets = [0, 113], sizes = [4, 256], strides = [1, 1]} : vector<4x512xf32> to vector<4x256xf32>
    %16 = vector.broadcast %1 : vector<1x256xf32> to vector<4x256xf32>
    %17 = arith.mulf %15, %16 : vector<4x256xf32>
    %18 = vector.extract_strided_slice %10 {offsets = [0, 127], sizes = [4, 256], strides = [1, 1]} : vector<4x512xf32> to vector<4x256xf32>
    %19 = vector.broadcast %0 : vector<1x256xf32> to vector<4x256xf32>
    %20 = arith.mulf %18, %19 : vector<4x256xf32>
    %21 = vector.extract_strided_slice %10 {offsets = [0, 128], sizes = [4, 256], strides = [1, 1]} : vector<4x512xf32> to vector<4x256xf32>
    %22 = vector.extract_strided_slice %10 {offsets = [0, 129], sizes = [4, 256], strides = [1, 1]} : vector<4x512xf32> to vector<4x256xf32>
    %23 = vector.broadcast %1 : vector<1x256xf32> to vector<4x256xf32>
    %24 = arith.mulf %22, %23 : vector<4x256xf32>
    %25 = vector.extract_strided_slice %10 {offsets = [0, 143], sizes = [4, 256], strides = [1, 1]} : vector<4x512xf32> to vector<4x256xf32>
    %26 = vector.broadcast %0 : vector<1x256xf32> to vector<4x256xf32>
    %27 = arith.mulf %25, %26 : vector<4x256xf32>
    %28 = vector.extract_strided_slice %10 {offsets = [0, 144], sizes = [4, 256], strides = [1, 1]} : vector<4x512xf32> to vector<4x256xf32>
    %29 = vector.extract_strided_slice %10 {offsets = [0, 145], sizes = [4, 256], strides = [1, 1]} : vector<4x512xf32> to vector<4x256xf32>
    %30 = vector.broadcast %1 : vector<1x256xf32> to vector<4x256xf32>
    %31 = arith.mulf %29, %30 : vector<4x256xf32>
    %32 = tpu.concatenate %13, %14, %17, %20, %21, %24, %27, %28, %31 in 0 : vector<4x256xf32>, vector<4x256xf32>, vector<4x256xf32>, vector<4x256xf32>, vector<4x256xf32>, vector<4x256xf32>, vector<4x256xf32>, vector<4x256xf32>, vector<4x256xf32> -> vector<36x256xf32>
    %cst_15 = arith.constant dense<0.000000e+00> : vector<8x256xf32>
    %33 = tpu.matmul %2, %32, %cst_15 {dimension_numbers = #tpu.dot_dimension_numbers<[1], [0], [0], [1], [0, 0, 1, 1], [], []>} : vector<8x36xf32>, vector<36x256xf32>, vector<8x256xf32> -> vector<8x256xf32>
    %34 = vector.broadcast %3 : vector<8x1xf32> to vector<8x256xf32>
    %35 = arith.addf %33, %34 : vector<8x256xf32>
    %cst_16 = arith.constant dense<0.000000e+00> : vector<1x256xf32>
    %36 = tpu.matmul %4, %35, %cst_16 {dimension_numbers = #tpu.dot_dimension_numbers<[1], [0], [0], [1], [0, 0, 1, 1], [], []>} : vector<1x8xf32>, vector<8x256xf32>, vector<1x256xf32> -> vector<1x256xf32>
    %cst_17 = arith.constant 0.000000e+00 : f32
    %37 = vector.broadcast %cst_17 : f32 to vector<1x128xf32>
    %38 = tpu.concatenate %37, %36, %37 in 1 : vector<1x128xf32>, vector<1x256xf32>, vector<1x128xf32> -> vector<1x512xf32>
    %39 = vector.extract_strided_slice %38 {offsets = [0, 111], sizes = [1, 256], strides = [1, 1]} : vector<1x512xf32> to vector<1x256xf32>
    %40 = arith.mulf %39, %0 : vector<1x256xf32>
    %41 = vector.extract_strided_slice %38 {offsets = [0, 112], sizes = [1, 256], strides = [1, 1]} : vector<1x512xf32> to vector<1x256xf32>
    %42 = vector.extract_strided_slice %38 {offsets = [0, 113], sizes = [1, 256], strides = [1, 1]} : vector<1x512xf32> to vector<1x256xf32>
    %43 = arith.mulf %42, %1 : vector<1x256xf32>
    %44 = vector.extract_strided_slice %38 {offsets = [0, 127], sizes = [1, 256], strides = [1, 1]} : vector<1x512xf32> to vector<1x256xf32>
    %45 = arith.mulf %44, %0 : vector<1x256xf32>
    %46 = vector.extract_strided_slice %38 {offsets = [0, 128], sizes = [1, 256], strides = [1, 1]} : vector<1x512xf32> to vector<1x256xf32>
    %47 = vector.extract_strided_slice %38 {offsets = [0, 129], sizes = [1, 256], strides = [1, 1]} : vector<1x512xf32> to vector<1x256xf32>
    %48 = arith.mulf %47, %1 : vector<1x256xf32>
    %49 = vector.extract_strided_slice %38 {offsets = [0, 143], sizes = [1, 256], strides = [1, 1]} : vector<1x512xf32> to vector<1x256xf32>
    %50 = arith.mulf %49, %0 : vector<1x256xf32>
    %51 = vector.extract_strided_slice %38 {offsets = [0, 144], sizes = [1, 256], strides = [1, 1]} : vector<1x512xf32> to vector<1x256xf32>
    %52 = vector.extract_strided_slice %38 {offsets = [0, 145], sizes = [1, 256], strides = [1, 1]} : vector<1x512xf32> to vector<1x256xf32>
    %53 = arith.mulf %52, %1 : vector<1x256xf32>
    %54 = tpu.concatenate %40, %41, %43, %45, %46, %48, %50, %51, %53 in 0 : vector<1x256xf32>, vector<1x256xf32>, vector<1x256xf32>, vector<1x256xf32>, vector<1x256xf32>, vector<1x256xf32>, vector<1x256xf32>, vector<1x256xf32>, vector<1x256xf32> -> vector<9x256xf32>
    %cst_18 = arith.constant dense<0.000000e+00> : vector<8x256xf32>
    %55 = tpu.matmul %5, %54, %cst_18 {dimension_numbers = #tpu.dot_dimension_numbers<[1], [0], [0], [1], [0, 0, 1, 1], [], []>} : vector<8x9xf32>, vector<9x256xf32>, vector<8x256xf32> -> vector<8x256xf32>
    %cst_19 = arith.constant dense<0xFF800000> : vector<256xf32>
    %56 = vector.multi_reduction <maximumf>, %55, %cst_19 [0] : vector<8x256xf32> to vector<256xf32>
    %57 = vector.shape_cast %56 : vector<256xf32> to vector<1x256xf32>
    %cst_20 = arith.constant 0.000000e+00 : f32
    %58 = vector.broadcast %cst_20 : f32 to vector<1x128xf32>
    %59 = tpu.concatenate %58, %57, %58 in 1 : vector<1x128xf32>, vector<1x256xf32>, vector<1x128xf32> -> vector<1x512xf32>
    %60 = vector.extract_strided_slice %59 {offsets = [0, 111], sizes = [1, 256], strides = [1, 1]} : vector<1x512xf32> to vector<1x256xf32>
    %61 = arith.mulf %60, %0 : vector<1x256xf32>
    %62 = vector.extract_strided_slice %59 {offsets = [0, 112], sizes = [1, 256], strides = [1, 1]} : vector<1x512xf32> to vector<1x256xf32>
    %63 = vector.extract_strided_slice %59 {offsets = [0, 113], sizes = [1, 256], strides = [1, 1]} : vector<1x512xf32> to vector<1x256xf32>
    %64 = arith.mulf %63, %1 : vector<1x256xf32>
    %65 = vector.extract_strided_slice %59 {offsets = [0, 127], sizes = [1, 256], strides = [1, 1]} : vector<1x512xf32> to vector<1x256xf32>
    %66 = arith.mulf %65, %0 : vector<1x256xf32>
    %67 = vector.extract_strided_slice %59 {offsets = [0, 128], sizes = [1, 256], strides = [1, 1]} : vector<1x512xf32> to vector<1x256xf32>
    %68 = vector.extract_strided_slice %59 {offsets = [0, 129], sizes = [1, 256], strides = [1, 1]} : vector<1x512xf32> to vector<1x256xf32>
    %69 = arith.mulf %68, %1 : vector<1x256xf32>
    %70 = vector.extract_strided_slice %59 {offsets = [0, 143], sizes = [1, 256], strides = [1, 1]} : vector<1x512xf32> to vector<1x256xf32>
    %71 = arith.mulf %70, %0 : vector<1x256xf32>
    %72 = vector.extract_strided_slice %59 {offsets = [0, 144], sizes = [1, 256], strides = [1, 1]} : vector<1x512xf32> to vector<1x256xf32>
    %73 = vector.extract_strided_slice %59 {offsets = [0, 145], sizes = [1, 256], strides = [1, 1]} : vector<1x512xf32> to vector<1x256xf32>
    %74 = arith.mulf %73, %1 : vector<1x256xf32>
    %75 = tpu.concatenate %61, %62, %64, %66, %67, %69, %71, %72, %74 in 0 : vector<1x256xf32>, vector<1x256xf32>, vector<1x256xf32>, vector<1x256xf32>, vector<1x256xf32>, vector<1x256xf32>, vector<1x256xf32>, vector<1x256xf32>, vector<1x256xf32> -> vector<9x256xf32>
    %cst_21 = arith.constant dense<0.000000e+00> : vector<8x256xf32>
    %76 = tpu.matmul %6, %75, %cst_21 {dimension_numbers = #tpu.dot_dimension_numbers<[1], [0], [0], [1], [0, 0, 1, 1], [], []>} : vector<8x9xf32>, vector<9x256xf32>, vector<8x256xf32> -> vector<8x256xf32>
    %77 = arith.addf %55, %76 : vector<8x256xf32>
    %cst_22 = arith.constant dense<0xFF800000> : vector<256xf32>
    %78 = vector.multi_reduction <maximumf>, %77, %cst_22 [0] : vector<8x256xf32> to vector<256xf32>
    %79 = vector.shape_cast %78 : vector<256xf32> to vector<1x256xf32>
    %cst_23 = arith.constant 0.000000e+00 : f32
    %80 = vector.broadcast %cst_23 : f32 to vector<1x128xf32>
    %81 = tpu.concatenate %80, %79, %80 in 1 : vector<1x128xf32>, vector<1x256xf32>, vector<1x128xf32> -> vector<1x512xf32>
    %82 = vector.extract_strided_slice %81 {offsets = [0, 111], sizes = [1, 256], strides = [1, 1]} : vector<1x512xf32> to vector<1x256xf32>
    %83 = arith.mulf %82, %0 : vector<1x256xf32>
    %84 = vector.extract_strided_slice %81 {offsets = [0, 112], sizes = [1, 256], strides = [1, 1]} : vector<1x512xf32> to vector<1x256xf32>
    %85 = vector.extract_strided_slice %81 {offsets = [0, 113], sizes = [1, 256], strides = [1, 1]} : vector<1x512xf32> to vector<1x256xf32>
    %86 = arith.mulf %85, %1 : vector<1x256xf32>
    %87 = vector.extract_strided_slice %81 {offsets = [0, 127], sizes = [1, 256], strides = [1, 1]} : vector<1x512xf32> to vector<1x256xf32>
    %88 = arith.mulf %87, %0 : vector<1x256xf32>
    %89 = vector.extract_strided_slice %81 {offsets = [0, 128], sizes = [1, 256], strides = [1, 1]} : vector<1x512xf32> to vector<1x256xf32>
    %90 = vector.extract_strided_slice %81 {offsets = [0, 129], sizes = [1, 256], strides = [1, 1]} : vector<1x512xf32> to vector<1x256xf32>
    %91 = arith.mulf %90, %1 : vector<1x256xf32>
    %92 = vector.extract_strided_slice %81 {offsets = [0, 143], sizes = [1, 256], strides = [1, 1]} : vector<1x512xf32> to vector<1x256xf32>
    %93 = arith.mulf %92, %0 : vector<1x256xf32>
    %94 = vector.extract_strided_slice %81 {offsets = [0, 144], sizes = [1, 256], strides = [1, 1]} : vector<1x512xf32> to vector<1x256xf32>
    %95 = vector.extract_strided_slice %81 {offsets = [0, 145], sizes = [1, 256], strides = [1, 1]} : vector<1x512xf32> to vector<1x256xf32>
    %96 = arith.mulf %95, %1 : vector<1x256xf32>
    %97 = tpu.concatenate %83, %84, %86, %88, %89, %91, %93, %94, %96 in 0 : vector<1x256xf32>, vector<1x256xf32>, vector<1x256xf32>, vector<1x256xf32>, vector<1x256xf32>, vector<1x256xf32>, vector<1x256xf32>, vector<1x256xf32>, vector<1x256xf32> -> vector<9x256xf32>
    %cst_24 = arith.constant dense<0.000000e+00> : vector<8x256xf32>
    %98 = tpu.matmul %6, %97, %cst_24 {dimension_numbers = #tpu.dot_dimension_numbers<[1], [0], [0], [1], [0, 0, 1, 1], [], []>} : vector<8x9xf32>, vector<9x256xf32>, vector<8x256xf32> -> vector<8x256xf32>
    %99 = arith.addf %55, %98 : vector<8x256xf32>
    %cst_25 = arith.constant dense<0xFF800000> : vector<256xf32>
    %100 = vector.multi_reduction <maximumf>, %99, %cst_25 [0] : vector<8x256xf32> to vector<256xf32>
    %101 = vector.shape_cast %100 : vector<256xf32> to vector<1x256xf32>
    %cst_26 = arith.constant 0.000000e+00 : f32
    %102 = vector.broadcast %cst_26 : f32 to vector<1x128xf32>
    %103 = tpu.concatenate %102, %101, %102 in 1 : vector<1x128xf32>, vector<1x256xf32>, vector<1x128xf32> -> vector<1x512xf32>
    %104 = vector.extract_strided_slice %103 {offsets = [0, 111], sizes = [1, 256], strides = [1, 1]} : vector<1x512xf32> to vector<1x256xf32>
    %105 = arith.mulf %104, %0 : vector<1x256xf32>
    %106 = vector.extract_strided_slice %103 {offsets = [0, 112], sizes = [1, 256], strides = [1, 1]} : vector<1x512xf32> to vector<1x256xf32>
    %107 = vector.extract_strided_slice %103 {offsets = [0, 113], sizes = [1, 256], strides = [1, 1]} : vector<1x512xf32> to vector<1x256xf32>
    %108 = arith.mulf %107, %1 : vector<1x256xf32>
    %109 = vector.extract_strided_slice %103 {offsets = [0, 127], sizes = [1, 256], strides = [1, 1]} : vector<1x512xf32> to vector<1x256xf32>
    %110 = arith.mulf %109, %0 : vector<1x256xf32>
    %111 = vector.extract_strided_slice %103 {offsets = [0, 128], sizes = [1, 256], strides = [1, 1]} : vector<1x512xf32> to vector<1x256xf32>
    %112 = vector.extract_strided_slice %103 {offsets = [0, 129], sizes = [1, 256], strides = [1, 1]} : vector<1x512xf32> to vector<1x256xf32>
    %113 = arith.mulf %112, %1 : vector<1x256xf32>
    %114 = vector.extract_strided_slice %103 {offsets = [0, 143], sizes = [1, 256], strides = [1, 1]} : vector<1x512xf32> to vector<1x256xf32>
    %115 = arith.mulf %114, %0 : vector<1x256xf32>
    %116 = vector.extract_strided_slice %103 {offsets = [0, 144], sizes = [1, 256], strides = [1, 1]} : vector<1x512xf32> to vector<1x256xf32>
    %117 = vector.extract_strided_slice %103 {offsets = [0, 145], sizes = [1, 256], strides = [1, 1]} : vector<1x512xf32> to vector<1x256xf32>
    %118 = arith.mulf %117, %1 : vector<1x256xf32>
    %119 = tpu.concatenate %105, %106, %108, %110, %111, %113, %115, %116, %118 in 0 : vector<1x256xf32>, vector<1x256xf32>, vector<1x256xf32>, vector<1x256xf32>, vector<1x256xf32>, vector<1x256xf32>, vector<1x256xf32>, vector<1x256xf32>, vector<1x256xf32> -> vector<9x256xf32>
    %cst_27 = arith.constant dense<0.000000e+00> : vector<8x256xf32>
    %120 = tpu.matmul %6, %119, %cst_27 {dimension_numbers = #tpu.dot_dimension_numbers<[1], [0], [0], [1], [0, 0, 1, 1], [], []>} : vector<8x9xf32>, vector<9x256xf32>, vector<8x256xf32> -> vector<8x256xf32>
    %121 = arith.addf %55, %120 : vector<8x256xf32>
    %c1_28 = arith.constant 1 : index
    %c0_29 = arith.constant 0 : index
    %c0_30 = arith.constant 0 : index
    %122 = vector.load %arg2[%c1_28, %c0_29, %c0_30] : memref<2x4x256xf32, #tpu.memory_space<vmem>>, vector<1x4x256xf32>
    %123 = vector.shape_cast %122 : vector<1x4x256xf32> to vector<4x256xf32>
    %cst_31 = arith.constant 0.000000e+00 : f32
    %124 = vector.broadcast %cst_31 : f32 to vector<4x128xf32>
    %125 = tpu.concatenate %124, %123, %124 in 1 : vector<4x128xf32>, vector<4x256xf32>, vector<4x128xf32> -> vector<4x512xf32>
    %126 = vector.extract_strided_slice %125 {offsets = [0, 111], sizes = [4, 256], strides = [1, 1]} : vector<4x512xf32> to vector<4x256xf32>
    %127 = vector.broadcast %0 : vector<1x256xf32> to vector<4x256xf32>
    %128 = arith.mulf %126, %127 : vector<4x256xf32>
    %129 = vector.extract_strided_slice %125 {offsets = [0, 112], sizes = [4, 256], strides = [1, 1]} : vector<4x512xf32> to vector<4x256xf32>
    %130 = vector.extract_strided_slice %125 {offsets = [0, 113], sizes = [4, 256], strides = [1, 1]} : vector<4x512xf32> to vector<4x256xf32>
    %131 = vector.broadcast %1 : vector<1x256xf32> to vector<4x256xf32>
    %132 = arith.mulf %130, %131 : vector<4x256xf32>
    %133 = vector.extract_strided_slice %125 {offsets = [0, 127], sizes = [4, 256], strides = [1, 1]} : vector<4x512xf32> to vector<4x256xf32>
    %134 = vector.broadcast %0 : vector<1x256xf32> to vector<4x256xf32>
    %135 = arith.mulf %133, %134 : vector<4x256xf32>
    %136 = vector.extract_strided_slice %125 {offsets = [0, 128], sizes = [4, 256], strides = [1, 1]} : vector<4x512xf32> to vector<4x256xf32>
    %137 = vector.extract_strided_slice %125 {offsets = [0, 129], sizes = [4, 256], strides = [1, 1]} : vector<4x512xf32> to vector<4x256xf32>
    %138 = vector.broadcast %1 : vector<1x256xf32> to vector<4x256xf32>
    %139 = arith.mulf %137, %138 : vector<4x256xf32>
    %140 = vector.extract_strided_slice %125 {offsets = [0, 143], sizes = [4, 256], strides = [1, 1]} : vector<4x512xf32> to vector<4x256xf32>
    %141 = vector.broadcast %0 : vector<1x256xf32> to vector<4x256xf32>
    %142 = arith.mulf %140, %141 : vector<4x256xf32>
    %143 = vector.extract_strided_slice %125 {offsets = [0, 144], sizes = [4, 256], strides = [1, 1]} : vector<4x512xf32> to vector<4x256xf32>
    %144 = vector.extract_strided_slice %125 {offsets = [0, 145], sizes = [4, 256], strides = [1, 1]} : vector<4x512xf32> to vector<4x256xf32>
    %145 = vector.broadcast %1 : vector<1x256xf32> to vector<4x256xf32>
    %146 = arith.mulf %144, %145 : vector<4x256xf32>
    %147 = tpu.concatenate %128, %129, %132, %135, %136, %139, %142, %143, %146 in 0 : vector<4x256xf32>, vector<4x256xf32>, vector<4x256xf32>, vector<4x256xf32>, vector<4x256xf32>, vector<4x256xf32>, vector<4x256xf32>, vector<4x256xf32>, vector<4x256xf32> -> vector<36x256xf32>
    %cst_32 = arith.constant dense<0.000000e+00> : vector<8x256xf32>
    %148 = tpu.matmul %2, %147, %cst_32 {dimension_numbers = #tpu.dot_dimension_numbers<[1], [0], [0], [1], [0, 0, 1, 1], [], []>} : vector<8x36xf32>, vector<36x256xf32>, vector<8x256xf32> -> vector<8x256xf32>
    %149 = vector.broadcast %3 : vector<8x1xf32> to vector<8x256xf32>
    %150 = arith.addf %148, %149 : vector<8x256xf32>
    %cst_33 = arith.constant dense<0.000000e+00> : vector<1x256xf32>
    %151 = tpu.matmul %4, %150, %cst_33 {dimension_numbers = #tpu.dot_dimension_numbers<[1], [0], [0], [1], [0, 0, 1, 1], [], []>} : vector<1x8xf32>, vector<8x256xf32>, vector<1x256xf32> -> vector<1x256xf32>
    %cst_34 = arith.constant 0.000000e+00 : f32
    %152 = vector.broadcast %cst_34 : f32 to vector<1x128xf32>
    %153 = tpu.concatenate %152, %151, %152 in 1 : vector<1x128xf32>, vector<1x256xf32>, vector<1x128xf32> -> vector<1x512xf32>
    %154 = vector.extract_strided_slice %153 {offsets = [0, 111], sizes = [1, 256], strides = [1, 1]} : vector<1x512xf32> to vector<1x256xf32>
    %155 = arith.mulf %154, %0 : vector<1x256xf32>
    %156 = vector.extract_strided_slice %153 {offsets = [0, 112], sizes = [1, 256], strides = [1, 1]} : vector<1x512xf32> to vector<1x256xf32>
    %157 = vector.extract_strided_slice %153 {offsets = [0, 113], sizes = [1, 256], strides = [1, 1]} : vector<1x512xf32> to vector<1x256xf32>
    %158 = arith.mulf %157, %1 : vector<1x256xf32>
    %159 = vector.extract_strided_slice %153 {offsets = [0, 127], sizes = [1, 256], strides = [1, 1]} : vector<1x512xf32> to vector<1x256xf32>
    %160 = arith.mulf %159, %0 : vector<1x256xf32>
    %161 = vector.extract_strided_slice %153 {offsets = [0, 128], sizes = [1, 256], strides = [1, 1]} : vector<1x512xf32> to vector<1x256xf32>
    %162 = vector.extract_strided_slice %153 {offsets = [0, 129], sizes = [1, 256], strides = [1, 1]} : vector<1x512xf32> to vector<1x256xf32>
    %163 = arith.mulf %162, %1 : vector<1x256xf32>
    %164 = vector.extract_strided_slice %153 {offsets = [0, 143], sizes = [1, 256], strides = [1, 1]} : vector<1x512xf32> to vector<1x256xf32>
    %165 = arith.mulf %164, %0 : vector<1x256xf32>
    %166 = vector.extract_strided_slice %153 {offsets = [0, 144], sizes = [1, 256], strides = [1, 1]} : vector<1x512xf32> to vector<1x256xf32>
    %167 = vector.extract_strided_slice %153 {offsets = [0, 145], sizes = [1, 256], strides = [1, 1]} : vector<1x512xf32> to vector<1x256xf32>
    %168 = arith.mulf %167, %1 : vector<1x256xf32>
    %169 = tpu.concatenate %155, %156, %158, %160, %161, %163, %165, %166, %168 in 0 : vector<1x256xf32>, vector<1x256xf32>, vector<1x256xf32>, vector<1x256xf32>, vector<1x256xf32>, vector<1x256xf32>, vector<1x256xf32>, vector<1x256xf32>, vector<1x256xf32> -> vector<9x256xf32>
    %cst_35 = arith.constant dense<0.000000e+00> : vector<8x256xf32>
    %170 = tpu.matmul %5, %169, %cst_35 {dimension_numbers = #tpu.dot_dimension_numbers<[1], [0], [0], [1], [0, 0, 1, 1], [], []>} : vector<8x9xf32>, vector<9x256xf32>, vector<8x256xf32> -> vector<8x256xf32>
    %cst_36 = arith.constant dense<0xFF800000> : vector<256xf32>
    %171 = vector.multi_reduction <maximumf>, %170, %cst_36 [0] : vector<8x256xf32> to vector<256xf32>
    %172 = vector.shape_cast %171 : vector<256xf32> to vector<1x256xf32>
    %cst_37 = arith.constant 0.000000e+00 : f32
    %173 = vector.broadcast %cst_37 : f32 to vector<1x128xf32>
    %174 = tpu.concatenate %173, %172, %173 in 1 : vector<1x128xf32>, vector<1x256xf32>, vector<1x128xf32> -> vector<1x512xf32>
    %175 = vector.extract_strided_slice %174 {offsets = [0, 111], sizes = [1, 256], strides = [1, 1]} : vector<1x512xf32> to vector<1x256xf32>
    %176 = arith.mulf %175, %0 : vector<1x256xf32>
    %177 = vector.extract_strided_slice %174 {offsets = [0, 112], sizes = [1, 256], strides = [1, 1]} : vector<1x512xf32> to vector<1x256xf32>
    %178 = vector.extract_strided_slice %174 {offsets = [0, 113], sizes = [1, 256], strides = [1, 1]} : vector<1x512xf32> to vector<1x256xf32>
    %179 = arith.mulf %178, %1 : vector<1x256xf32>
    %180 = vector.extract_strided_slice %174 {offsets = [0, 127], sizes = [1, 256], strides = [1, 1]} : vector<1x512xf32> to vector<1x256xf32>
    %181 = arith.mulf %180, %0 : vector<1x256xf32>
    %182 = vector.extract_strided_slice %174 {offsets = [0, 128], sizes = [1, 256], strides = [1, 1]} : vector<1x512xf32> to vector<1x256xf32>
    %183 = vector.extract_strided_slice %174 {offsets = [0, 129], sizes = [1, 256], strides = [1, 1]} : vector<1x512xf32> to vector<1x256xf32>
    %184 = arith.mulf %183, %1 : vector<1x256xf32>
    %185 = vector.extract_strided_slice %174 {offsets = [0, 143], sizes = [1, 256], strides = [1, 1]} : vector<1x512xf32> to vector<1x256xf32>
    %186 = arith.mulf %185, %0 : vector<1x256xf32>
    %187 = vector.extract_strided_slice %174 {offsets = [0, 144], sizes = [1, 256], strides = [1, 1]} : vector<1x512xf32> to vector<1x256xf32>
    %188 = vector.extract_strided_slice %174 {offsets = [0, 145], sizes = [1, 256], strides = [1, 1]} : vector<1x512xf32> to vector<1x256xf32>
    %189 = arith.mulf %188, %1 : vector<1x256xf32>
    %190 = tpu.concatenate %176, %177, %179, %181, %182, %184, %186, %187, %189 in 0 : vector<1x256xf32>, vector<1x256xf32>, vector<1x256xf32>, vector<1x256xf32>, vector<1x256xf32>, vector<1x256xf32>, vector<1x256xf32>, vector<1x256xf32>, vector<1x256xf32> -> vector<9x256xf32>
    %cst_38 = arith.constant dense<0.000000e+00> : vector<8x256xf32>
    %191 = tpu.matmul %6, %190, %cst_38 {dimension_numbers = #tpu.dot_dimension_numbers<[1], [0], [0], [1], [0, 0, 1, 1], [], []>} : vector<8x9xf32>, vector<9x256xf32>, vector<8x256xf32> -> vector<8x256xf32>
    %192 = arith.addf %170, %191 : vector<8x256xf32>
    %cst_39 = arith.constant dense<0xFF800000> : vector<256xf32>
    %193 = vector.multi_reduction <maximumf>, %192, %cst_39 [0] : vector<8x256xf32> to vector<256xf32>
    %194 = vector.shape_cast %193 : vector<256xf32> to vector<1x256xf32>
    %cst_40 = arith.constant 0.000000e+00 : f32
    %195 = vector.broadcast %cst_40 : f32 to vector<1x128xf32>
    %196 = tpu.concatenate %195, %194, %195 in 1 : vector<1x128xf32>, vector<1x256xf32>, vector<1x128xf32> -> vector<1x512xf32>
    %197 = vector.extract_strided_slice %196 {offsets = [0, 111], sizes = [1, 256], strides = [1, 1]} : vector<1x512xf32> to vector<1x256xf32>
    %198 = arith.mulf %197, %0 : vector<1x256xf32>
    %199 = vector.extract_strided_slice %196 {offsets = [0, 112], sizes = [1, 256], strides = [1, 1]} : vector<1x512xf32> to vector<1x256xf32>
    %200 = vector.extract_strided_slice %196 {offsets = [0, 113], sizes = [1, 256], strides = [1, 1]} : vector<1x512xf32> to vector<1x256xf32>
    %201 = arith.mulf %200, %1 : vector<1x256xf32>
    %202 = vector.extract_strided_slice %196 {offsets = [0, 127], sizes = [1, 256], strides = [1, 1]} : vector<1x512xf32> to vector<1x256xf32>
    %203 = arith.mulf %202, %0 : vector<1x256xf32>
    %204 = vector.extract_strided_slice %196 {offsets = [0, 128], sizes = [1, 256], strides = [1, 1]} : vector<1x512xf32> to vector<1x256xf32>
    %205 = vector.extract_strided_slice %196 {offsets = [0, 129], sizes = [1, 256], strides = [1, 1]} : vector<1x512xf32> to vector<1x256xf32>
    %206 = arith.mulf %205, %1 : vector<1x256xf32>
    %207 = vector.extract_strided_slice %196 {offsets = [0, 143], sizes = [1, 256], strides = [1, 1]} : vector<1x512xf32> to vector<1x256xf32>
    %208 = arith.mulf %207, %0 : vector<1x256xf32>
    %209 = vector.extract_strided_slice %196 {offsets = [0, 144], sizes = [1, 256], strides = [1, 1]} : vector<1x512xf32> to vector<1x256xf32>
    %210 = vector.extract_strided_slice %196 {offsets = [0, 145], sizes = [1, 256], strides = [1, 1]} : vector<1x512xf32> to vector<1x256xf32>
    %211 = arith.mulf %210, %1 : vector<1x256xf32>
    %212 = tpu.concatenate %198, %199, %201, %203, %204, %206, %208, %209, %211 in 0 : vector<1x256xf32>, vector<1x256xf32>, vector<1x256xf32>, vector<1x256xf32>, vector<1x256xf32>, vector<1x256xf32>, vector<1x256xf32>, vector<1x256xf32>, vector<1x256xf32> -> vector<9x256xf32>
    %cst_41 = arith.constant dense<0.000000e+00> : vector<8x256xf32>
    %213 = tpu.matmul %6, %212, %cst_41 {dimension_numbers = #tpu.dot_dimension_numbers<[1], [0], [0], [1], [0, 0, 1, 1], [], []>} : vector<8x9xf32>, vector<9x256xf32>, vector<8x256xf32> -> vector<8x256xf32>
    %214 = arith.addf %170, %213 : vector<8x256xf32>
    %cst_42 = arith.constant dense<0xFF800000> : vector<256xf32>
    %215 = vector.multi_reduction <maximumf>, %214, %cst_42 [0] : vector<8x256xf32> to vector<256xf32>
    %216 = vector.shape_cast %215 : vector<256xf32> to vector<1x256xf32>
    %cst_43 = arith.constant 0.000000e+00 : f32
    %217 = vector.broadcast %cst_43 : f32 to vector<1x128xf32>
    %218 = tpu.concatenate %217, %216, %217 in 1 : vector<1x128xf32>, vector<1x256xf32>, vector<1x128xf32> -> vector<1x512xf32>
    %219 = vector.extract_strided_slice %218 {offsets = [0, 111], sizes = [1, 256], strides = [1, 1]} : vector<1x512xf32> to vector<1x256xf32>
    %220 = arith.mulf %219, %0 : vector<1x256xf32>
    %221 = vector.extract_strided_slice %218 {offsets = [0, 112], sizes = [1, 256], strides = [1, 1]} : vector<1x512xf32> to vector<1x256xf32>
    %222 = vector.extract_strided_slice %218 {offsets = [0, 113], sizes = [1, 256], strides = [1, 1]} : vector<1x512xf32> to vector<1x256xf32>
    %223 = arith.mulf %222, %1 : vector<1x256xf32>
    %224 = vector.extract_strided_slice %218 {offsets = [0, 127], sizes = [1, 256], strides = [1, 1]} : vector<1x512xf32> to vector<1x256xf32>
    %225 = arith.mulf %224, %0 : vector<1x256xf32>
    %226 = vector.extract_strided_slice %218 {offsets = [0, 128], sizes = [1, 256], strides = [1, 1]} : vector<1x512xf32> to vector<1x256xf32>
    %227 = vector.extract_strided_slice %218 {offsets = [0, 129], sizes = [1, 256], strides = [1, 1]} : vector<1x512xf32> to vector<1x256xf32>
    %228 = arith.mulf %227, %1 : vector<1x256xf32>
    %229 = vector.extract_strided_slice %218 {offsets = [0, 143], sizes = [1, 256], strides = [1, 1]} : vector<1x512xf32> to vector<1x256xf32>
    %230 = arith.mulf %229, %0 : vector<1x256xf32>
    %231 = vector.extract_strided_slice %218 {offsets = [0, 144], sizes = [1, 256], strides = [1, 1]} : vector<1x512xf32> to vector<1x256xf32>
    %232 = vector.extract_strided_slice %218 {offsets = [0, 145], sizes = [1, 256], strides = [1, 1]} : vector<1x512xf32> to vector<1x256xf32>
    %233 = arith.mulf %232, %1 : vector<1x256xf32>
    %234 = tpu.concatenate %220, %221, %223, %225, %226, %228, %230, %231, %233 in 0 : vector<1x256xf32>, vector<1x256xf32>, vector<1x256xf32>, vector<1x256xf32>, vector<1x256xf32>, vector<1x256xf32>, vector<1x256xf32>, vector<1x256xf32>, vector<1x256xf32> -> vector<9x256xf32>
    %cst_44 = arith.constant dense<0.000000e+00> : vector<8x256xf32>
    %235 = tpu.matmul %6, %234, %cst_44 {dimension_numbers = #tpu.dot_dimension_numbers<[1], [0], [0], [1], [0, 0, 1, 1], [], []>} : vector<8x9xf32>, vector<9x256xf32>, vector<8x256xf32> -> vector<8x256xf32>
    %236 = arith.addf %170, %235 : vector<8x256xf32>
    %cst_45 = arith.constant 0.000000e+00 : f32
    %237 = vector.broadcast %cst_45 : f32 to vector<2x8xf32>
    %238 = vector.extract_strided_slice %121 {offsets = [0, 0], sizes = [1, 256], strides = [1, 1]} : vector<8x256xf32> to vector<1x256xf32>
    %239 = vector.extract_strided_slice %236 {offsets = [0, 0], sizes = [1, 256], strides = [1, 1]} : vector<8x256xf32> to vector<1x256xf32>
    %240 = tpu.concatenate %238, %239 in 0 : vector<1x256xf32>, vector<1x256xf32> -> vector<2x256xf32>
    %c0_46 = arith.constant 0 : index
    %c0_47 = arith.constant 0 : index
    %c0_48 = arith.constant 0 : index
    %241 = vector.load %arg8[%c0_46, %c0_47, %c0_48] : memref<8x256x8xf32, #tpu.memory_space<vmem>>, vector<1x256x8xf32>
    %242 = vector.shape_cast %241 : vector<1x256x8xf32> to vector<256x8xf32>
    %cst_49 = arith.constant dense<0.000000e+00> : vector<2x8xf32>
    %243 = tpu.matmul %240, %242, %cst_49 {dimension_numbers = #tpu.dot_dimension_numbers<[1], [0], [0], [1], [0, 0, 1, 1], [], []>} : vector<2x256xf32>, vector<256x8xf32>, vector<2x8xf32> -> vector<2x8xf32>
    %244 = arith.addf %237, %243 : vector<2x8xf32>
    %245 = vector.extract_strided_slice %121 {offsets = [1, 0], sizes = [1, 256], strides = [1, 1]} : vector<8x256xf32> to vector<1x256xf32>
    %246 = vector.extract_strided_slice %236 {offsets = [1, 0], sizes = [1, 256], strides = [1, 1]} : vector<8x256xf32> to vector<1x256xf32>
    %247 = tpu.concatenate %245, %246 in 0 : vector<1x256xf32>, vector<1x256xf32> -> vector<2x256xf32>
    %c1_50 = arith.constant 1 : index
    %c0_51 = arith.constant 0 : index
    %c0_52 = arith.constant 0 : index
    %248 = vector.load %arg8[%c1_50, %c0_51, %c0_52] : memref<8x256x8xf32, #tpu.memory_space<vmem>>, vector<1x256x8xf32>
    %249 = vector.shape_cast %248 : vector<1x256x8xf32> to vector<256x8xf32>
    %cst_53 = arith.constant dense<0.000000e+00> : vector<2x8xf32>
    %250 = tpu.matmul %247, %249, %cst_53 {dimension_numbers = #tpu.dot_dimension_numbers<[1], [0], [0], [1], [0, 0, 1, 1], [], []>} : vector<2x256xf32>, vector<256x8xf32>, vector<2x8xf32> -> vector<2x8xf32>
    %251 = arith.addf %244, %250 : vector<2x8xf32>
    %252 = vector.extract_strided_slice %121 {offsets = [2, 0], sizes = [1, 256], strides = [1, 1]} : vector<8x256xf32> to vector<1x256xf32>
    %253 = vector.extract_strided_slice %236 {offsets = [2, 0], sizes = [1, 256], strides = [1, 1]} : vector<8x256xf32> to vector<1x256xf32>
    %254 = tpu.concatenate %252, %253 in 0 : vector<1x256xf32>, vector<1x256xf32> -> vector<2x256xf32>
    %c2 = arith.constant 2 : index
    %c0_54 = arith.constant 0 : index
    %c0_55 = arith.constant 0 : index
    %255 = vector.load %arg8[%c2, %c0_54, %c0_55] : memref<8x256x8xf32, #tpu.memory_space<vmem>>, vector<1x256x8xf32>
    %256 = vector.shape_cast %255 : vector<1x256x8xf32> to vector<256x8xf32>
    %cst_56 = arith.constant dense<0.000000e+00> : vector<2x8xf32>
    %257 = tpu.matmul %254, %256, %cst_56 {dimension_numbers = #tpu.dot_dimension_numbers<[1], [0], [0], [1], [0, 0, 1, 1], [], []>} : vector<2x256xf32>, vector<256x8xf32>, vector<2x8xf32> -> vector<2x8xf32>
    %258 = arith.addf %251, %257 : vector<2x8xf32>
    %259 = vector.extract_strided_slice %121 {offsets = [3, 0], sizes = [1, 256], strides = [1, 1]} : vector<8x256xf32> to vector<1x256xf32>
    %260 = vector.extract_strided_slice %236 {offsets = [3, 0], sizes = [1, 256], strides = [1, 1]} : vector<8x256xf32> to vector<1x256xf32>
    %261 = tpu.concatenate %259, %260 in 0 : vector<1x256xf32>, vector<1x256xf32> -> vector<2x256xf32>
    %c3 = arith.constant 3 : index
    %c0_57 = arith.constant 0 : index
    %c0_58 = arith.constant 0 : index
    %262 = vector.load %arg8[%c3, %c0_57, %c0_58] : memref<8x256x8xf32, #tpu.memory_space<vmem>>, vector<1x256x8xf32>
    %263 = vector.shape_cast %262 : vector<1x256x8xf32> to vector<256x8xf32>
    %cst_59 = arith.constant dense<0.000000e+00> : vector<2x8xf32>
    %264 = tpu.matmul %261, %263, %cst_59 {dimension_numbers = #tpu.dot_dimension_numbers<[1], [0], [0], [1], [0, 0, 1, 1], [], []>} : vector<2x256xf32>, vector<256x8xf32>, vector<2x8xf32> -> vector<2x8xf32>
    %265 = arith.addf %258, %264 : vector<2x8xf32>
    %266 = vector.extract_strided_slice %121 {offsets = [4, 0], sizes = [1, 256], strides = [1, 1]} : vector<8x256xf32> to vector<1x256xf32>
    %267 = vector.extract_strided_slice %236 {offsets = [4, 0], sizes = [1, 256], strides = [1, 1]} : vector<8x256xf32> to vector<1x256xf32>
    %268 = tpu.concatenate %266, %267 in 0 : vector<1x256xf32>, vector<1x256xf32> -> vector<2x256xf32>
    %c4 = arith.constant 4 : index
    %c0_60 = arith.constant 0 : index
    %c0_61 = arith.constant 0 : index
    %269 = vector.load %arg8[%c4, %c0_60, %c0_61] : memref<8x256x8xf32, #tpu.memory_space<vmem>>, vector<1x256x8xf32>
    %270 = vector.shape_cast %269 : vector<1x256x8xf32> to vector<256x8xf32>
    %cst_62 = arith.constant dense<0.000000e+00> : vector<2x8xf32>
    %271 = tpu.matmul %268, %270, %cst_62 {dimension_numbers = #tpu.dot_dimension_numbers<[1], [0], [0], [1], [0, 0, 1, 1], [], []>} : vector<2x256xf32>, vector<256x8xf32>, vector<2x8xf32> -> vector<2x8xf32>
    %272 = arith.addf %265, %271 : vector<2x8xf32>
    %273 = vector.extract_strided_slice %121 {offsets = [5, 0], sizes = [1, 256], strides = [1, 1]} : vector<8x256xf32> to vector<1x256xf32>
    %274 = vector.extract_strided_slice %236 {offsets = [5, 0], sizes = [1, 256], strides = [1, 1]} : vector<8x256xf32> to vector<1x256xf32>
    %275 = tpu.concatenate %273, %274 in 0 : vector<1x256xf32>, vector<1x256xf32> -> vector<2x256xf32>
    %c5 = arith.constant 5 : index
    %c0_63 = arith.constant 0 : index
    %c0_64 = arith.constant 0 : index
    %276 = vector.load %arg8[%c5, %c0_63, %c0_64] : memref<8x256x8xf32, #tpu.memory_space<vmem>>, vector<1x256x8xf32>
    %277 = vector.shape_cast %276 : vector<1x256x8xf32> to vector<256x8xf32>
    %cst_65 = arith.constant dense<0.000000e+00> : vector<2x8xf32>
    %278 = tpu.matmul %275, %277, %cst_65 {dimension_numbers = #tpu.dot_dimension_numbers<[1], [0], [0], [1], [0, 0, 1, 1], [], []>} : vector<2x256xf32>, vector<256x8xf32>, vector<2x8xf32> -> vector<2x8xf32>
    %279 = arith.addf %272, %278 : vector<2x8xf32>
    %280 = vector.extract_strided_slice %121 {offsets = [6, 0], sizes = [1, 256], strides = [1, 1]} : vector<8x256xf32> to vector<1x256xf32>
    %281 = vector.extract_strided_slice %236 {offsets = [6, 0], sizes = [1, 256], strides = [1, 1]} : vector<8x256xf32> to vector<1x256xf32>
    %282 = tpu.concatenate %280, %281 in 0 : vector<1x256xf32>, vector<1x256xf32> -> vector<2x256xf32>
    %c6 = arith.constant 6 : index
    %c0_66 = arith.constant 0 : index
    %c0_67 = arith.constant 0 : index
    %283 = vector.load %arg8[%c6, %c0_66, %c0_67] : memref<8x256x8xf32, #tpu.memory_space<vmem>>, vector<1x256x8xf32>
    %284 = vector.shape_cast %283 : vector<1x256x8xf32> to vector<256x8xf32>
    %cst_68 = arith.constant dense<0.000000e+00> : vector<2x8xf32>
    %285 = tpu.matmul %282, %284, %cst_68 {dimension_numbers = #tpu.dot_dimension_numbers<[1], [0], [0], [1], [0, 0, 1, 1], [], []>} : vector<2x256xf32>, vector<256x8xf32>, vector<2x8xf32> -> vector<2x8xf32>
    %286 = arith.addf %279, %285 : vector<2x8xf32>
    %287 = vector.extract_strided_slice %121 {offsets = [7, 0], sizes = [1, 256], strides = [1, 1]} : vector<8x256xf32> to vector<1x256xf32>
    %288 = vector.extract_strided_slice %236 {offsets = [7, 0], sizes = [1, 256], strides = [1, 1]} : vector<8x256xf32> to vector<1x256xf32>
    %289 = tpu.concatenate %287, %288 in 0 : vector<1x256xf32>, vector<1x256xf32> -> vector<2x256xf32>
    %c7 = arith.constant 7 : index
    %c0_69 = arith.constant 0 : index
    %c0_70 = arith.constant 0 : index
    %290 = vector.load %arg8[%c7, %c0_69, %c0_70] : memref<8x256x8xf32, #tpu.memory_space<vmem>>, vector<1x256x8xf32>
    %291 = vector.shape_cast %290 : vector<1x256x8xf32> to vector<256x8xf32>
    %cst_71 = arith.constant dense<0.000000e+00> : vector<2x8xf32>
    %292 = tpu.matmul %289, %291, %cst_71 {dimension_numbers = #tpu.dot_dimension_numbers<[1], [0], [0], [1], [0, 0, 1, 1], [], []>} : vector<2x256xf32>, vector<256x8xf32>, vector<2x8xf32> -> vector<2x8xf32>
    %293 = arith.addf %286, %292 : vector<2x8xf32>
    %c0_72 = arith.constant 0 : index
    %c0_73 = arith.constant 0 : index
    %294 = vector.load %arg9[%c0_72, %c0_73] : memref<2x8xf32, #tpu.memory_space<vmem>>, vector<2x8xf32>
    tpu.vector_store %arg9[%c0_72, %c0_73], %293 {strides = array<i32>} : memref<2x8xf32, #tpu.memory_space<vmem>>, vector<2x8xf32>,
    return
  }
  func.func @transform_0(%arg0: i32) -> (i32, i32) {
    %c0_i32 = arith.constant 0 : i32
    %c0_i32_0 = arith.constant 0 : i32
    %c0_i32_1 = arith.constant 0 : i32
    return %c0_i32, %c0_i32_0 : i32, i32
  }
  func.func @transform_1(%arg0: i32) -> (i32, i32, i32) {
    %c0_i32 = arith.constant 0 : i32
    %c0_i32_0 = arith.constant 0 : i32
    %c0_i32_1 = arith.constant 0 : i32
    return %arg0, %c0_i32, %c0_i32_0 : i32, i32, i32
  }
  func.func @transform_2(%arg0: i32) -> (i32, i32) {
    %c0_i32 = arith.constant 0 : i32
    %c0_i32_0 = arith.constant 0 : i32
    %c0_i32_1 = arith.constant 0 : i32
    return %c0_i32, %c0_i32_0 : i32, i32
  }
  func.func @transform_3(%arg0: i32) -> (i32, i32) {
    %c0_i32 = arith.constant 0 : i32
    %c0_i32_0 = arith.constant 0 : i32
    %c0_i32_1 = arith.constant 0 : i32
    return %c0_i32, %c0_i32_0 : i32, i32
  }
  func.func @transform_4(%arg0: i32) -> (i32, i32) {
    %c0_i32 = arith.constant 0 : i32
    %c0_i32_0 = arith.constant 0 : i32
    %c0_i32_1 = arith.constant 0 : i32
    return %c0_i32, %c0_i32_0 : i32, i32
  }
  func.func @transform_5(%arg0: i32) -> (i32, i32) {
    %c0_i32 = arith.constant 0 : i32
    %c0_i32_0 = arith.constant 0 : i32
    %c0_i32_1 = arith.constant 0 : i32
    return %c0_i32, %c0_i32_0 : i32, i32
  }
  func.func @transform_6(%arg0: i32) -> (i32, i32) {
    %c0_i32 = arith.constant 0 : i32
    %c0_i32_0 = arith.constant 0 : i32
    %c0_i32_1 = arith.constant 0 : i32
    return %c0_i32, %c0_i32_0 : i32, i32
  }
  func.func @transform_7(%arg0: i32) -> (i32, i32, i32) {
    %c0_i32 = arith.constant 0 : i32
    %c0_i32_0 = arith.constant 0 : i32
    %c0_i32_1 = arith.constant 0 : i32
    %c0_i32_2 = arith.constant 0 : i32
    return %c0_i32, %c0_i32_0, %c0_i32_1 : i32, i32, i32
  }
  func.func @transform_8(%arg0: i32) -> (i32, i32) {
    %c0_i32 = arith.constant 0 : i32
    %c0_i32_0 = arith.constant 0 : i32
    return %arg0, %c0_i32 : i32, i32
  }
}

</mosaic_0001>

<llo_original>
// kernel: tpu_custom_call.1
$region0: #{tpu_custom_call.1}
  #allocation0 [shape = 'u32[]', space=smem, size = 0x4, offset = 0x4, fixed_abs, tag = 'smem constant byte address 0x4 - core index']
  #allocation1 [shape = 'u32[72,128]{1,0:T(1,128)}', space=vmem, size = 0x9000, scoped, tag = 'internal scratch']
  %s0 = inlined_call_operand.vmem [shape: f32[2,256], index: 0, kind: input, shape index: {}]
  %s1 = inlined_call_operand.vmem [shape: f32[2,4,256], index: 1, kind: input, shape index: {}]
  %s2 = inlined_call_operand.vmem [shape: f32[8,36], index: 2, kind: input, shape index: {}]
  %s3 = inlined_call_operand.vmem [shape: f32[8,1], index: 3, kind: input, shape index: {}]
  %s4 = inlined_call_operand.vmem [shape: f32[1,8], index: 4, kind: input, shape index: {}]
  %s5 = inlined_call_operand.vmem [shape: f32[8,9], index: 5, kind: input, shape index: {}]
  %s6 = inlined_call_operand.vmem [shape: f32[8,9], index: 6, kind: input, shape index: {}]
  %s7 = inlined_call_operand.vmem [shape: f32[8,256,8], index: 7, kind: input, shape index: {}]
  %s8 = inlined_call_operand.hbm [shape: f32[2,8], index: 8, kind: output, shape index: {}]
  %s9 = sld [smem:[#allocation0]]
  $region42: #{tpu_custom_call.1} parent=0
    _
  %s11 = ssub.s32 1, %s9
  %s12 = scalar_select 0, %s11, %s9
  $region1: #{tpu_custom_call.1} parent=0
    #allocation2 [shape = 'u8[1024]{0}', space=vmem, size = 0x400, scoped, tag = 'output window, operand 0, single buffered']
    #allocation3 [shape = 's32[1]{0}', space=sflag, size = 0x4, scoped, tag = 'scoped memory for tpu_custom_call.1']
    %13 = vsyncpa [#allocation3], 0
    // Predicated region
    $region2: #{tpu_custom_call.1} parent=1 // pred_check
      _
    $region3: #{tpu_custom_call.1} parent=1 // pred_check_branch
      %15 = sbr.rel (0) target = $region5
    $region4: #{tpu_custom_call.1} parent=1 // pred_region
      _
    $region5: #{tpu_custom_call.1} parent=1 // pred_fallthru
      _
    // Predicated region
    $region6: #{tpu_custom_call.1} parent=1 // pred_check
      _
    $region7: #{tpu_custom_call.1} parent=1 // pred_check_branch
      %17 = sbr.rel (0) target = $region9
    $region8: #{tpu_custom_call.1} parent=1 // pred_region
      _
    $region9: #{tpu_custom_call.1} parent=1 // pred_fallthru
      _
    // Predicated region
    $region10: #{tpu_custom_call.1} parent=1 // pred_check
      _
    $region11: #{tpu_custom_call.1} parent=1 // pred_check_branch
      %19 = sbr.rel (0) target = $region13
    $region12: #{tpu_custom_call.1} parent=1 // pred_region
      _
    $region13: #{tpu_custom_call.1} parent=1 // pred_fallthru
      _
    // Predicated region
    $region14: #{tpu_custom_call.1} parent=1 // pred_check
      _
    $region15: #{tpu_custom_call.1} parent=1 // pred_check_branch
      %21 = sbr.rel (0) target = $region17
    $region16: #{tpu_custom_call.1} parent=1 // pred_region
      _
    $region17: #{tpu_custom_call.1} parent=1 // pred_fallthru
      _
    // Predicated region
    $region18: #{tpu_custom_call.1} parent=1 // pred_check
      _
    $region19: #{tpu_custom_call.1} parent=1 // pred_check_branch
      %23 = sbr.rel (0) target = $region21
    $region20: #{tpu_custom_call.1} parent=1 // pred_region
      _
    $region21: #{tpu_custom_call.1} parent=1 // pred_fallthru
      _
    // Predicated region
    $region22: #{tpu_custom_call.1} parent=1 // pred_check
      _
    $region23: #{tpu_custom_call.1} parent=1 // pred_check_branch
      %25 = sbr.rel (0) target = $region25
    $region24: #{tpu_custom_call.1} parent=1 // pred_region
      _
    $region25: #{tpu_custom_call.1} parent=1 // pred_fallthru
      _
    // Predicated region
    $region26: #{tpu_custom_call.1} parent=1 // pred_check
      _
    $region27: #{tpu_custom_call.1} parent=1 // pred_check_branch
      %27 = sbr.rel (0) target = $region29
    $region28: #{tpu_custom_call.1} parent=1 // pred_region
      _
    $region29: #{tpu_custom_call.1} parent=1 // pred_fallthru
      _
    // Predicated region
    $region30: #{tpu_custom_call.1} parent=1 // pred_check
      _
    $region31: #{tpu_custom_call.1} parent=1 // pred_check_branch
      %29 = sbr.rel (0) target = $region33
    $region32: #{tpu_custom_call.1} parent=1 // pred_region
      _
    $region33: #{tpu_custom_call.1} parent=1 // pred_fallthru
      _
    %v30 = vld [vmem:[%s0] ss:$2 sm:$0x3]
    %s31 = scalar_lea.vmem %s0, 1
    %v32 = vld [vmem:[%s31] ss:$2 sm:$0x3]
    %v33 = vld [vmem:[%s2] sm:$0xff]
    %v34 = vld [vmem:[%s3] sm:$0xff]
    %v35 = vld [vmem:[%s4] sm:$0x1]
    %v36 = vld [vmem:[%s5] sm:$0xff]
    %v37 = vld [vmem:[%s6] sm:$0xff]
    %v38 = vld [vmem:[%s1] sm:$0xff]
    %40 = vst [vmem:[#allocation1] ss:$2 sm:$0xff] %v38
    %v41 = vld.sshfl [vmem:[#allocation1] sm:$0xff pattern:$0x75316420]
    %v42 = vld.sshfl [vmem:[#allocation1 + $0x8] sm:$0xff pattern:$0x75316420]
    %v46 = vperm.slane %v30, 0
    %v47 = vperm.slane %v30, 1
    %48 = vrot.lane.b32.xlu0 %v46, 111
    %v49 = vpop.permute.xlu0 %48
    %50 = vrot.lane.b32.xlu0 %v47, 111
    %v51 = vpop.permute.xlu0 %50
    %vm52 = vcmask 908288
    %v53 = vsel %vm52, %v49, %v51
    %v57 = vmul.f32 %v49, 0.0
    %v58 = vmul.f32 %v41, %v53
    %v59 = vmul.f32 %v42, %v51
    %v61 = vperm.slane %v32, 0
    %v62 = vperm.slane %v32, 1
    %63 = vrot.lane.b32.xlu0 %v61, 113
    %v64 = vpop.permute.xlu0 %63
    %65 = vrot.lane.b32.xlu0 %v62, 113
    %v66 = vpop.permute.xlu0 %65
    %vm67 = vcmask 924672
    %v68 = vsel %vm67, %v64, %v66
    %v72 = vmul.f32 %v64, 0.0
    %v73 = vmul.f32 %v41, %v68
    %v74 = vmul.f32 %v42, %v66
    %75 = vrot.lane.b32.xlu0 %v46, 127
    %v76 = vpop.permute.xlu0 %75
    %77 = vrot.lane.b32.xlu0 %v47, 127
    %v78 = vpop.permute.xlu0 %77
    %vm79 = vcmask 1039360
    %v80 = vsel %vm79, %v76, %v78
    %v84 = vmul.f32 %v76, 0.0
    %v85 = vmul.f32 %v41, %v80
    %v86 = vmul.f32 %v42, %v78
    %87 = vrot.lane.b32.xlu0 %v61, 1
    %v88 = vpop.permute.xlu0 %87
    %89 = vrot.lane.b32.xlu0 %v62, 1
    %v90 = vpop.permute.xlu0 %89
    %vm91 = vcmask 7168
    %v92 = vsel %vm91, %v88, %v90
    %v96 = vmul.f32 %v41, %v88
    %v97 = vmul.f32 %v42, %v92
    %v98 = vmul.f32 %v90, 0.0
    %99 = vrot.lane.b32.xlu0 %v46, 15
    %v100 = vpop.permute.xlu0 %99
    %101 = vrot.lane.b32.xlu0 %v47, 15
    %v102 = vpop.permute.xlu0 %101
    %vm103 = vcmask 121856
    %v104 = vsel %vm103, %v100, %v102
    %v108 = vmul.f32 %v41, %v100
    %v109 = vmul.f32 %v42, %v104
    %v110 = vmul.f32 %v102, 0.0
    %111 = vrot.lane.b32.xlu0 %v61, 17
    %v112 = vpop.permute.xlu0 %111
    %113 = vrot.lane.b32.xlu0 %v62, 17
    %v114 = vpop.permute.xlu0 %113
    %vm115 = vcmask 138240
    %v116 = vsel %vm115, %v112, %v114
    %v120 = vmul.f32 %v41, %v112
    %v121 = vmul.f32 %v42, %v116
    %v122 = vmul.f32 %v114, 0.0
    %v124 = vrot.slane 0.0, 4
    %v125 = vrot.slane %v41, 4
    %v126 = vrot.slane %v42, 4
    %127 = vrot.lane.b32.xlu0 %v124, 127
    %v128 = vpop.permute.xlu0 %127
    %129 = vrot.lane.b32.xlu0 %v125, 127
    %v130 = vpop.permute.xlu0 %129
    %131 = vrot.lane.b32.xlu0 %v126, 127
    %v132 = vpop.permute.xlu0 %131
    %v133 = vsel %vm79, %v128, %v130
    %v134 = vsel %vm79, %v130, %v132
    %141 = vrot.lane.b32.xlu0 %v72, 126
    %v142 = vpop.permute.xlu0 %141
    %143 = vrot.lane.b32.xlu0 %v73, 126
    %v144 = vpop.permute.xlu0 %143
    %145 = vrot.lane.b32.xlu0 %v74, 126
    %v146 = vpop.permute.xlu0 %145
    %vm147 = vcmask 1031168
    %v148 = vsel %vm147, %v142, %v144
    %v149 = vsel %vm147, %v144, %v146
    %v156 = vrot.slane %v84, 4
    %v157 = vrot.slane %v85, 4
    %v158 = vrot.slane %v86, 4
    %159 = vrot.lane.b32.xlu0 %v156, 112
    %v160 = vpop.permute.xlu0 %159
    %161 = vrot.lane.b32.xlu0 %v157, 112
    %v162 = vpop.permute.xlu0 %161
    %163 = vrot.lane.b32.xlu0 %v158, 112
    %v164 = vpop.permute.xlu0 %163
    %vm165 = vcmask 916480
    %v166 = vsel %vm165, %v160, %v162
    %v167 = vsel %vm165, %v162, %v164
    %171 = vrot.lane.b32.xlu0 %v41, 111
    %v172 = vpop.permute.xlu0 %171
    %173 = vrot.lane.b32.xlu0 %v42, 111
    %v174 = vpop.permute.xlu0 %173
    %v175 = vsel %vm52, %v172, %v174
    %v182 = vrot.slane %v96, 4
    %v183 = vrot.slane %v97, 4
    %v184 = vrot.slane %v98, 4
    %185 = vrot.lane.b32.xlu0 %v182, 110
    %v186 = vpop.permute.xlu0 %185
    %187 = vrot.lane.b32.xlu0 %v183, 110
    %v188 = vpop.permute.xlu0 %187
    %189 = vrot.lane.b32.xlu0 %v184, 110
    %v190 = vpop.permute.xlu0 %189
    %vm191 = vcmask 900096
    %v192 = vsel %vm191, %v186, %v188
    %v193 = vsel %vm191, %v188, %v190
    %200 = vrot.lane.b32.xlu0 %v108, 96
    %v201 = vpop.permute.xlu0 %200
    %202 = vrot.lane.b32.xlu0 %v109, 96
    %v203 = vpop.permute.xlu0 %202
    %204 = vrot.lane.b32.xlu0 %v110, 96
    %v205 = vpop.permute.xlu0 %204
    %vm206 = vcmask 785408
    %v207 = vsel %vm206, %v201, %v203
    %v208 = vsel %vm206, %v203, %v205
    %212 = vrot.lane.b32.xlu0 %v125, 95
    %v213 = vpop.permute.xlu0 %212
    %214 = vrot.lane.b32.xlu0 %v126, 95
    %v215 = vpop.permute.xlu0 %214
    %216 = vrot.lane.b32.xlu0 %v124, 95
    %v217 = vpop.permute.xlu0 %216
    %vm218 = vcmask 777216
    %v219 = vsel %vm218, %v213, %v215
    %v220 = vsel %vm218, %v215, %v217
    %227 = vrot.lane.b32.xlu0 %v120, 94
    %v228 = vpop.permute.xlu0 %227
    %229 = vrot.lane.b32.xlu0 %v121, 94
    %v230 = vpop.permute.xlu0 %229
    %231 = vrot.lane.b32.xlu0 %v122, 94
    %v232 = vpop.permute.xlu0 %231
    %vm233 = vcmask 769024
    %v234 = vsel %vm233, %v228, %v230
    %v235 = vsel %vm233, %v230, %v232
    %vm236 = vcmask 1043456
    %v237 = vsel %vm236, %v57, %v133
    %v238 = vsel %vm236, %v58, %v134
    %v239 = vsel %vm236, %v59, %v132
    %v240 = vsel %vm236, %v148, %v166
    %v241 = vsel %vm236, %v149, %v167
    %v242 = vsel %vm236, %v146, %v164
    %v243 = vsel %vm236, %v172, %v186
    %v244 = vsel %vm236, %v175, %v192
    %v245 = vsel %vm236, %v174, %v193
    %v246 = vsel %vm236, %v201, %v213
    %v247 = vsel %vm236, %v207, %v219
    %v248 = vsel %vm236, %v208, %v220
    %250 = vset.pattern.permute.xlu0 0
    %251 = vperm.xlu0 %250, %v34
    %v252 = vpop.permute.xlu0 %251
    %266 = vrot.lane.b32.xlu0 %v237, 17
    %v267 = vpop.permute.xlu0 %266
    %268 = vrot.lane.b32.xlu0 %v238, 17
    %v269 = vpop.permute.xlu0 %268
    %270 = vrot.lane.b32.xlu0 %v239, 17
    %v271 = vpop.permute.xlu0 %270
    %272 = vrot.lane.b32.xlu0 %v240, 17
    %v273 = vpop.permute.xlu0 %272
    %274 = vrot.lane.b32.xlu0 %v241, 17
    %v275 = vpop.permute.xlu0 %274
    %276 = vrot.lane.b32.xlu0 %v242, 17
    %v277 = vpop.permute.xlu0 %276
    %278 = vrot.lane.b32.xlu0 %v243, 17
    %v279 = vpop.permute.xlu0 %278
    %280 = vrot.lane.b32.xlu0 %v244, 17
    %v281 = vpop.permute.xlu0 %280
    %282 = vrot.lane.b32.xlu0 %v245, 17
    %v283 = vpop.permute.xlu0 %282
    %284 = vrot.lane.b32.xlu0 %v246, 17
    %v285 = vpop.permute.xlu0 %284
    %286 = vrot.lane.b32.xlu0 %v247, 17
    %v287 = vpop.permute.xlu0 %286
    %288 = vrot.lane.b32.xlu0 %v248, 17
    %v289 = vpop.permute.xlu0 %288
    %290 = vrot.lane.b32.xlu0 %v228, 17
    %v291 = vpop.permute.xlu0 %290
    %292 = vrot.lane.b32.xlu0 %v234, 17
    %v293 = vpop.permute.xlu0 %292
    %294 = vrot.lane.b32.xlu0 %v235, 17
    %v295 = vpop.permute.xlu0 %294
    %v296 = vsel %vm115, %v267, %v269
    %v297 = vsel %vm115, %v269, %v271
    %v298 = vsel %vm115, %v273, %v275
    %v299 = vsel %vm115, %v275, %v277
    %v300 = vsel %vm115, %v279, %v281
    %v301 = vsel %vm115, %v281, %v283
    %v302 = vsel %vm115, %v285, %v287
    %v303 = vsel %vm115, %v287, %v289
    %v304 = vsel %vm115, %v291, %v293
    %v305 = vsel %vm115, %v293, %v295
    %vm314 = vcmask 293888
    %v316 = vsel %vm314, %v33, 0
    %v318 = vsel %vm236, %v304, 0
    %v320 = vsel %vm236, %v305, 0
    %322 = vmatpush.msra.mxu0 0.0
    %323 = vmatpush.msra.mxu0 0.0
    %324 = vmatpush.msra.mxu0 0.0
    %325 = vmatpush.msra.mxu0 0.0
    %326 = vmatpush.msra.mxu0 0.0
    %327 = vmatpush.msra.mxu0 0.0
    %328 = vmatpush.msra.mxu0 0.0
    %329 = vmatpush.msra.mxu0 0.0
    %330 = vmatpush.msra.mxu0 0.0
    %331 = vmatpush.msra.mxu0 0.0
    %332 = vmatpush.msra.mxu0 0.0
    %333 = vmatpush.msra.mxu0 %v318
    %334 = vmatpush.msra.mxu0 %v302
    %335 = vmatpush.msra.mxu0 %v300
    %336 = vmatpush.msra.mxu0 %v298
    %337 = vmatpush.msra.mxu0 %v296
    %338 = vmatmul.f32.gmra.mxu0 %v316
    %v339 = vpop.f32.mrf.mxu0
    %v340 = vadd.f32 %v252, %v339
    %341 = vdwg.mxu0
    %342 = vmatpush.msra.mxu0 0.0
    %343 = vmatpush.msra.mxu0 0.0
    %344 = vmatpush.msra.mxu0 0.0
    %345 = vmatpush.msra.mxu0 0.0
    %346 = vmatpush.msra.mxu0 0.0
    %347 = vmatpush.msra.mxu0 0.0
    %348 = vmatpush.msra.mxu0 0.0
    %349 = vmatpush.msra.mxu0 0.0
    %350 = vmatpush.msra.mxu0 0.0
    %351 = vmatpush.msra.mxu0 0.0
    %352 = vmatpush.msra.mxu0 0.0
    %353 = vmatpush.msra.mxu0 %v320
    %354 = vmatpush.msra.mxu0 %v303
    %355 = vmatpush.msra.mxu0 %v301
    %356 = vmatpush.msra.mxu0 %v299
    %357 = vmatpush.msra.mxu0 %v297
    %358 = vmatmul.f32.gmra.mxu0 %v316
    %v359 = vpop.f32.mrf.mxu0
    %v360 = vadd.f32 %v252, %v359
    %361 = vdwg.mxu0
    %vm362 = vcmask 64512
    %v364 = vsel %vm362, %v35, 0
    %366 = vmatpush.msra.mxu0 0.0
    %367 = vmatpush.msra.mxu0 0.0
    %368 = vmatpush.msra.mxu0 0.0
    %369 = vmatpush.msra.mxu0 0.0
    %370 = vmatpush.msra.mxu0 0.0
    %371 = vmatpush.msra.mxu0 0.0
    %372 = vmatpush.msra.mxu0 0.0
    %373 = vmatpush.msra.mxu0 0.0
    %374 = vmatpush.msra.mxu0 0.0
    %375 = vmatpush.msra.mxu0 0.0
    %376 = vmatpush.msra.mxu0 0.0
    %377 = vmatpush.msra.mxu0 0.0
    %378 = vmatpush.msra.mxu0 0.0
    %379 = vmatpush.msra.mxu0 0.0
    %380 = vmatpush.msra.mxu0 0.0
    %381 = vmatpush.msra.mxu0 %v340
    %382 = vmatmul.f32.gmra.mxu0 %v364
    %v383 = vpop.f32.mrf.mxu0
    %v384 = vadd.f32 0.0, %v383
    %385 = vdwg.mxu0
    %386 = vmatpush.msra.mxu0 0.0
    %387 = vmatpush.msra.mxu0 0.0
    %388 = vmatpush.msra.mxu0 0.0
    %389 = vmatpush.msra.mxu0 0.0
    %390 = vmatpush.msra.mxu0 0.0
    %391 = vmatpush.msra.mxu0 0.0
    %392 = vmatpush.msra.mxu0 0.0
    %393 = vmatpush.msra.mxu0 0.0
    %394 = vmatpush.msra.mxu0 0.0
    %395 = vmatpush.msra.mxu0 0.0
    %396 = vmatpush.msra.mxu0 0.0
    %397 = vmatpush.msra.mxu0 0.0
    %398 = vmatpush.msra.mxu0 0.0
    %399 = vmatpush.msra.mxu0 0.0
    %400 = vmatpush.msra.mxu0 0.0
    %401 = vmatpush.msra.mxu0 %v360
    %402 = vmatmul.f32.gmra.mxu0 %v364
    %v403 = vpop.f32.mrf.mxu0
    %v404 = vadd.f32 0.0, %v403
    %405 = vdwg.mxu0
    %v406 = vmul.f32 %v384, %v53
    %v407 = vmul.f32 %v404, %v51
    %v408 = vmul.f32 %v384, %v68
    %v409 = vmul.f32 %v404, %v66
    %v410 = vmul.f32 %v384, %v80
    %v411 = vmul.f32 %v404, %v78
    %v412 = vmul.f32 %v384, %v88
    %v413 = vmul.f32 %v404, %v92
    %v414 = vmul.f32 %v384, %v100
    %v415 = vmul.f32 %v404, %v104
    %v416 = vmul.f32 %v384, %v112
    %v417 = vmul.f32 %v404, %v116
    %v420 = vrot.slane 0.0, 7
    %v421 = vrot.slane %v384, 7
    %v422 = vrot.slane %v404, 7
    %423 = vrot.lane.b32.xlu0 %v420, 127
    %v424 = vpop.permute.xlu0 %423
    %425 = vrot.lane.b32.xlu0 %v421, 127
    %v426 = vpop.permute.xlu0 %425
    %427 = vrot.lane.b32.xlu0 %v422, 127
    %v428 = vpop.permute.xlu0 %427
    %v429 = vsel %vm79, %v424, %v426
    %v430 = vsel %vm79, %v426, %v428
    %v436 = vrot.slane %v72, 6
    %v437 = vrot.slane %v408, 6
    %v438 = vrot.slane %v409, 6
    %439 = vrot.lane.b32.xlu0 %v436, 126
    %v440 = vpop.permute.xlu0 %439
    %441 = vrot.lane.b32.xlu0 %v437, 126
    %v442 = vpop.permute.xlu0 %441
    %443 = vrot.lane.b32.xlu0 %v438, 126
    %v444 = vpop.permute.xlu0 %443
    %v445 = vsel %vm147, %v440, %v442
    %v446 = vsel %vm147, %v442, %v444
    %v452 = vrot.slane %v84, 5
    %v453 = vrot.slane %v410, 5
    %v454 = vrot.slane %v411, 5
    %455 = vrot.lane.b32.xlu0 %v452, 112
    %v456 = vpop.permute.xlu0 %455
    %457 = vrot.lane.b32.xlu0 %v453, 112
    %v458 = vpop.permute.xlu0 %457
    %459 = vrot.lane.b32.xlu0 %v454, 112
    %v460 = vpop.permute.xlu0 %459
    %v461 = vsel %vm165, %v456, %v458
    %v462 = vsel %vm165, %v458, %v460
    %v466 = vrot.slane %v384, 4
    %v467 = vrot.slane %v404, 4
    %468 = vrot.lane.b32.xlu0 %v466, 111
    %v469 = vpop.permute.xlu0 %468
    %470 = vrot.lane.b32.xlu0 %v467, 111
    %v471 = vpop.permute.xlu0 %470
    %v472 = vsel %vm52, %v469, %v471
    %v478 = vrot.slane %v412, 3
    %v479 = vrot.slane %v413, 3
    %v480 = vrot.slane %v98, 3
    %481 = vrot.lane.b32.xlu0 %v478, 110
    %v482 = vpop.permute.xlu0 %481
    %483 = vrot.lane.b32.xlu0 %v479, 110
    %v484 = vpop.permute.xlu0 %483
    %485 = vrot.lane.b32.xlu0 %v480, 110
    %v486 = vpop.permute.xlu0 %485
    %v487 = vsel %vm191, %v482, %v484
    %v488 = vsel %vm191, %v484, %v486
    %v494 = vrot.slane %v414, 2
    %v495 = vrot.slane %v415, 2
    %v496 = vrot.slane %v110, 2
    %497 = vrot.lane.b32.xlu0 %v494, 96
    %v498 = vpop.permute.xlu0 %497
    %499 = vrot.lane.b32.xlu0 %v495, 96
    %v500 = vpop.permute.xlu0 %499
    %501 = vrot.lane.b32.xlu0 %v496, 96
    %v502 = vpop.permute.xlu0 %501
    %v503 = vsel %vm206, %v498, %v500
    %v504 = vsel %vm206, %v500, %v502
    %v508 = vrot.slane %v384, 1
    %v509 = vrot.slane %v404, 1
    %v510 = vrot.slane 0.0, 1
    %511 = vrot.lane.b32.xlu0 %v508, 95
    %v512 = vpop.permute.xlu0 %511
    %513 = vrot.lane.b32.xlu0 %v509, 95
    %v514 = vpop.permute.xlu0 %513
    %515 = vrot.lane.b32.xlu0 %v510, 95
    %v516 = vpop.permute.xlu0 %515
    %v517 = vsel %vm218, %v512, %v514
    %v518 = vsel %vm218, %v514, %v516
    %524 = vrot.lane.b32.xlu0 %v416, 94
    %v525 = vpop.permute.xlu0 %524
    %526 = vrot.lane.b32.xlu0 %v417, 94
    %v527 = vpop.permute.xlu0 %526
    %v528 = vsel %vm233, %v525, %v527
    %v529 = vsel %vm233, %v527, %v232
    %vm530 = vcmask 1040384
    %v531 = vsel %vm530, %v57, %v429
    %v532 = vsel %vm530, %v406, %v430
    %v533 = vsel %vm530, %v407, %v428
    %vm534 = vcmask 1041408
    %v535 = vsel %vm534, %v531, %v445
    %v536 = vsel %vm534, %v532, %v446
    %v537 = vsel %vm534, %v533, %v444
    %vm538 = vcmask 1042432
    %v539 = vsel %vm538, %v535, %v461
    %v540 = vsel %vm538, %v536, %v462
    %v541 = vsel %vm538, %v537, %v460
    %v542 = vsel %vm236, %v539, %v469
    %v543 = vsel %vm236, %v540, %v472
    %v544 = vsel %vm236, %v541, %v471
    %vm545 = vcmask 1044480
    %v546 = vsel %vm545, %v542, %v482
    %v547 = vsel %vm545, %v543, %v487
    %v548 = vsel %vm545, %v544, %v488
    %vm549 = vcmask 1045504
    %v550 = vsel %vm549, %v546, %v498
    %v551 = vsel %vm549, %v547, %v503
    %v552 = vsel %vm549, %v548, %v504
    %vm553 = vcmask 1046528
    %v554 = vsel %vm553, %v550, %v512
    %v555 = vsel %vm553, %v551, %v517
    %v556 = vsel %vm553, %v552, %v518
    %560 = vrot.lane.b32.xlu0 %v554, 17
    %v561 = vpop.permute.xlu0 %560
    %562 = vrot.lane.b32.xlu0 %v555, 17
    %v563 = vpop.permute.xlu0 %562
    %564 = vrot.lane.b32.xlu0 %v556, 17
    %v565 = vpop.permute.xlu0 %564
    %566 = vrot.lane.b32.xlu0 %v525, 17
    %v567 = vpop.permute.xlu0 %566
    %568 = vrot.lane.b32.xlu0 %v528, 17
    %v569 = vpop.permute.xlu0 %568
    %570 = vrot.lane.b32.xlu0 %v529, 17
    %v571 = vpop.permute.xlu0 %570
    %v572 = vsel %vm115, %v561, %v563
    %v573 = vsel %vm115, %v563, %v565
    %v574 = vsel %vm115, %v567, %v569
    %v575 = vsel %vm115, %v569, %v571
    %vm578 = vcmask 72704
    %v580 = vsel %vm578, %v36, 0
    %v582 = vsel %vm530, %v574, 0
    %v584 = vsel %vm530, %v575, 0
    %586 = vmatpush.msra.mxu0 0.0
    %587 = vmatpush.msra.mxu0 0.0
    %588 = vmatpush.msra.mxu0 0.0
    %589 = vmatpush.msra.mxu0 0.0
    %590 = vmatpush.msra.mxu0 0.0
    %591 = vmatpush.msra.mxu0 0.0
    %592 = vmatpush.msra.mxu0 0.0
    %593 = vmatpush.msra.mxu0 0.0
    %594 = vmatpush.msra.mxu0 0.0
    %595 = vmatpush.msra.mxu0 0.0
    %596 = vmatpush.msra.mxu0 0.0
    %597 = vmatpush.msra.mxu0 0.0
    %598 = vmatpush.msra.mxu0 0.0
    %599 = vmatpush.msra.mxu0 0.0
    %600 = vmatpush.msra.mxu0 %v582
    %601 = vmatpush.msra.mxu0 %v572
    %602 = vmatmul.f32.gmra.mxu0 %v580
    %v603 = vpop.f32.mrf.mxu0
    %v604 = vadd.f32 0.0, %v603
    %605 = vdwg.mxu0
    %606 = vmatpush.msra.mxu0 0.0
    %607 = vmatpush.msra.mxu0 0.0
    %608 = vmatpush.msra.mxu0 0.0
    %609 = vmatpush.msra.mxu0 0.0
    %610 = vmatpush.msra.mxu0 0.0
    %611 = vmatpush.msra.mxu0 0.0
    %612 = vmatpush.msra.mxu0 0.0
    %613 = vmatpush.msra.mxu0 0.0
    %614 = vmatpush.msra.mxu0 0.0
    %615 = vmatpush.msra.mxu0 0.0
    %616 = vmatpush.msra.mxu0 0.0
    %617 = vmatpush.msra.mxu0 0.0
    %618 = vmatpush.msra.mxu0 0.0
    %619 = vmatpush.msra.mxu0 0.0
    %620 = vmatpush.msra.mxu0 %v584
    %621 = vmatpush.msra.mxu0 %v573
    %622 = vmatmul.f32.gmra.mxu0 %v580
    %v623 = vpop.f32.mrf.mxu0
    %v624 = vadd.f32 0.0, %v623
    %625 = vdwg.mxu0
    %v626 = vrot.slane %v604, 4
    %v627 = vmax.f32 %v604, %v626
    %v628 = vrot.slane %v627, 2
    %v629 = vmax.f32 %v627, %v628
    %v630 = vrot.slane %v629, 1
    %v631 = vmax.f32 %v629, %v630
    %v632 = vrot.slane %v624, 4
    %v633 = vmax.f32 %v624, %v632
    %v634 = vrot.slane %v633, 2
    %v635 = vmax.f32 %v633, %v634
    %v636 = vrot.slane %v635, 1
    %v637 = vmax.f32 %v635, %v636
    %v638 = vmul.f32 %v631, %v53
    %v639 = vmul.f32 %v637, %v51
    %v640 = vmul.f32 %v631, %v68
    %v641 = vmul.f32 %v637, %v66
    %v642 = vmul.f32 %v631, %v80
    %v643 = vmul.f32 %v637, %v78
    %v644 = vmul.f32 %v631, %v88
    %v645 = vmul.f32 %v637, %v92
    %v646 = vmul.f32 %v631, %v100
    %v647 = vmul.f32 %v637, %v104
    %v648 = vmul.f32 %v631, %v112
    %v649 = vmul.f32 %v637, %v116
    %v652 = vrot.slane %v631, 7
    %v653 = vrot.slane %v637, 7
    %654 = vrot.lane.b32.xlu0 %v652, 127
    %v655 = vpop.permute.xlu0 %654
    %656 = vrot.lane.b32.xlu0 %v653, 127
    %v657 = vpop.permute.xlu0 %656
    %v658 = vsel %vm79, %v424, %v655
    %v659 = vsel %vm79, %v655, %v657
    %v665 = vrot.slane %v640, 6
    %v666 = vrot.slane %v641, 6
    %667 = vrot.lane.b32.xlu0 %v665, 126
    %v668 = vpop.permute.xlu0 %667
    %669 = vrot.lane.b32.xlu0 %v666, 126
    %v670 = vpop.permute.xlu0 %669
    %v671 = vsel %vm147, %v440, %v668
    %v672 = vsel %vm147, %v668, %v670
    %v678 = vrot.slane %v642, 5
    %v679 = vrot.slane %v643, 5
    %680 = vrot.lane.b32.xlu0 %v678, 112
    %v681 = vpop.permute.xlu0 %680
    %682 = vrot.lane.b32.xlu0 %v679, 112
    %v683 = vpop.permute.xlu0 %682
    %v684 = vsel %vm165, %v456, %v681
    %v685 = vsel %vm165, %v681, %v683
    %v689 = vrot.slane %v631, 4
    %v690 = vrot.slane %v637, 4
    %691 = vrot.lane.b32.xlu0 %v689, 111
    %v692 = vpop.permute.xlu0 %691
    %693 = vrot.lane.b32.xlu0 %v690, 111
    %v694 = vpop.permute.xlu0 %693
    %v695 = vsel %vm52, %v692, %v694
    %v701 = vrot.slane %v644, 3
    %v702 = vrot.slane %v645, 3
    %703 = vrot.lane.b32.xlu0 %v701, 110
    %v704 = vpop.permute.xlu0 %703
    %705 = vrot.lane.b32.xlu0 %v702, 110
    %v706 = vpop.permute.xlu0 %705
    %v707 = vsel %vm191, %v704, %v706
    %v708 = vsel %vm191, %v706, %v486
    %v714 = vrot.slane %v646, 2
    %v715 = vrot.slane %v647, 2
    %716 = vrot.lane.b32.xlu0 %v714, 96
    %v717 = vpop.permute.xlu0 %716
    %718 = vrot.lane.b32.xlu0 %v715, 96
    %v719 = vpop.permute.xlu0 %718
    %v720 = vsel %vm206, %v717, %v719
    %v721 = vsel %vm206, %v719, %v502
    %v725 = vrot.slane %v631, 1
    %v726 = vrot.slane %v637, 1
    %727 = vrot.lane.b32.xlu0 %v725, 95
    %v728 = vpop.permute.xlu0 %727
    %729 = vrot.lane.b32.xlu0 %v726, 95
    %v730 = vpop.permute.xlu0 %729
    %v731 = vsel %vm218, %v728, %v730
    %v732 = vsel %vm218, %v730, %v516
    %738 = vrot.lane.b32.xlu0 %v648, 94
    %v739 = vpop.permute.xlu0 %738
    %740 = vrot.lane.b32.xlu0 %v649, 94
    %v741 = vpop.permute.xlu0 %740
    %v742 = vsel %vm233, %v739, %v741
    %v743 = vsel %vm233, %v741, %v232
    %v744 = vsel %vm530, %v57, %v658
    %v745 = vsel %vm530, %v638, %v659
    %v746 = vsel %vm530, %v639, %v657
    %v747 = vsel %vm534, %v744, %v671
    %v748 = vsel %vm534, %v745, %v672
    %v749 = vsel %vm534, %v746, %v670
    %v750 = vsel %vm538, %v747, %v684
    %v751 = vsel %vm538, %v748, %v685
    %v752 = vsel %vm538, %v749, %v683
    %v753 = vsel %vm236, %v750, %v692
    %v754 = vsel %vm236, %v751, %v695
    %v755 = vsel %vm236, %v752, %v694
    %v756 = vsel %vm545, %v753, %v704
    %v757 = vsel %vm545, %v754, %v707
    %v758 = vsel %vm545, %v755, %v708
    %v759 = vsel %vm549, %v756, %v717
    %v760 = vsel %vm549, %v757, %v720
    %v761 = vsel %vm549, %v758, %v721
    %v762 = vsel %vm553, %v759, %v728
    %v763 = vsel %vm553, %v760, %v731
    %v764 = vsel %vm553, %v761, %v732
    %768 = vrot.lane.b32.xlu0 %v762, 17
    %v769 = vpop.permute.xlu0 %768
    %770 = vrot.lane.b32.xlu0 %v763, 17
    %v771 = vpop.permute.xlu0 %770
    %772 = vrot.lane.b32.xlu0 %v764, 17
    %v773 = vpop.permute.xlu0 %772
    %774 = vrot.lane.b32.xlu0 %v739, 17
    %v775 = vpop.permute.xlu0 %774
    %776 = vrot.lane.b32.xlu0 %v742, 17
    %v777 = vpop.permute.xlu0 %776
    %778 = vrot.lane.b32.xlu0 %v743, 17
    %v779 = vpop.permute.xlu0 %778
    %v780 = vsel %vm115, %v769, %v771
    %v781 = vsel %vm115, %v771, %v773
    %v782 = vsel %vm115, %v775, %v777
    %v783 = vsel %vm115, %v777, %v779
    %v787 = vsel %vm578, %v37, 0
    %v789 = vsel %vm530, %v782, 0
    %v791 = vsel %vm530, %v783, 0
    %793 = vmatpush.msra.mxu0 0.0
    %794 = vmatpush.msra.mxu0 0.0
    %795 = vmatpush.msra.mxu0 0.0
    %796 = vmatpush.msra.mxu0 0.0
    %797 = vmatpush.msra.mxu0 0.0
    %798 = vmatpush.msra.mxu0 0.0
    %799 = vmatpush.msra.mxu0 0.0
    %800 = vmatpush.msra.mxu0 0.0
    %801 = vmatpush.msra.mxu0 0.0
    %802 = vmatpush.msra.mxu0 0.0
    %803 = vmatpush.msra.mxu0 0.0
    %804 = vmatpush.msra.mxu0 0.0
    %805 = vmatpush.msra.mxu0 0.0
    %806 = vmatpush.msra.mxu0 0.0
    %807 = vmatpush.msra.mxu0 %v789
    %808 = vmatpush.msra.mxu0 %v780
    %809 = vmatmul.f32.gmra.mxu0 %v787
    %v810 = vpop.f32.mrf.mxu0
    %v811 = vadd.f32 0.0, %v810
    %812 = vdwg.mxu0
    %813 = vmatpush.msra.mxu0 0.0
    %814 = vmatpush.msra.mxu0 0.0
    %815 = vmatpush.msra.mxu0 0.0
    %816 = vmatpush.msra.mxu0 0.0
    %817 = vmatpush.msra.mxu0 0.0
    %818 = vmatpush.msra.mxu0 0.0
    %819 = vmatpush.msra.mxu0 0.0
    %820 = vmatpush.msra.mxu0 0.0
    %821 = vmatpush.msra.mxu0 0.0
    %822 = vmatpush.msra.mxu0 0.0
    %823 = vmatpush.msra.mxu0 0.0
    %824 = vmatpush.msra.mxu0 0.0
    %825 = vmatpush.msra.mxu0 0.0
    %826 = vmatpush.msra.mxu0 0.0
    %827 = vmatpush.msra.mxu0 %v791
    %828 = vmatpush.msra.mxu0 %v781
    %829 = vmatmul.f32.gmra.mxu0 %v787
    %v830 = vpop.f32.mrf.mxu0
    %v831 = vadd.f32 0.0, %v830
    %832 = vdwg.mxu0
    %v833 = vadd.f32 %v604, %v811
    %v834 = vadd.f32 %v624, %v831
    %v835 = vrot.slane %v833, 4
    %v836 = vmax.f32 %v833, %v835
    %v837 = vrot.slane %v836, 2
    %v838 = vmax.f32 %v836, %v837
    %v839 = vrot.slane %v838, 1
    %v840 = vmax.f32 %v838, %v839
    %v841 = vrot.slane %v834, 4
    %v842 = vmax.f32 %v834, %v841
    %v843 = vrot.slane %v842, 2
    %v844 = vmax.f32 %v842, %v843
    %v845 = vrot.slane %v844, 1
    %v846 = vmax.f32 %v844, %v845
    %v847 = vmul.f32 %v840, %v53
    %v848 = vmul.f32 %v846, %v51
    %v849 = vmul.f32 %v840, %v68
    %v850 = vmul.f32 %v846, %v66
    %v851 = vmul.f32 %v840, %v80
    %v852 = vmul.f32 %v846, %v78
    %v853 = vmul.f32 %v840, %v88
    %v854 = vmul.f32 %v846, %v92
    %v855 = vmul.f32 %v840, %v100
    %v856 = vmul.f32 %v846, %v104
    %v857 = vmul.f32 %v840, %v112
    %v858 = vmul.f32 %v846, %v116
    %v861 = vrot.slane %v840, 7
    %v862 = vrot.slane %v846, 7
    %863 = vrot.lane.b32.xlu0 %v861, 127
    %v864 = vpop.permute.xlu0 %863
    %865 = vrot.lane.b32.xlu0 %v862, 127
    %v866 = vpop.permute.xlu0 %865
    %v867 = vsel %vm79, %v424, %v864
    %v868 = vsel %vm79, %v864, %v866
    %v874 = vrot.slane %v849, 6
    %v875 = vrot.slane %v850, 6
    %876 = vrot.lane.b32.xlu0 %v874, 126
    %v877 = vpop.permute.xlu0 %876
    %878 = vrot.lane.b32.xlu0 %v875, 126
    %v879 = vpop.permute.xlu0 %878
    %v880 = vsel %vm147, %v440, %v877
    %v881 = vsel %vm147, %v877, %v879
    %v887 = vrot.slane %v851, 5
    %v888 = vrot.slane %v852, 5
    %889 = vrot.lane.b32.xlu0 %v887, 112
    %v890 = vpop.permute.xlu0 %889
    %891 = vrot.lane.b32.xlu0 %v888, 112
    %v892 = vpop.permute.xlu0 %891
    %v893 = vsel %vm165, %v456, %v890
    %v894 = vsel %vm165, %v890, %v892
    %v898 = vrot.slane %v840, 4
    %v899 = vrot.slane %v846, 4
    %900 = vrot.lane.b32.xlu0 %v898, 111
    %v901 = vpop.permute.xlu0 %900
    %902 = vrot.lane.b32.xlu0 %v899, 111
    %v903 = vpop.permute.xlu0 %902
    %v904 = vsel %vm52, %v901, %v903
    %v910 = vrot.slane %v853, 3
    %v911 = vrot.slane %v854, 3
    %912 = vrot.lane.b32.xlu0 %v910, 110
    %v913 = vpop.permute.xlu0 %912
    %914 = vrot.lane.b32.xlu0 %v911, 110
    %v915 = vpop.permute.xlu0 %914
    %v916 = vsel %vm191, %v913, %v915
    %v917 = vsel %vm191, %v915, %v486
    %v923 = vrot.slane %v855, 2
    %v924 = vrot.slane %v856, 2
    %925 = vrot.lane.b32.xlu0 %v923, 96
    %v926 = vpop.permute.xlu0 %925
    %927 = vrot.lane.b32.xlu0 %v924, 96
    %v928 = vpop.permute.xlu0 %927
    %v929 = vsel %vm206, %v926, %v928
    %v930 = vsel %vm206, %v928, %v502
    %v934 = vrot.slane %v840, 1
    %v935 = vrot.slane %v846, 1
    %936 = vrot.lane.b32.xlu0 %v934, 95
    %v937 = vpop.permute.xlu0 %936
    %938 = vrot.lane.b32.xlu0 %v935, 95
    %v939 = vpop.permute.xlu0 %938
    %v940 = vsel %vm218, %v937, %v939
    %v941 = vsel %vm218, %v939, %v516
    %947 = vrot.lane.b32.xlu0 %v857, 94
    %v948 = vpop.permute.xlu0 %947
    %949 = vrot.lane.b32.xlu0 %v858, 94
    %v950 = vpop.permute.xlu0 %949
    %v951 = vsel %vm233, %v948, %v950
    %v952 = vsel %vm233, %v950, %v232
    %v953 = vsel %vm530, %v57, %v867
    %v954 = vsel %vm530, %v847, %v868
    %v955 = vsel %vm530, %v848, %v866
    %v956 = vsel %vm534, %v953, %v880
    %v957 = vsel %vm534, %v954, %v881
    %v958 = vsel %vm534, %v955, %v879
    %v959 = vsel %vm538, %v956, %v893
    %v960 = vsel %vm538, %v957, %v894
    %v961 = vsel %vm538, %v958, %v892
    %v962 = vsel %vm236, %v959, %v901
    %v963 = vsel %vm236, %v960, %v904
    %v964 = vsel %vm236, %v961, %v903
    %v965 = vsel %vm545, %v962, %v913
    %v966 = vsel %vm545, %v963, %v916
    %v967 = vsel %vm545, %v964, %v917
    %v968 = vsel %vm549, %v965, %v926
    %v969 = vsel %vm549, %v966, %v929
    %v970 = vsel %vm549, %v967, %v930
    %v971 = vsel %vm553, %v968, %v937
    %v972 = vsel %vm553, %v969, %v940
    %v973 = vsel %vm553, %v970, %v941
    %977 = vrot.lane.b32.xlu0 %v971, 17
    %v978 = vpop.permute.xlu0 %977
    %979 = vrot.lane.b32.xlu0 %v972, 17
    %v980 = vpop.permute.xlu0 %979
    %981 = vrot.lane.b32.xlu0 %v973, 17
    %v982 = vpop.permute.xlu0 %981
    %983 = vrot.lane.b32.xlu0 %v948, 17
    %v984 = vpop.permute.xlu0 %983
    %985 = vrot.lane.b32.xlu0 %v951, 17
    %v986 = vpop.permute.xlu0 %985
    %987 = vrot.lane.b32.xlu0 %v952, 17
    %v988 = vpop.permute.xlu0 %987
    %v989 = vsel %vm115, %v978, %v980
    %v990 = vsel %vm115, %v980, %v982
    %v991 = vsel %vm115, %v984, %v986
    %v992 = vsel %vm115, %v986, %v988
    %v995 = vsel %vm530, %v991, 0
    %v997 = vsel %vm530, %v992, 0
    %999 = vmatpush.msra.mxu0 0.0
    %1000 = vmatpush.msra.mxu0 0.0
    %1001 = vmatpush.msra.mxu0 0.0
    %1002 = vmatpush.msra.mxu0 0.0
    %1003 = vmatpush.msra.mxu0 0.0
    %1004 = vmatpush.msra.mxu0 0.0
    %1005 = vmatpush.msra.mxu0 0.0
    %1006 = vmatpush.msra.mxu0 0.0
    %1007 = vmatpush.msra.mxu0 0.0
    %1008 = vmatpush.msra.mxu0 0.0
    %1009 = vmatpush.msra.mxu0 0.0
    %1010 = vmatpush.msra.mxu0 0.0
    %1011 = vmatpush.msra.mxu0 0.0
    %1012 = vmatpush.msra.mxu0 0.0
    %1013 = vmatpush.msra.mxu0 %v995
    %1014 = vmatpush.msra.mxu0 %v989
    %1015 = vmatmul.f32.gmra.mxu0 %v787
    %v1016 = vpop.f32.mrf.mxu0
    %v1017 = vadd.f32 0.0, %v1016
    %1018 = vdwg.mxu0
    %1019 = vmatpush.msra.mxu0 0.0
    %1020 = vmatpush.msra.mxu0 0.0
    %1021 = vmatpush.msra.mxu0 0.0
    %1022 = vmatpush.msra.mxu0 0.0
    %1023 = vmatpush.msra.mxu0 0.0
    %1024 = vmatpush.msra.mxu0 0.0
    %1025 = vmatpush.msra.mxu0 0.0
    %1026 = vmatpush.msra.mxu0 0.0
    %1027 = vmatpush.msra.mxu0 0.0
    %1028 = vmatpush.msra.mxu0 0.0
    %1029 = vmatpush.msra.mxu0 0.0
    %1030 = vmatpush.msra.mxu0 0.0
    %1031 = vmatpush.msra.mxu0 0.0
    %1032 = vmatpush.msra.mxu0 0.0
    %1033 = vmatpush.msra.mxu0 %v997
    %1034 = vmatpush.msra.mxu0 %v990
    %1035 = vmatmul.f32.gmra.mxu0 %v787
    %v1036 = vpop.f32.mrf.mxu0
    %v1037 = vadd.f32 0.0, %v1036
    %1038 = vdwg.mxu0
    %v1039 = vadd.f32 %v604, %v1017
    %v1040 = vadd.f32 %v624, %v1037
    %v1041 = vrot.slane %v1039, 4
    %v1042 = vmax.f32 %v1039, %v1041
    %v1043 = vrot.slane %v1042, 2
    %v1044 = vmax.f32 %v1042, %v1043
    %v1045 = vrot.slane %v1044, 1
    %v1046 = vmax.f32 %v1044, %v1045
    %v1047 = vrot.slane %v1040, 4
    %v1048 = vmax.f32 %v1040, %v1047
    %v1049 = vrot.slane %v1048, 2
    %v1050 = vmax.f32 %v1048, %v1049
    %v1051 = vrot.slane %v1050, 1
    %v1052 = vmax.f32 %v1050, %v1051
    %v1053 = vmul.f32 %v1046, %v53
    %v1054 = vmul.f32 %v1052, %v51
    %v1055 = vmul.f32 %v1046, %v68
    %v1056 = vmul.f32 %v1052, %v66
    %v1057 = vmul.f32 %v1046, %v80
    %v1058 = vmul.f32 %v1052, %v78
    %v1059 = vmul.f32 %v1046, %v88
    %v1060 = vmul.f32 %v1052, %v92
    %v1061 = vmul.f32 %v1046, %v100
    %v1062 = vmul.f32 %v1052, %v104
    %v1063 = vmul.f32 %v1046, %v112
    %v1064 = vmul.f32 %v1052, %v116
    %v1067 = vrot.slane %v1046, 7
    %v1068 = vrot.slane %v1052, 7
    %1069 = vrot.lane.b32.xlu0 %v1067, 127
    %v1070 = vpop.permute.xlu0 %1069
    %1071 = vrot.lane.b32.xlu0 %v1068, 127
    %v1072 = vpop.permute.xlu0 %1071
    %v1073 = vsel %vm79, %v424, %v1070
    %v1074 = vsel %vm79, %v1070, %v1072
    %v1080 = vrot.slane %v1055, 6
    %v1081 = vrot.slane %v1056, 6
    %1082 = vrot.lane.b32.xlu0 %v1080, 126
    %v1083 = vpop.permute.xlu0 %1082
    %1084 = vrot.lane.b32.xlu0 %v1081, 126
    %v1085 = vpop.permute.xlu0 %1084
    %v1086 = vsel %vm147, %v440, %v1083
    %v1087 = vsel %vm147, %v1083, %v1085
    %v1093 = vrot.slane %v1057, 5
    %v1094 = vrot.slane %v1058, 5
    %1095 = vrot.lane.b32.xlu0 %v1093, 112
    %v1096 = vpop.permute.xlu0 %1095
    %1097 = vrot.lane.b32.xlu0 %v1094, 112
    %v1098 = vpop.permute.xlu0 %1097
    %v1099 = vsel %vm165, %v456, %v1096
    %v1100 = vsel %vm165, %v1096, %v1098
    %v1104 = vrot.slane %v1046, 4
    %v1105 = vrot.slane %v1052, 4
    %1106 = vrot.lane.b32.xlu0 %v1104, 111
    %v1107 = vpop.permute.xlu0 %1106
    %1108 = vrot.lane.b32.xlu0 %v1105, 111
    %v1109 = vpop.permute.xlu0 %1108
    %v1110 = vsel %vm52, %v1107, %v1109
    %v1116 = vrot.slane %v1059, 3
    %v1117 = vrot.slane %v1060, 3
    %1118 = vrot.lane.b32.xlu0 %v1116, 110
    %v1119 = vpop.permute.xlu0 %1118
    %1120 = vrot.lane.b32.xlu0 %v1117, 110
    %v1121 = vpop.permute.xlu0 %1120
    %v1122 = vsel %vm191, %v1119, %v1121
    %v1123 = vsel %vm191, %v1121, %v486
    %v1129 = vrot.slane %v1061, 2
    %v1130 = vrot.slane %v1062, 2
    %1131 = vrot.lane.b32.xlu0 %v1129, 96
    %v1132 = vpop.permute.xlu0 %1131
    %1133 = vrot.lane.b32.xlu0 %v1130, 96
    %v1134 = vpop.permute.xlu0 %1133
    %v1135 = vsel %vm206, %v1132, %v1134
    %v1136 = vsel %vm206, %v1134, %v502
    %v1140 = vrot.slane %v1046, 1
    %v1141 = vrot.slane %v1052, 1
    %1142 = vrot.lane.b32.xlu0 %v1140, 95
    %v1143 = vpop.permute.xlu0 %1142
    %1144 = vrot.lane.b32.xlu0 %v1141, 95
    %v1145 = vpop.permute.xlu0 %1144
    %v1146 = vsel %vm218, %v1143, %v1145
    %v1147 = vsel %vm218, %v1145, %v516
    %1153 = vrot.lane.b32.xlu0 %v1063, 94
    %v1154 = vpop.permute.xlu0 %1153
    %1155 = vrot.lane.b32.xlu0 %v1064, 94
    %v1156 = vpop.permute.xlu0 %1155
    %v1157 = vsel %vm233, %v1154, %v1156
    %v1158 = vsel %vm233, %v1156, %v232
    %v1159 = vsel %vm530, %v57, %v1073
    %v1160 = vsel %vm530, %v1053, %v1074
    %v1161 = vsel %vm530, %v1054, %v1072
    %v1162 = vsel %vm534, %v1159, %v1086
    %v1163 = vsel %vm534, %v1160, %v1087
    %v1164 = vsel %vm534, %v1161, %v1085
    %v1165 = vsel %vm538, %v1162, %v1099
    %v1166 = vsel %vm538, %v1163, %v1100
    %v1167 = vsel %vm538, %v1164, %v1098
    %v1168 = vsel %vm236, %v1165, %v1107
    %v1169 = vsel %vm236, %v1166, %v1110
    %v1170 = vsel %vm236, %v1167, %v1109
    %v1171 = vsel %vm545, %v1168, %v1119
    %v1172 = vsel %vm545, %v1169, %v1122
    %v1173 = vsel %vm545, %v1170, %v1123
    %v1174 = vsel %vm549, %v1171, %v1132
    %v1175 = vsel %vm549, %v1172, %v1135
    %v1176 = vsel %vm549, %v1173, %v1136
    %v1177 = vsel %vm553, %v1174, %v1143
    %v1178 = vsel %vm553, %v1175, %v1146
    %v1179 = vsel %vm553, %v1176, %v1147
    %1183 = vrot.lane.b32.xlu0 %v1177, 17
    %v1184 = vpop.permute.xlu0 %1183
    %1185 = vrot.lane.b32.xlu0 %v1178, 17
    %v1186 = vpop.permute.xlu0 %1185
    %1187 = vrot.lane.b32.xlu0 %v1179, 17
    %v1188 = vpop.permute.xlu0 %1187
    %1189 = vrot.lane.b32.xlu0 %v1154, 17
    %v1190 = vpop.permute.xlu0 %1189
    %1191 = vrot.lane.b32.xlu0 %v1157, 17
    %v1192 = vpop.permute.xlu0 %1191
    %1193 = vrot.lane.b32.xlu0 %v1158, 17
    %v1194 = vpop.permute.xlu0 %1193
    %v1195 = vsel %vm115, %v1184, %v1186
    %v1196 = vsel %vm115, %v1186, %v1188
    %v1197 = vsel %vm115, %v1190, %v1192
    %v1198 = vsel %vm115, %v1192, %v1194
    %v1201 = vsel %vm530, %v1197, 0
    %v1203 = vsel %vm530, %v1198, 0
    %1205 = vmatpush.msra.mxu0 0.0
    %1206 = vmatpush.msra.mxu0 0.0
    %1207 = vmatpush.msra.mxu0 0.0
    %1208 = vmatpush.msra.mxu0 0.0
    %1209 = vmatpush.msra.mxu0 0.0
    %1210 = vmatpush.msra.mxu0 0.0
    %1211 = vmatpush.msra.mxu0 0.0
    %1212 = vmatpush.msra.mxu0 0.0
    %1213 = vmatpush.msra.mxu0 0.0
    %1214 = vmatpush.msra.mxu0 0.0
    %1215 = vmatpush.msra.mxu0 0.0
    %1216 = vmatpush.msra.mxu0 0.0
    %1217 = vmatpush.msra.mxu0 0.0
    %1218 = vmatpush.msra.mxu0 0.0
    %1219 = vmatpush.msra.mxu0 %v1201
    %1220 = vmatpush.msra.mxu0 %v1195
    %1221 = vmatmul.f32.gmra.mxu0 %v787
    %v1222 = vpop.f32.mrf.mxu0
    %v1223 = vadd.f32 0.0, %v1222
    %1224 = vdwg.mxu0
    %1225 = vmatpush.msra.mxu0 0.0
    %1226 = vmatpush.msra.mxu0 0.0
    %1227 = vmatpush.msra.mxu0 0.0
    %1228 = vmatpush.msra.mxu0 0.0
    %1229 = vmatpush.msra.mxu0 0.0
    %1230 = vmatpush.msra.mxu0 0.0
    %1231 = vmatpush.msra.mxu0 0.0
    %1232 = vmatpush.msra.mxu0 0.0
    %1233 = vmatpush.msra.mxu0 0.0
    %1234 = vmatpush.msra.mxu0 0.0
    %1235 = vmatpush.msra.mxu0 0.0
    %1236 = vmatpush.msra.mxu0 0.0
    %1237 = vmatpush.msra.mxu0 0.0
    %1238 = vmatpush.msra.mxu0 0.0
    %1239 = vmatpush.msra.mxu0 %v1203
    %1240 = vmatpush.msra.mxu0 %v1196
    %1241 = vmatmul.f32.gmra.mxu0 %v787
    %v1242 = vpop.f32.mrf.mxu0
    %v1243 = vadd.f32 0.0, %v1242
    %1244 = vdwg.mxu0
    %v1245 = vadd.f32 %v604, %v1223
    %v1246 = vadd.f32 %v624, %v1243
    %s1247 = scalar_lea.vmem %s1, 8
    %v1248 = vld [vmem:[%s1247] sm:$0xff]
    %1250 = vst [vmem:[#allocation1] ss:$2 sm:$0xff] %v1248
    %v1251 = vld.sshfl [vmem:[#allocation1] sm:$0xff pattern:$0x75316420]
    %v1252 = vld.sshfl [vmem:[#allocation1 + $0x8] sm:$0xff pattern:$0x75316420]
    %v1255 = vmul.f32 %v1251, %v53
    %v1256 = vmul.f32 %v1252, %v51
    %v1257 = vmul.f32 %v1251, %v68
    %v1258 = vmul.f32 %v1252, %v66
    %v1259 = vmul.f32 %v1251, %v80
    %v1260 = vmul.f32 %v1252, %v78
    %v1261 = vmul.f32 %v1251, %v88
    %v1262 = vmul.f32 %v1252, %v92
    %v1263 = vmul.f32 %v1251, %v100
    %v1264 = vmul.f32 %v1252, %v104
    %v1265 = vmul.f32 %v1251, %v112
    %v1266 = vmul.f32 %v1252, %v116
    %v1267 = vrot.slane %v1251, 4
    %v1268 = vrot.slane %v1252, 4
    %1269 = vrot.lane.b32.xlu0 %v1267, 127
    %v1270 = vpop.permute.xlu0 %1269
    %1271 = vrot.lane.b32.xlu0 %v1268, 127
    %v1272 = vpop.permute.xlu0 %1271
    %v1273 = vsel %vm79, %v128, %v1270
    %v1274 = vsel %vm79, %v1270, %v1272
    %1280 = vrot.lane.b32.xlu0 %v1257, 126
    %v1281 = vpop.permute.xlu0 %1280
    %1282 = vrot.lane.b32.xlu0 %v1258, 126
    %v1283 = vpop.permute.xlu0 %1282
    %v1284 = vsel %vm147, %v142, %v1281
    %v1285 = vsel %vm147, %v1281, %v1283
    %v1291 = vrot.slane %v1259, 4
    %v1292 = vrot.slane %v1260, 4
    %1293 = vrot.lane.b32.xlu0 %v1291, 112
    %v1294 = vpop.permute.xlu0 %1293
    %1295 = vrot.lane.b32.xlu0 %v1292, 112
    %v1296 = vpop.permute.xlu0 %1295
    %v1297 = vsel %vm165, %v160, %v1294
    %v1298 = vsel %vm165, %v1294, %v1296
    %1302 = vrot.lane.b32.xlu0 %v1251, 111
    %v1303 = vpop.permute.xlu0 %1302
    %1304 = vrot.lane.b32.xlu0 %v1252, 111
    %v1305 = vpop.permute.xlu0 %1304
    %v1306 = vsel %vm52, %v1303, %v1305
    %v1312 = vrot.slane %v1261, 4
    %v1313 = vrot.slane %v1262, 4
    %1314 = vrot.lane.b32.xlu0 %v1312, 110
    %v1315 = vpop.permute.xlu0 %1314
    %1316 = vrot.lane.b32.xlu0 %v1313, 110
    %v1317 = vpop.permute.xlu0 %1316
    %v1318 = vsel %vm191, %v1315, %v1317
    %v1319 = vsel %vm191, %v1317, %v190
    %1325 = vrot.lane.b32.xlu0 %v1263, 96
    %v1326 = vpop.permute.xlu0 %1325
    %1327 = vrot.lane.b32.xlu0 %v1264, 96
    %v1328 = vpop.permute.xlu0 %1327
    %v1329 = vsel %vm206, %v1326, %v1328
    %v1330 = vsel %vm206, %v1328, %v205
    %1334 = vrot.lane.b32.xlu0 %v1267, 95
    %v1335 = vpop.permute.xlu0 %1334
    %1336 = vrot.lane.b32.xlu0 %v1268, 95
    %v1337 = vpop.permute.xlu0 %1336
    %v1338 = vsel %vm218, %v1335, %v1337
    %v1339 = vsel %vm218, %v1337, %v217
    %1345 = vrot.lane.b32.xlu0 %v1265, 94
    %v1346 = vpop.permute.xlu0 %1345
    %1347 = vrot.lane.b32.xlu0 %v1266, 94
    %v1348 = vpop.permute.xlu0 %1347
    %v1349 = vsel %vm233, %v1346, %v1348
    %v1350 = vsel %vm233, %v1348, %v232
    %v1351 = vsel %vm236, %v57, %v1273
    %v1352 = vsel %vm236, %v1255, %v1274
    %v1353 = vsel %vm236, %v1256, %v1272
    %v1354 = vsel %vm236, %v1284, %v1297
    %v1355 = vsel %vm236, %v1285, %v1298
    %v1356 = vsel %vm236, %v1283, %v1296
    %v1357 = vsel %vm236, %v1303, %v1315
    %v1358 = vsel %vm236, %v1306, %v1318
    %v1359 = vsel %vm236, %v1305, %v1319
    %v1360 = vsel %vm236, %v1326, %v1335
    %v1361 = vsel %vm236, %v1329, %v1338
    %v1362 = vsel %vm236, %v1330, %v1339
    %1375 = vrot.lane.b32.xlu0 %v1351, 17
    %v1376 = vpop.permute.xlu0 %1375
    %1377 = vrot.lane.b32.xlu0 %v1352, 17
    %v1378 = vpop.permute.xlu0 %1377
    %1379 = vrot.lane.b32.xlu0 %v1353, 17
    %v1380 = vpop.permute.xlu0 %1379
    %1381 = vrot.lane.b32.xlu0 %v1354, 17
    %v1382 = vpop.permute.xlu0 %1381
    %1383 = vrot.lane.b32.xlu0 %v1355, 17
    %v1384 = vpop.permute.xlu0 %1383
    %1385 = vrot.lane.b32.xlu0 %v1356, 17
    %v1386 = vpop.permute.xlu0 %1385
    %1387 = vrot.lane.b32.xlu0 %v1357, 17
    %v1388 = vpop.permute.xlu0 %1387
    %1389 = vrot.lane.b32.xlu0 %v1358, 17
    %v1390 = vpop.permute.xlu0 %1389
    %1391 = vrot.lane.b32.xlu0 %v1359, 17
    %v1392 = vpop.permute.xlu0 %1391
    %1393 = vrot.lane.b32.xlu0 %v1360, 17
    %v1394 = vpop.permute.xlu0 %1393
    %1395 = vrot.lane.b32.xlu0 %v1361, 17
    %v1396 = vpop.permute.xlu0 %1395
    %1397 = vrot.lane.b32.xlu0 %v1362, 17
    %v1398 = vpop.permute.xlu0 %1397
    %1399 = vrot.lane.b32.xlu0 %v1346, 17
    %v1400 = vpop.permute.xlu0 %1399
    %1401 = vrot.lane.b32.xlu0 %v1349, 17
    %v1402 = vpop.permute.xlu0 %1401
    %1403 = vrot.lane.b32.xlu0 %v1350, 17
    %v1404 = vpop.permute.xlu0 %1403
    %v1405 = vsel %vm115, %v1376, %v1378
    %v1406 = vsel %vm115, %v1378, %v1380
    %v1407 = vsel %vm115, %v1382, %v1384
    %v1408 = vsel %vm115, %v1384, %v1386
    %v1409 = vsel %vm115, %v1388, %v1390
    %v1410 = vsel %vm115, %v1390, %v1392
    %v1411 = vsel %vm115, %v1394, %v1396
    %v1412 = vsel %vm115, %v1396, %v1398
    %v1413 = vsel %vm115, %v1400, %v1402
    %v1414 = vsel %vm115, %v1402, %v1404
    %v1423 = vsel %vm236, %v1413, 0
    %v1425 = vsel %vm236, %v1414, 0
    %1427 = vmatpush.msra.mxu0 0.0
    %1428 = vmatpush.msra.mxu0 0.0
    %1429 = vmatpush.msra.mxu0 0.0
    %1430 = vmatpush.msra.mxu0 0.0
    %1431 = vmatpush.msra.mxu0 0.0
    %1432 = vmatpush.msra.mxu0 0.0
    %1433 = vmatpush.msra.mxu0 0.0
    %1434 = vmatpush.msra.mxu0 0.0
    %1435 = vmatpush.msra.mxu0 0.0
    %1436 = vmatpush.msra.mxu0 0.0
    %1437 = vmatpush.msra.mxu0 0.0
    %1438 = vmatpush.msra.mxu0 %v1423
    %1439 = vmatpush.msra.mxu0 %v1411
    %1440 = vmatpush.msra.mxu0 %v1409
    %1441 = vmatpush.msra.mxu0 %v1407
    %1442 = vmatpush.msra.mxu0 %v1405
    %1443 = vmatmul.f32.gmra.mxu0 %v316
    %v1444 = vpop.f32.mrf.mxu0
    %v1445 = vadd.f32 %v252, %v1444
    %1446 = vdwg.mxu0
    %1447 = vmatpush.msra.mxu0 0.0
    %1448 = vmatpush.msra.mxu0 0.0
    %1449 = vmatpush.msra.mxu0 0.0
    %1450 = vmatpush.msra.mxu0 0.0
    %1451 = vmatpush.msra.mxu0 0.0
    %1452 = vmatpush.msra.mxu0 0.0
    %1453 = vmatpush.msra.mxu0 0.0
    %1454 = vmatpush.msra.mxu0 0.0
    %1455 = vmatpush.msra.mxu0 0.0
    %1456 = vmatpush.msra.mxu0 0.0
    %1457 = vmatpush.msra.mxu0 0.0
    %1458 = vmatpush.msra.mxu0 %v1425
    %1459 = vmatpush.msra.mxu0 %v1412
    %1460 = vmatpush.msra.mxu0 %v1410
    %1461 = vmatpush.msra.mxu0 %v1408
    %1462 = vmatpush.msra.mxu0 %v1406
    %1463 = vmatmul.f32.gmra.mxu0 %v316
    %v1464 = vpop.f32.mrf.mxu0
    %v1465 = vadd.f32 %v252, %v1464
    %1466 = vdwg.mxu0
    %1467 = vmatpush.msra.mxu0 0.0
    %1468 = vmatpush.msra.mxu0 0.0
    %1469 = vmatpush.msra.mxu0 0.0
    %1470 = vmatpush.msra.mxu0 0.0
    %1471 = vmatpush.msra.mxu0 0.0
    %1472 = vmatpush.msra.mxu0 0.0
    %1473 = vmatpush.msra.mxu0 0.0
    %1474 = vmatpush.msra.mxu0 0.0
    %1475 = vmatpush.msra.mxu0 0.0
    %1476 = vmatpush.msra.mxu0 0.0
    %1477 = vmatpush.msra.mxu0 0.0
    %1478 = vmatpush.msra.mxu0 0.0
    %1479 = vmatpush.msra.mxu0 0.0
    %1480 = vmatpush.msra.mxu0 0.0
    %1481 = vmatpush.msra.mxu0 0.0
    %1482 = vmatpush.msra.mxu0 %v1445
    %1483 = vmatmul.f32.gmra.mxu0 %v364
    %v1484 = vpop.f32.mrf.mxu0
    %v1485 = vadd.f32 0.0, %v1484
    %1486 = vdwg.mxu0
    %1487 = vmatpush.msra.mxu0 0.0
    %1488 = vmatpush.msra.mxu0 0.0
    %1489 = vmatpush.msra.mxu0 0.0
    %1490 = vmatpush.msra.mxu0 0.0
    %1491 = vmatpush.msra.mxu0 0.0
    %1492 = vmatpush.msra.mxu0 0.0
    %1493 = vmatpush.msra.mxu0 0.0
    %1494 = vmatpush.msra.mxu0 0.0
    %1495 = vmatpush.msra.mxu0 0.0
    %1496 = vmatpush.msra.mxu0 0.0
    %1497 = vmatpush.msra.mxu0 0.0
    %1498 = vmatpush.msra.mxu0 0.0
    %1499 = vmatpush.msra.mxu0 0.0
    %1500 = vmatpush.msra.mxu0 0.0
    %1501 = vmatpush.msra.mxu0 0.0
    %1502 = vmatpush.msra.mxu0 %v1465
    %1503 = vmatmul.f32.gmra.mxu0 %v364
    %v1504 = vpop.f32.mrf.mxu0
    %v1505 = vadd.f32 0.0, %v1504
    %1506 = vdwg.mxu0
    %v1507 = vmul.f32 %v1485, %v53
    %v1508 = vmul.f32 %v1505, %v51
    %v1509 = vmul.f32 %v1485, %v68
    %v1510 = vmul.f32 %v1505, %v66
    %v1511 = vmul.f32 %v1485, %v80
    %v1512 = vmul.f32 %v1505, %v78
    %v1513 = vmul.f32 %v1485, %v88
    %v1514 = vmul.f32 %v1505, %v92
    %v1515 = vmul.f32 %v1485, %v100
    %v1516 = vmul.f32 %v1505, %v104
    %v1517 = vmul.f32 %v1485, %v112
    %v1518 = vmul.f32 %v1505, %v116
    %v1521 = vrot.slane %v1485, 7
    %v1522 = vrot.slane %v1505, 7
    %1523 = vrot.lane.b32.xlu0 %v1521, 127
    %v1524 = vpop.permute.xlu0 %1523
    %1525 = vrot.lane.b32.xlu0 %v1522, 127
    %v1526 = vpop.permute.xlu0 %1525
    %v1527 = vsel %vm79, %v424, %v1524
    %v1528 = vsel %vm79, %v1524, %v1526
    %v1534 = vrot.slane %v1509, 6
    %v1535 = vrot.slane %v1510, 6
    %1536 = vrot.lane.b32.xlu0 %v1534, 126
    %v1537 = vpop.permute.xlu0 %1536
    %1538 = vrot.lane.b32.xlu0 %v1535, 126
    %v1539 = vpop.permute.xlu0 %1538
    %v1540 = vsel %vm147, %v440, %v1537
    %v1541 = vsel %vm147, %v1537, %v1539
    %v1547 = vrot.slane %v1511, 5
    %v1548 = vrot.slane %v1512, 5
    %1549 = vrot.lane.b32.xlu0 %v1547, 112
    %v1550 = vpop.permute.xlu0 %1549
    %1551 = vrot.lane.b32.xlu0 %v1548, 112
    %v1552 = vpop.permute.xlu0 %1551
    %v1553 = vsel %vm165, %v456, %v1550
    %v1554 = vsel %vm165, %v1550, %v1552
    %v1558 = vrot.slane %v1485, 4
    %v1559 = vrot.slane %v1505, 4
    %1560 = vrot.lane.b32.xlu0 %v1558, 111
    %v1561 = vpop.permute.xlu0 %1560
    %1562 = vrot.lane.b32.xlu0 %v1559, 111
    %v1563 = vpop.permute.xlu0 %1562
    %v1564 = vsel %vm52, %v1561, %v1563
    %v1570 = vrot.slane %v1513, 3
    %v1571 = vrot.slane %v1514, 3
    %1572 = vrot.lane.b32.xlu0 %v1570, 110
    %v1573 = vpop.permute.xlu0 %1572
    %1574 = vrot.lane.b32.xlu0 %v1571, 110
    %v1575 = vpop.permute.xlu0 %1574
    %v1576 = vsel %vm191, %v1573, %v1575
    %v1577 = vsel %vm191, %v1575, %v486
    %v1583 = vrot.slane %v1515, 2
    %v1584 = vrot.slane %v1516, 2
    %1585 = vrot.lane.b32.xlu0 %v1583, 96
    %v1586 = vpop.permute.xlu0 %1585
    %1587 = vrot.lane.b32.xlu0 %v1584, 96
    %v1588 = vpop.permute.xlu0 %1587
    %v1589 = vsel %vm206, %v1586, %v1588
    %v1590 = vsel %vm206, %v1588, %v502
    %v1594 = vrot.slane %v1485, 1
    %v1595 = vrot.slane %v1505, 1
    %1596 = vrot.lane.b32.xlu0 %v1594, 95
    %v1597 = vpop.permute.xlu0 %1596
    %1598 = vrot.lane.b32.xlu0 %v1595, 95
    %v1599 = vpop.permute.xlu0 %1598
    %v1600 = vsel %vm218, %v1597, %v1599
    %v1601 = vsel %vm218, %v1599, %v516
    %1607 = vrot.lane.b32.xlu0 %v1517, 94
    %v1608 = vpop.permute.xlu0 %1607
    %1609 = vrot.lane.b32.xlu0 %v1518, 94
    %v1610 = vpop.permute.xlu0 %1609
    %v1611 = vsel %vm233, %v1608, %v1610
    %v1612 = vsel %vm233, %v1610, %v232
    %v1613 = vsel %vm530, %v57, %v1527
    %v1614 = vsel %vm530, %v1507, %v1528
    %v1615 = vsel %vm530, %v1508, %v1526
    %v1616 = vsel %vm534, %v1613, %v1540
    %v1617 = vsel %vm534, %v1614, %v1541
    %v1618 = vsel %vm534, %v1615, %v1539
    %v1619 = vsel %vm538, %v1616, %v1553
    %v1620 = vsel %vm538, %v1617, %v1554
    %v1621 = vsel %vm538, %v1618, %v1552
    %v1622 = vsel %vm236, %v1619, %v1561
    %v1623 = vsel %vm236, %v1620, %v1564
    %v1624 = vsel %vm236, %v1621, %v1563
    %v1625 = vsel %vm545, %v1622, %v1573
    %v1626 = vsel %vm545, %v1623, %v1576
    %v1627 = vsel %vm545, %v1624, %v1577
    %v1628 = vsel %vm549, %v1625, %v1586
    %v1629 = vsel %vm549, %v1626, %v1589
    %v1630 = vsel %vm549, %v1627, %v1590
    %v1631 = vsel %vm553, %v1628, %v1597
    %v1632 = vsel %vm553, %v1629, %v1600
    %v1633 = vsel %vm553, %v1630, %v1601
    %1637 = vrot.lane.b32.xlu0 %v1631, 17
    %v1638 = vpop.permute.xlu0 %1637
    %1639 = vrot.lane.b32.xlu0 %v1632, 17
    %v1640 = vpop.permute.xlu0 %1639
    %1641 = vrot.lane.b32.xlu0 %v1633, 17
    %v1642 = vpop.permute.xlu0 %1641
    %1643 = vrot.lane.b32.xlu0 %v1608, 17
    %v1644 = vpop.permute.xlu0 %1643
    %1645 = vrot.lane.b32.xlu0 %v1611, 17
    %v1646 = vpop.permute.xlu0 %1645
    %1647 = vrot.lane.b32.xlu0 %v1612, 17
    %v1648 = vpop.permute.xlu0 %1647
    %v1649 = vsel %vm115, %v1638, %v1640
    %v1650 = vsel %vm115, %v1640, %v1642
    %v1651 = vsel %vm115, %v1644, %v1646
    %v1652 = vsel %vm115, %v1646, %v1648
    %v1655 = vsel %vm530, %v1651, 0
    %v1657 = vsel %vm530, %v1652, 0
    %1659 = vmatpush.msra.mxu0 0.0
    %1660 = vmatpush.msra.mxu0 0.0
    %1661 = vmatpush.msra.mxu0 0.0
    %1662 = vmatpush.msra.mxu0 0.0
    %1663 = vmatpush.msra.mxu0 0.0
    %1664 = vmatpush.msra.mxu0 0.0
    %1665 = vmatpush.msra.mxu0 0.0
    %1666 = vmatpush.msra.mxu0 0.0
    %1667 = vmatpush.msra.mxu0 0.0
    %1668 = vmatpush.msra.mxu0 0.0
    %1669 = vmatpush.msra.mxu0 0.0
    %1670 = vmatpush.msra.mxu0 0.0
    %1671 = vmatpush.msra.mxu0 0.0
    %1672 = vmatpush.msra.mxu0 0.0
    %1673 = vmatpush.msra.mxu0 %v1655
    %1674 = vmatpush.msra.mxu0 %v1649
    %1675 = vmatmul.f32.gmra.mxu0 %v580
    %v1676 = vpop.f32.mrf.mxu0
    %v1677 = vadd.f32 0.0, %v1676
    %1678 = vdwg.mxu0
    %1679 = vmatpush.msra.mxu0 0.0
    %1680 = vmatpush.msra.mxu0 0.0
    %1681 = vmatpush.msra.mxu0 0.0
    %1682 = vmatpush.msra.mxu0 0.0
    %1683 = vmatpush.msra.mxu0 0.0
    %1684 = vmatpush.msra.mxu0 0.0
    %1685 = vmatpush.msra.mxu0 0.0
    %1686 = vmatpush.msra.mxu0 0.0
    %1687 = vmatpush.msra.mxu0 0.0
    %1688 = vmatpush.msra.mxu0 0.0
    %1689 = vmatpush.msra.mxu0 0.0
    %1690 = vmatpush.msra.mxu0 0.0
    %1691 = vmatpush.msra.mxu0 0.0
    %1692 = vmatpush.msra.mxu0 0.0
    %1693 = vmatpush.msra.mxu0 %v1657
    %1694 = vmatpush.msra.mxu0 %v1650
    %1695 = vmatmul.f32.gmra.mxu0 %v580
    %v1696 = vpop.f32.mrf.mxu0
    %v1697 = vadd.f32 0.0, %v1696
    %1698 = vdwg.mxu0
    %v1699 = vrot.slane %v1677, 4
    %v1700 = vmax.f32 %v1677, %v1699
    %v1701 = vrot.slane %v1700, 2
    %v1702 = vmax.f32 %v1700, %v1701
    %v1703 = vrot.slane %v1702, 1
    %v1704 = vmax.f32 %v1702, %v1703
    %v1705 = vrot.slane %v1697, 4
    %v1706 = vmax.f32 %v1697, %v1705
    %v1707 = vrot.slane %v1706, 2
    %v1708 = vmax.f32 %v1706, %v1707
    %v1709 = vrot.slane %v1708, 1
    %v1710 = vmax.f32 %v1708, %v1709
    %v1711 = vmul.f32 %v1704, %v53
    %v1712 = vmul.f32 %v1710, %v51
    %v1713 = vmul.f32 %v1704, %v68
    %v1714 = vmul.f32 %v1710, %v66
    %v1715 = vmul.f32 %v1704, %v80
    %v1716 = vmul.f32 %v1710, %v78
    %v1717 = vmul.f32 %v1704, %v88
    %v1718 = vmul.f32 %v1710, %v92
    %v1719 = vmul.f32 %v1704, %v100
    %v1720 = vmul.f32 %v1710, %v104
    %v1721 = vmul.f32 %v1704, %v112
    %v1722 = vmul.f32 %v1710, %v116
    %v1725 = vrot.slane %v1704, 7
    %v1726 = vrot.slane %v1710, 7
    %1727 = vrot.lane.b32.xlu0 %v1725, 127
    %v1728 = vpop.permute.xlu0 %1727
    %1729 = vrot.lane.b32.xlu0 %v1726, 127
    %v1730 = vpop.permute.xlu0 %1729
    %v1731 = vsel %vm79, %v424, %v1728
    %v1732 = vsel %vm79, %v1728, %v1730
    %v1738 = vrot.slane %v1713, 6
    %v1739 = vrot.slane %v1714, 6
    %1740 = vrot.lane.b32.xlu0 %v1738, 126
    %v1741 = vpop.permute.xlu0 %1740
    %1742 = vrot.lane.b32.xlu0 %v1739, 126
    %v1743 = vpop.permute.xlu0 %1742
    %v1744 = vsel %vm147, %v440, %v1741
    %v1745 = vsel %vm147, %v1741, %v1743
    %v1751 = vrot.slane %v1715, 5
    %v1752 = vrot.slane %v1716, 5
    %1753 = vrot.lane.b32.xlu0 %v1751, 112
    %v1754 = vpop.permute.xlu0 %1753
    %1755 = vrot.lane.b32.xlu0 %v1752, 112
    %v1756 = vpop.permute.xlu0 %1755
    %v1757 = vsel %vm165, %v456, %v1754
    %v1758 = vsel %vm165, %v1754, %v1756
    %v1762 = vrot.slane %v1704, 4
    %v1763 = vrot.slane %v1710, 4
    %1764 = vrot.lane.b32.xlu0 %v1762, 111
    %v1765 = vpop.permute.xlu0 %1764
    %1766 = vrot.lane.b32.xlu0 %v1763, 111
    %v1767 = vpop.permute.xlu0 %1766
    %v1768 = vsel %vm52, %v1765, %v1767
    %v1774 = vrot.slane %v1717, 3
    %v1775 = vrot.slane %v1718, 3
    %1776 = vrot.lane.b32.xlu0 %v1774, 110
    %v1777 = vpop.permute.xlu0 %1776
    %1778 = vrot.lane.b32.xlu0 %v1775, 110
    %v1779 = vpop.permute.xlu0 %1778
    %v1780 = vsel %vm191, %v1777, %v1779
    %v1781 = vsel %vm191, %v1779, %v486
    %v1787 = vrot.slane %v1719, 2
    %v1788 = vrot.slane %v1720, 2
    %1789 = vrot.lane.b32.xlu0 %v1787, 96
    %v1790 = vpop.permute.xlu0 %1789
    %1791 = vrot.lane.b32.xlu0 %v1788, 96
    %v1792 = vpop.permute.xlu0 %1791
    %v1793 = vsel %vm206, %v1790, %v1792
    %v1794 = vsel %vm206, %v1792, %v502
    %v1798 = vrot.slane %v1704, 1
    %v1799 = vrot.slane %v1710, 1
    %1800 = vrot.lane.b32.xlu0 %v1798, 95
    %v1801 = vpop.permute.xlu0 %1800
    %1802 = vrot.lane.b32.xlu0 %v1799, 95
    %v1803 = vpop.permute.xlu0 %1802
    %v1804 = vsel %vm218, %v1801, %v1803
    %v1805 = vsel %vm218, %v1803, %v516
    %1811 = vrot.lane.b32.xlu0 %v1721, 94
    %v1812 = vpop.permute.xlu0 %1811
    %1813 = vrot.lane.b32.xlu0 %v1722, 94
    %v1814 = vpop.permute.xlu0 %1813
    %v1815 = vsel %vm233, %v1812, %v1814
    %v1816 = vsel %vm233, %v1814, %v232
    %v1817 = vsel %vm530, %v57, %v1731
    %v1818 = vsel %vm530, %v1711, %v1732
    %v1819 = vsel %vm530, %v1712, %v1730
    %v1820 = vsel %vm534, %v1817, %v1744
    %v1821 = vsel %vm534, %v1818, %v1745
    %v1822 = vsel %vm534, %v1819, %v1743
    %v1823 = vsel %vm538, %v1820, %v1757
    %v1824 = vsel %vm538, %v1821, %v1758
    %v1825 = vsel %vm538, %v1822, %v1756
    %v1826 = vsel %vm236, %v1823, %v1765
    %v1827 = vsel %vm236, %v1824, %v1768
    %v1828 = vsel %vm236, %v1825, %v1767
    %v1829 = vsel %vm545, %v1826, %v1777
    %v1830 = vsel %vm545, %v1827, %v1780
    %v1831 = vsel %vm545, %v1828, %v1781
    %v1832 = vsel %vm549, %v1829, %v1790
    %v1833 = vsel %vm549, %v1830, %v1793
    %v1834 = vsel %vm549, %v1831, %v1794
    %v1835 = vsel %vm553, %v1832, %v1801
    %v1836 = vsel %vm553, %v1833, %v1804
    %v1837 = vsel %vm553, %v1834, %v1805
    %1841 = vrot.lane.b32.xlu0 %v1835, 17
    %v1842 = vpop.permute.xlu0 %1841
    %1843 = vrot.lane.b32.xlu0 %v1836, 17
    %v1844 = vpop.permute.xlu0 %1843
    %1845 = vrot.lane.b32.xlu0 %v1837, 17
    %v1846 = vpop.permute.xlu0 %1845
    %1847 = vrot.lane.b32.xlu0 %v1812, 17
    %v1848 = vpop.permute.xlu0 %1847
    %1849 = vrot.lane.b32.xlu0 %v1815, 17
    %v1850 = vpop.permute.xlu0 %1849
    %1851 = vrot.lane.b32.xlu0 %v1816, 17
    %v1852 = vpop.permute.xlu0 %1851
    %v1853 = vsel %vm115, %v1842, %v1844
    %v1854 = vsel %vm115, %v1844, %v1846
    %v1855 = vsel %vm115, %v1848, %v1850
    %v1856 = vsel %vm115, %v1850, %v1852
    %v1859 = vsel %vm530, %v1855, 0
    %v1861 = vsel %vm530, %v1856, 0
    %1863 = vmatpush.msra.mxu0 0.0
    %1864 = vmatpush.msra.mxu0 0.0
    %1865 = vmatpush.msra.mxu0 0.0
    %1866 = vmatpush.msra.mxu0 0.0
    %1867 = vmatpush.msra.mxu0 0.0
    %1868 = vmatpush.msra.mxu0 0.0
    %1869 = vmatpush.msra.mxu0 0.0
    %1870 = vmatpush.msra.mxu0 0.0
    %1871 = vmatpush.msra.mxu0 0.0
    %1872 = vmatpush.msra.mxu0 0.0
    %1873 = vmatpush.msra.mxu0 0.0
    %1874 = vmatpush.msra.mxu0 0.0
    %1875 = vmatpush.msra.mxu0 0.0
    %1876 = vmatpush.msra.mxu0 0.0
    %1877 = vmatpush.msra.mxu0 %v1859
    %1878 = vmatpush.msra.mxu0 %v1853
    %1879 = vmatmul.f32.gmra.mxu0 %v787
    %v1880 = vpop.f32.mrf.mxu0
    %v1881 = vadd.f32 0.0, %v1880
    %1882 = vdwg.mxu0
    %1883 = vmatpush.msra.mxu0 0.0
    %1884 = vmatpush.msra.mxu0 0.0
    %1885 = vmatpush.msra.mxu0 0.0
    %1886 = vmatpush.msra.mxu0 0.0
    %1887 = vmatpush.msra.mxu0 0.0
    %1888 = vmatpush.msra.mxu0 0.0
    %1889 = vmatpush.msra.mxu0 0.0
    %1890 = vmatpush.msra.mxu0 0.0
    %1891 = vmatpush.msra.mxu0 0.0
    %1892 = vmatpush.msra.mxu0 0.0
    %1893 = vmatpush.msra.mxu0 0.0
    %1894 = vmatpush.msra.mxu0 0.0
    %1895 = vmatpush.msra.mxu0 0.0
    %1896 = vmatpush.msra.mxu0 0.0
    %1897 = vmatpush.msra.mxu0 %v1861
    %1898 = vmatpush.msra.mxu0 %v1854
    %1899 = vmatmul.f32.gmra.mxu0 %v787
    %v1900 = vpop.f32.mrf.mxu0
    %v1901 = vadd.f32 0.0, %v1900
    %1902 = vdwg.mxu0
    %v1903 = vadd.f32 %v1677, %v1881
    %v1904 = vadd.f32 %v1697, %v1901
    %v1905 = vrot.slane %v1903, 4
    %v1906 = vmax.f32 %v1903, %v1905
    %v1907 = vrot.slane %v1906, 2
    %v1908 = vmax.f32 %v1906, %v1907
    %v1909 = vrot.slane %v1908, 1
    %v1910 = vmax.f32 %v1908, %v1909
    %v1911 = vrot.slane %v1904, 4
    %v1912 = vmax.f32 %v1904, %v1911
    %v1913 = vrot.slane %v1912, 2
    %v1914 = vmax.f32 %v1912, %v1913
    %v1915 = vrot.slane %v1914, 1
    %v1916 = vmax.f32 %v1914, %v1915
    %v1917 = vmul.f32 %v1910, %v53
    %v1918 = vmul.f32 %v1916, %v51
    %v1919 = vmul.f32 %v1910, %v68
    %v1920 = vmul.f32 %v1916, %v66
    %v1921 = vmul.f32 %v1910, %v80
    %v1922 = vmul.f32 %v1916, %v78
    %v1923 = vmul.f32 %v1910, %v88
    %v1924 = vmul.f32 %v1916, %v92
    %v1925 = vmul.f32 %v1910, %v100
    %v1926 = vmul.f32 %v1916, %v104
    %v1927 = vmul.f32 %v1910, %v112
    %v1928 = vmul.f32 %v1916, %v116
    %v1931 = vrot.slane %v1910, 7
    %v1932 = vrot.slane %v1916, 7
    %1933 = vrot.lane.b32.xlu0 %v1931, 127
    %v1934 = vpop.permute.xlu0 %1933
    %1935 = vrot.lane.b32.xlu0 %v1932, 127
    %v1936 = vpop.permute.xlu0 %1935
    %v1937 = vsel %vm79, %v424, %v1934
    %v1938 = vsel %vm79, %v1934, %v1936
    %v1944 = vrot.slane %v1919, 6
    %v1945 = vrot.slane %v1920, 6
    %1946 = vrot.lane.b32.xlu0 %v1944, 126
    %v1947 = vpop.permute.xlu0 %1946
    %1948 = vrot.lane.b32.xlu0 %v1945, 126
    %v1949 = vpop.permute.xlu0 %1948
    %v1950 = vsel %vm147, %v440, %v1947
    %v1951 = vsel %vm147, %v1947, %v1949
    %v1957 = vrot.slane %v1921, 5
    %v1958 = vrot.slane %v1922, 5
    %1959 = vrot.lane.b32.xlu0 %v1957, 112
    %v1960 = vpop.permute.xlu0 %1959
    %1961 = vrot.lane.b32.xlu0 %v1958, 112
    %v1962 = vpop.permute.xlu0 %1961
    %v1963 = vsel %vm165, %v456, %v1960
    %v1964 = vsel %vm165, %v1960, %v1962
    %v1968 = vrot.slane %v1910, 4
    %v1969 = vrot.slane %v1916, 4
    %1970 = vrot.lane.b32.xlu0 %v1968, 111
    %v1971 = vpop.permute.xlu0 %1970
    %1972 = vrot.lane.b32.xlu0 %v1969, 111
    %v1973 = vpop.permute.xlu0 %1972
    %v1974 = vsel %vm52, %v1971, %v1973
    %v1980 = vrot.slane %v1923, 3
    %v1981 = vrot.slane %v1924, 3
    %1982 = vrot.lane.b32.xlu0 %v1980, 110
    %v1983 = vpop.permute.xlu0 %1982
    %1984 = vrot.lane.b32.xlu0 %v1981, 110
    %v1985 = vpop.permute.xlu0 %1984
    %v1986 = vsel %vm191, %v1983, %v1985
    %v1987 = vsel %vm191, %v1985, %v486
    %v1993 = vrot.slane %v1925, 2
    %v1994 = vrot.slane %v1926, 2
    %1995 = vrot.lane.b32.xlu0 %v1993, 96
    %v1996 = vpop.permute.xlu0 %1995
    %1997 = vrot.lane.b32.xlu0 %v1994, 96
    %v1998 = vpop.permute.xlu0 %1997
    %v1999 = vsel %vm206, %v1996, %v1998
    %v2000 = vsel %vm206, %v1998, %v502
    %v2004 = vrot.slane %v1910, 1
    %v2005 = vrot.slane %v1916, 1
    %2006 = vrot.lane.b32.xlu0 %v2004, 95
    %v2007 = vpop.permute.xlu0 %2006
    %2008 = vrot.lane.b32.xlu0 %v2005, 95
    %v2009 = vpop.permute.xlu0 %2008
    %v2010 = vsel %vm218, %v2007, %v2009
    %v2011 = vsel %vm218, %v2009, %v516
    %2017 = vrot.lane.b32.xlu0 %v1927, 94
    %v2018 = vpop.permute.xlu0 %2017
    %2019 = vrot.lane.b32.xlu0 %v1928, 94
    %v2020 = vpop.permute.xlu0 %2019
    %v2021 = vsel %vm233, %v2018, %v2020
    %v2022 = vsel %vm233, %v2020, %v232
    %v2023 = vsel %vm530, %v57, %v1937
    %v2024 = vsel %vm530, %v1917, %v1938
    %v2025 = vsel %vm530, %v1918, %v1936
    %v2026 = vsel %vm534, %v2023, %v1950
    %v2027 = vsel %vm534, %v2024, %v1951
    %v2028 = vsel %vm534, %v2025, %v1949
    %v2029 = vsel %vm538, %v2026, %v1963
    %v2030 = vsel %vm538, %v2027, %v1964
    %v2031 = vsel %vm538, %v2028, %v1962
    %v2032 = vsel %vm236, %v2029, %v1971
    %v2033 = vsel %vm236, %v2030, %v1974
    %v2034 = vsel %vm236, %v2031, %v1973
    %v2035 = vsel %vm545, %v2032, %v1983
    %v2036 = vsel %vm545, %v2033, %v1986
    %v2037 = vsel %vm545, %v2034, %v1987
    %v2038 = vsel %vm549, %v2035, %v1996
    %v2039 = vsel %vm549, %v2036, %v1999
    %v2040 = vsel %vm549, %v2037, %v2000
    %v2041 = vsel %vm553, %v2038, %v2007
    %v2042 = vsel %vm553, %v2039, %v2010
    %v2043 = vsel %vm553, %v2040, %v2011
    %2047 = vrot.lane.b32.xlu0 %v2041, 17
    %v2048 = vpop.permute.xlu0 %2047
    %2049 = vrot.lane.b32.xlu0 %v2042, 17
    %v2050 = vpop.permute.xlu0 %2049
    %2051 = vrot.lane.b32.xlu0 %v2043, 17
    %v2052 = vpop.permute.xlu0 %2051
    %2053 = vrot.lane.b32.xlu0 %v2018, 17
    %v2054 = vpop.permute.xlu0 %2053
    %2055 = vrot.lane.b32.xlu0 %v2021, 17
    %v2056 = vpop.permute.xlu0 %2055
    %2057 = vrot.lane.b32.xlu0 %v2022, 17
    %v2058 = vpop.permute.xlu0 %2057
    %v2059 = vsel %vm115, %v2048, %v2050
    %v2060 = vsel %vm115, %v2050, %v2052
    %v2061 = vsel %vm115, %v2054, %v2056
    %v2062 = vsel %vm115, %v2056, %v2058
    %v2065 = vsel %vm530, %v2061, 0
    %v2067 = vsel %vm530, %v2062, 0
    %2069 = vmatpush.msra.mxu0 0.0
    %2070 = vmatpush.msra.mxu0 0.0
    %2071 = vmatpush.msra.mxu0 0.0
    %2072 = vmatpush.msra.mxu0 0.0
    %2073 = vmatpush.msra.mxu0 0.0
    %2074 = vmatpush.msra.mxu0 0.0
    %2075 = vmatpush.msra.mxu0 0.0
    %2076 = vmatpush.msra.mxu0 0.0
    %2077 = vmatpush.msra.mxu0 0.0
    %2078 = vmatpush.msra.mxu0 0.0
    %2079 = vmatpush.msra.mxu0 0.0
    %2080 = vmatpush.msra.mxu0 0.0
    %2081 = vmatpush.msra.mxu0 0.0
    %2082 = vmatpush.msra.mxu0 0.0
    %2083 = vmatpush.msra.mxu0 %v2065
    %2084 = vmatpush.msra.mxu0 %v2059
    %2085 = vmatmul.f32.gmra.mxu0 %v787
    %v2086 = vpop.f32.mrf.mxu0
    %v2087 = vadd.f32 0.0, %v2086
    %2088 = vdwg.mxu0
    %2089 = vmatpush.msra.mxu0 0.0
    %2090 = vmatpush.msra.mxu0 0.0
    %2091 = vmatpush.msra.mxu0 0.0
    %2092 = vmatpush.msra.mxu0 0.0
    %2093 = vmatpush.msra.mxu0 0.0
    %2094 = vmatpush.msra.mxu0 0.0
    %2095 = vmatpush.msra.mxu0 0.0
    %2096 = vmatpush.msra.mxu0 0.0
    %2097 = vmatpush.msra.mxu0 0.0
    %2098 = vmatpush.msra.mxu0 0.0
    %2099 = vmatpush.msra.mxu0 0.0
    %2100 = vmatpush.msra.mxu0 0.0
    %2101 = vmatpush.msra.mxu0 0.0
    %2102 = vmatpush.msra.mxu0 0.0
    %2103 = vmatpush.msra.mxu0 %v2067
    %2104 = vmatpush.msra.mxu0 %v2060
    %2105 = vmatmul.f32.gmra.mxu0 %v787
    %v2106 = vpop.f32.mrf.mxu0
    %v2107 = vadd.f32 0.0, %v2106
    %2108 = vdwg.mxu0
    %v2109 = vadd.f32 %v1677, %v2087
    %v2110 = vadd.f32 %v1697, %v2107
    %v2111 = vrot.slane %v2109, 4
    %v2112 = vmax.f32 %v2109, %v2111
    %v2113 = vrot.slane %v2112, 2
    %v2114 = vmax.f32 %v2112, %v2113
    %v2115 = vrot.slane %v2114, 1
    %v2116 = vmax.f32 %v2114, %v2115
    %v2117 = vrot.slane %v2110, 4
    %v2118 = vmax.f32 %v2110, %v2117
    %v2119 = vrot.slane %v2118, 2
    %v2120 = vmax.f32 %v2118, %v2119
    %v2121 = vrot.slane %v2120, 1
    %v2122 = vmax.f32 %v2120, %v2121
    %v2123 = vmul.f32 %v2116, %v53
    %v2124 = vmul.f32 %v2122, %v51
    %v2125 = vmul.f32 %v2116, %v68
    %v2126 = vmul.f32 %v2122, %v66
    %v2127 = vmul.f32 %v2116, %v80
    %v2128 = vmul.f32 %v2122, %v78
    %v2129 = vmul.f32 %v2116, %v88
    %v2130 = vmul.f32 %v2122, %v92
    %v2131 = vmul.f32 %v2116, %v100
    %v2132 = vmul.f32 %v2122, %v104
    %v2133 = vmul.f32 %v2116, %v112
    %v2134 = vmul.f32 %v2122, %v116
    %v2137 = vrot.slane %v2116, 7
    %v2138 = vrot.slane %v2122, 7
    %2139 = vrot.lane.b32.xlu0 %v2137, 127
    %v2140 = vpop.permute.xlu0 %2139
    %2141 = vrot.lane.b32.xlu0 %v2138, 127
    %v2142 = vpop.permute.xlu0 %2141
    %v2143 = vsel %vm79, %v424, %v2140
    %v2144 = vsel %vm79, %v2140, %v2142
    %v2150 = vrot.slane %v2125, 6
    %v2151 = vrot.slane %v2126, 6
    %2152 = vrot.lane.b32.xlu0 %v2150, 126
    %v2153 = vpop.permute.xlu0 %2152
    %2154 = vrot.lane.b32.xlu0 %v2151, 126
    %v2155 = vpop.permute.xlu0 %2154
    %v2156 = vsel %vm147, %v440, %v2153
    %v2157 = vsel %vm147, %v2153, %v2155
    %v2163 = vrot.slane %v2127, 5
    %v2164 = vrot.slane %v2128, 5
    %2165 = vrot.lane.b32.xlu0 %v2163, 112
    %v2166 = vpop.permute.xlu0 %2165
    %2167 = vrot.lane.b32.xlu0 %v2164, 112
    %v2168 = vpop.permute.xlu0 %2167
    %v2169 = vsel %vm165, %v456, %v2166
    %v2170 = vsel %vm165, %v2166, %v2168
    %v2174 = vrot.slane %v2116, 4
    %v2175 = vrot.slane %v2122, 4
    %2176 = vrot.lane.b32.xlu0 %v2174, 111
    %v2177 = vpop.permute.xlu0 %2176
    %2178 = vrot.lane.b32.xlu0 %v2175, 111
    %v2179 = vpop.permute.xlu0 %2178
    %v2180 = vsel %vm52, %v2177, %v2179
    %v2186 = vrot.slane %v2129, 3
    %v2187 = vrot.slane %v2130, 3
    %2188 = vrot.lane.b32.xlu0 %v2186, 110
    %v2189 = vpop.permute.xlu0 %2188
    %2190 = vrot.lane.b32.xlu0 %v2187, 110
    %v2191 = vpop.permute.xlu0 %2190
    %v2192 = vsel %vm191, %v2189, %v2191
    %v2193 = vsel %vm191, %v2191, %v486
    %v2199 = vrot.slane %v2131, 2
    %v2200 = vrot.slane %v2132, 2
    %2201 = vrot.lane.b32.xlu0 %v2199, 96
    %v2202 = vpop.permute.xlu0 %2201
    %2203 = vrot.lane.b32.xlu0 %v2200, 96
    %v2204 = vpop.permute.xlu0 %2203
    %v2205 = vsel %vm206, %v2202, %v2204
    %v2206 = vsel %vm206, %v2204, %v502
    %v2210 = vrot.slane %v2116, 1
    %v2211 = vrot.slane %v2122, 1
    %2212 = vrot.lane.b32.xlu0 %v2210, 95
    %v2213 = vpop.permute.xlu0 %2212
    %2214 = vrot.lane.b32.xlu0 %v2211, 95
    %v2215 = vpop.permute.xlu0 %2214
    %v2216 = vsel %vm218, %v2213, %v2215
    %v2217 = vsel %vm218, %v2215, %v516
    %2223 = vrot.lane.b32.xlu0 %v2133, 94
    %v2224 = vpop.permute.xlu0 %2223
    %2225 = vrot.lane.b32.xlu0 %v2134, 94
    %v2226 = vpop.permute.xlu0 %2225
    %v2227 = vsel %vm233, %v2224, %v2226
    %v2228 = vsel %vm233, %v2226, %v232
    %v2229 = vsel %vm530, %v57, %v2143
    %v2230 = vsel %vm530, %v2123, %v2144
    %v2231 = vsel %vm530, %v2124, %v2142
    %v2232 = vsel %vm534, %v2229, %v2156
    %v2233 = vsel %vm534, %v2230, %v2157
    %v2234 = vsel %vm534, %v2231, %v2155
    %v2235 = vsel %vm538, %v2232, %v2169
    %v2236 = vsel %vm538, %v2233, %v2170
    %v2237 = vsel %vm538, %v2234, %v2168
    %v2238 = vsel %vm236, %v2235, %v2177
    %v2239 = vsel %vm236, %v2236, %v2180
    %v2240 = vsel %vm236, %v2237, %v2179
    %v2241 = vsel %vm545, %v2238, %v2189
    %v2242 = vsel %vm545, %v2239, %v2192
    %v2243 = vsel %vm545, %v2240, %v2193
    %v2244 = vsel %vm549, %v2241, %v2202
    %v2245 = vsel %vm549, %v2242, %v2205
    %v2246 = vsel %vm549, %v2243, %v2206
    %v2247 = vsel %vm553, %v2244, %v2213
    %v2248 = vsel %vm553, %v2245, %v2216
    %v2249 = vsel %vm553, %v2246, %v2217
    %2253 = vrot.lane.b32.xlu0 %v2247, 17
    %v2254 = vpop.permute.xlu0 %2253
    %2255 = vrot.lane.b32.xlu0 %v2248, 17
    %v2256 = vpop.permute.xlu0 %2255
    %2257 = vrot.lane.b32.xlu0 %v2249, 17
    %v2258 = vpop.permute.xlu0 %2257
    %2259 = vrot.lane.b32.xlu0 %v2224, 17
    %v2260 = vpop.permute.xlu0 %2259
    %2261 = vrot.lane.b32.xlu0 %v2227, 17
    %v2262 = vpop.permute.xlu0 %2261
    %2263 = vrot.lane.b32.xlu0 %v2228, 17
    %v2264 = vpop.permute.xlu0 %2263
    %v2265 = vsel %vm115, %v2254, %v2256
    %v2266 = vsel %vm115, %v2256, %v2258
    %v2267 = vsel %vm115, %v2260, %v2262
    %v2268 = vsel %vm115, %v2262, %v2264
    %v2271 = vsel %vm530, %v2267, 0
    %v2273 = vsel %vm530, %v2268, 0
    %2275 = vmatpush.msra.mxu0 0.0
    %2276 = vmatpush.msra.mxu0 0.0
    %2277 = vmatpush.msra.mxu0 0.0
    %2278 = vmatpush.msra.mxu0 0.0
    %2279 = vmatpush.msra.mxu0 0.0
    %2280 = vmatpush.msra.mxu0 0.0
    %2281 = vmatpush.msra.mxu0 0.0
    %2282 = vmatpush.msra.mxu0 0.0
    %2283 = vmatpush.msra.mxu0 0.0
    %2284 = vmatpush.msra.mxu0 0.0
    %2285 = vmatpush.msra.mxu0 0.0
    %2286 = vmatpush.msra.mxu0 0.0
    %2287 = vmatpush.msra.mxu0 0.0
    %2288 = vmatpush.msra.mxu0 0.0
    %2289 = vmatpush.msra.mxu0 %v2271
    %2290 = vmatpush.msra.mxu0 %v2265
    %2291 = vmatmul.f32.gmra.mxu0 %v787
    %v2292 = vpop.f32.mrf.mxu0
    %v2293 = vadd.f32 0.0, %v2292
    %2294 = vdwg.mxu0
    %2295 = vmatpush.msra.mxu0 0.0
    %2296 = vmatpush.msra.mxu0 0.0
    %2297 = vmatpush.msra.mxu0 0.0
    %2298 = vmatpush.msra.mxu0 0.0
    %2299 = vmatpush.msra.mxu0 0.0
    %2300 = vmatpush.msra.mxu0 0.0
    %2301 = vmatpush.msra.mxu0 0.0
    %2302 = vmatpush.msra.mxu0 0.0
    %2303 = vmatpush.msra.mxu0 0.0
    %2304 = vmatpush.msra.mxu0 0.0
    %2305 = vmatpush.msra.mxu0 0.0
    %2306 = vmatpush.msra.mxu0 0.0
    %2307 = vmatpush.msra.mxu0 0.0
    %2308 = vmatpush.msra.mxu0 0.0
    %2309 = vmatpush.msra.mxu0 %v2273
    %2310 = vmatpush.msra.mxu0 %v2266
    %2311 = vmatmul.f32.gmra.mxu0 %v787
    %v2312 = vpop.f32.mrf.mxu0
    %v2313 = vadd.f32 0.0, %v2312
    %2314 = vdwg.mxu0
    %v2315 = vadd.f32 %v1677, %v2293
    %v2316 = vadd.f32 %v1697, %v2313
    %v2319 = vrot.slane %v2315, 7
    %v2320 = vrot.slane %v2316, 7
    %v2323 = vsel %vm530, %v1245, %v2319
    %v2324 = vsel %vm530, %v1246, %v2320
    %v2325 = vld [vmem:[%s7] sm:$0xff]
    %v2326 = vld [vmem:[%s7 + $0x8] sm:$0xff]
    %v2327 = vld [vmem:[%s7 + $0x10] sm:$0xff]
    %v2328 = vld [vmem:[%s7 + $0x18] sm:$0xff]
    %v2329 = vld [vmem:[%s7 + $0x20] sm:$0xff]
    %v2330 = vld [vmem:[%s7 + $0x28] sm:$0xff]
    %v2331 = vld [vmem:[%s7 + $0x30] sm:$0xff]
    %v2332 = vld [vmem:[%s7 + $0x38] sm:$0xff]
    %v2333 = vld [vmem:[%s7 + $0x40] sm:$0xff]
    %v2334 = vld [vmem:[%s7 + $0x48] sm:$0xff]
    %v2335 = vld [vmem:[%s7 + $0x50] sm:$0xff]
    %v2336 = vld [vmem:[%s7 + $0x58] sm:$0xff]
    %v2337 = vld [vmem:[%s7 + $0x60] sm:$0xff]
    %v2338 = vld [vmem:[%s7 + $0x68] sm:$0xff]
    %v2339 = vld [vmem:[%s7 + $0x70] sm:$0xff]
    %v2340 = vld [vmem:[%s7 + $0x78] sm:$0xff]
    %v2341 = vld [vmem:[%s7 + $0x80] sm:$0xff]
    %v2342 = vld [vmem:[%s7 + $0x88] sm:$0xff]
    %v2343 = vld [vmem:[%s7 + $0x90] sm:$0xff]
    %v2344 = vld [vmem:[%s7 + $0x98] sm:$0xff]
    %v2345 = vld [vmem:[%s7 + $0xa0] sm:$0xff]
    %v2346 = vld [vmem:[%s7 + $0xa8] sm:$0xff]
    %v2347 = vld [vmem:[%s7 + $0xb0] sm:$0xff]
    %v2348 = vld [vmem:[%s7 + $0xb8] sm:$0xff]
    %v2349 = vld [vmem:[%s7 + $0xc0] sm:$0xff]
    %v2350 = vld [vmem:[%s7 + $0xc8] sm:$0xff]
    %v2351 = vld [vmem:[%s7 + $0xd0] sm:$0xff]
    %v2352 = vld [vmem:[%s7 + $0xd8] sm:$0xff]
    %v2353 = vld [vmem:[%s7 + $0xe0] sm:$0xff]
    %v2354 = vld [vmem:[%s7 + $0xe8] sm:$0xff]
    %v2355 = vld [vmem:[%s7 + $0xf0] sm:$0xff]
    %v2356 = vld [vmem:[%s7 + $0xf8] sm:$0xff]
    %v2359 = vrot.slane %v1245, 1
    %v2360 = vrot.slane %v1246, 1
    %v2363 = vsel %vm530, %v2359, %v2315
    %v2364 = vsel %vm530, %v2360, %v2316
    %s2365 = scalar_lea.vmem %s7, 256
    %v2366 = vld [vmem:[%s2365] sm:$0xff]
    %v2367 = vld [vmem:[%s2365 + $0x8] sm:$0xff]
    %v2368 = vld [vmem:[%s2365 + $0x10] sm:$0xff]
    %v2369 = vld [vmem:[%s2365 + $0x18] sm:$0xff]
    %v2370 = vld [vmem:[%s2365 + $0x20] sm:$0xff]
    %v2371 = vld [vmem:[%s2365 + $0x28] sm:$0xff]
    %v2372 = vld [vmem:[%s2365 + $0x30] sm:$0xff]
    %v2373 = vld [vmem:[%s2365 + $0x38] sm:$0xff]
    %v2374 = vld [vmem:[%s2365 + $0x40] sm:$0xff]
    %v2375 = vld [vmem:[%s2365 + $0x48] sm:$0xff]
    %v2376 = vld [vmem:[%s2365 + $0x50] sm:$0xff]
    %v2377 = vld [vmem:[%s2365 + $0x58] sm:$0xff]
    %v2378 = vld [vmem:[%s2365 + $0x60] sm:$0xff]
    %v2379 = vld [vmem:[%s2365 + $0x68] sm:$0xff]
    %v2380 = vld [vmem:[%s2365 + $0x70] sm:$0xff]
    %v2381 = vld [vmem:[%s2365 + $0x78] sm:$0xff]
    %v2382 = vld [vmem:[%s2365 + $0x80] sm:$0xff]
    %v2383 = vld [vmem:[%s2365 + $0x88] sm:$0xff]
    %v2384 = vld [vmem:[%s2365 + $0x90] sm:$0xff]
    %v2385 = vld [vmem:[%s2365 + $0x98] sm:$0xff]
    %v2386 = vld [vmem:[%s2365 + $0xa0] sm:$0xff]
    %v2387 = vld [vmem:[%s2365 + $0xa8] sm:$0xff]
    %v2388 = vld [vmem:[%s2365 + $0xb0] sm:$0xff]
    %v2389 = vld [vmem:[%s2365 + $0xb8] sm:$0xff]
    %v2390 = vld [vmem:[%s2365 + $0xc0] sm:$0xff]
    %v2391 = vld [vmem:[%s2365 + $0xc8] sm:$0xff]
    %v2392 = vld [vmem:[%s2365 + $0xd0] sm:$0xff]
    %v2393 = vld [vmem:[%s2365 + $0xd8] sm:$0xff]
    %v2394 = vld [vmem:[%s2365 + $0xe0] sm:$0xff]
    %v2395 = vld [vmem:[%s2365 + $0xe8] sm:$0xff]
    %v2396 = vld [vmem:[%s2365 + $0xf0] sm:$0xff]
    %v2397 = vld [vmem:[%s2365 + $0xf8] sm:$0xff]
    %2398 = vmatpush.msra.mxu0 %v2381
    %2399 = vmatpush.msra.mxu0 %v2380
    %2400 = vmatpush.msra.mxu0 %v2379
    %2401 = vmatpush.msra.mxu0 %v2378
    %2402 = vmatpush.msra.mxu0 %v2377
    %2403 = vmatpush.msra.mxu0 %v2376
    %2404 = vmatpush.msra.mxu0 %v2375
    %2405 = vmatpush.msra.mxu0 %v2374
    %2406 = vmatpush.msra.mxu0 %v2373
    %2407 = vmatpush.msra.mxu0 %v2372
    %2408 = vmatpush.msra.mxu0 %v2371
    %2409 = vmatpush.msra.mxu0 %v2370
    %2410 = vmatpush.msra.mxu0 %v2369
    %2411 = vmatpush.msra.mxu0 %v2368
    %2412 = vmatpush.msra.mxu0 %v2367
    %2413 = vmatpush.msra.mxu0 %v2366
    %2414 = vmatmul.f32.gmra.mxu0 %v2363
    %v2415 = vpop.f32.mrf.mxu0
    %v2416 = vadd.f32 0.0, %v2415
    %2417 = vdwg.mxu0
    %2418 = vmatpush.msra.mxu0 %v2397
    %2419 = vmatpush.msra.mxu0 %v2396
    %2420 = vmatpush.msra.mxu0 %v2395
    %2421 = vmatpush.msra.mxu0 %v2394
    %2422 = vmatpush.msra.mxu0 %v2393
    %2423 = vmatpush.msra.mxu0 %v2392
    %2424 = vmatpush.msra.mxu0 %v2391
    %2425 = vmatpush.msra.mxu0 %v2390
    %2426 = vmatpush.msra.mxu0 %v2389
    %2427 = vmatpush.msra.mxu0 %v2388
    %2428 = vmatpush.msra.mxu0 %v2387
    %2429 = vmatpush.msra.mxu0 %v2386
    %2430 = vmatpush.msra.mxu0 %v2385
    %2431 = vmatpush.msra.mxu0 %v2384
    %2432 = vmatpush.msra.mxu0 %v2383
    %2433 = vmatpush.msra.mxu0 %v2382
    %2434 = vmatmul.f32.gmra.mxu0 %v2364
    %v2435 = vpop.f32.mrf.mxu0
    %v2436 = vadd.f32 %v2416, %v2435
    %2437 = vdwg.mxu0
    %2438 = vmatpush.msra.mxu0 %v2340
    %2439 = vmatpush.msra.mxu0 %v2339
    %2440 = vmatpush.msra.mxu0 %v2338
    %2441 = vmatpush.msra.mxu0 %v2337
    %2442 = vmatpush.msra.mxu0 %v2336
    %2443 = vmatpush.msra.mxu0 %v2335
    %2444 = vmatpush.msra.mxu0 %v2334
    %2445 = vmatpush.msra.mxu0 %v2333
    %2446 = vmatpush.msra.mxu0 %v2332
    %2447 = vmatpush.msra.mxu0 %v2331
    %2448 = vmatpush.msra.mxu0 %v2330
    %2449 = vmatpush.msra.mxu0 %v2329
    %2450 = vmatpush.msra.mxu0 %v2328
    %2451 = vmatpush.msra.mxu0 %v2327
    %2452 = vmatpush.msra.mxu0 %v2326
    %2453 = vmatpush.msra.mxu0 %v2325
    %2454 = vmatmul.f32.gmra.mxu0 %v2323
    %v2455 = vpop.f32.mrf.mxu0
    %v2456 = vadd.f32 %v2436, %v2455
    %2457 = vdwg.mxu0
    %2458 = vmatpush.msra.mxu0 %v2356
    %2459 = vmatpush.msra.mxu0 %v2355
    %2460 = vmatpush.msra.mxu0 %v2354
    %2461 = vmatpush.msra.mxu0 %v2353
    %2462 = vmatpush.msra.mxu0 %v2352
    %2463 = vmatpush.msra.mxu0 %v2351
    %2464 = vmatpush.msra.mxu0 %v2350
    %2465 = vmatpush.msra.mxu0 %v2349
    %2466 = vmatpush.msra.mxu0 %v2348
    %2467 = vmatpush.msra.mxu0 %v2347
    %2468 = vmatpush.msra.mxu0 %v2346
    %2469 = vmatpush.msra.mxu0 %v2345
    %2470 = vmatpush.msra.mxu0 %v2344
    %2471 = vmatpush.msra.mxu0 %v2343
    %2472 = vmatpush.msra.mxu0 %v2342
    %2473 = vmatpush.msra.mxu0 %v2341
    %2474 = vmatmul.f32.gmra.mxu0 %v2324
    %v2475 = vpop.f32.mrf.mxu0
    %v2476 = vadd.f32 %v2456, %v2475
    %2477 = vdwg.mxu0
    %v2478 = vrot.slane %v1245, 2
    %v2479 = vrot.slane %v1246, 2
    %v2482 = vrot.slane %v2315, 1
    %v2483 = vrot.slane %v2316, 1
    %v2486 = vsel %vm530, %v2478, %v2482
    %v2487 = vsel %vm530, %v2479, %v2483
    %s2488 = scalar_lea.vmem %s7, 512
    %v2489 = vld [vmem:[%s2488] sm:$0xff]
    %v2490 = vld [vmem:[%s2488 + $0x8] sm:$0xff]
    %v2491 = vld [vmem:[%s2488 + $0x10] sm:$0xff]
    %v2492 = vld [vmem:[%s2488 + $0x18] sm:$0xff]
    %v2493 = vld [vmem:[%s2488 + $0x20] sm:$0xff]
    %v2494 = vld [vmem:[%s2488 + $0x28] sm:$0xff]
    %v2495 = vld [vmem:[%s2488 + $0x30] sm:$0xff]
    %v2496 = vld [vmem:[%s2488 + $0x38] sm:$0xff]
    %v2497 = vld [vmem:[%s2488 + $0x40] sm:$0xff]
    %v2498 = vld [vmem:[%s2488 + $0x48] sm:$0xff]
    %v2499 = vld [vmem:[%s2488 + $0x50] sm:$0xff]
    %v2500 = vld [vmem:[%s2488 + $0x58] sm:$0xff]
    %v2501 = vld [vmem:[%s2488 + $0x60] sm:$0xff]
    %v2502 = vld [vmem:[%s2488 + $0x68] sm:$0xff]
    %v2503 = vld [vmem:[%s2488 + $0x70] sm:$0xff]
    %v2504 = vld [vmem:[%s2488 + $0x78] sm:$0xff]
    %v2505 = vld [vmem:[%s2488 + $0x80] sm:$0xff]
    %v2506 = vld [vmem:[%s2488 + $0x88] sm:$0xff]
    %v2507 = vld [vmem:[%s2488 + $0x90] sm:$0xff]
    %v2508 = vld [vmem:[%s2488 + $0x98] sm:$0xff]
    %v2509 = vld [vmem:[%s2488 + $0xa0] sm:$0xff]
    %v2510 = vld [vmem:[%s2488 + $0xa8] sm:$0xff]
    %v2511 = vld [vmem:[%s2488 + $0xb0] sm:$0xff]
    %v2512 = vld [vmem:[%s2488 + $0xb8] sm:$0xff]
    %v2513 = vld [vmem:[%s2488 + $0xc0] sm:$0xff]
    %v2514 = vld [vmem:[%s2488 + $0xc8] sm:$0xff]
    %v2515 = vld [vmem:[%s2488 + $0xd0] sm:$0xff]
    %v2516 = vld [vmem:[%s2488 + $0xd8] sm:$0xff]
    %v2517 = vld [vmem:[%s2488 + $0xe0] sm:$0xff]
    %v2518 = vld [vmem:[%s2488 + $0xe8] sm:$0xff]
    %v2519 = vld [vmem:[%s2488 + $0xf0] sm:$0xff]
    %v2520 = vld [vmem:[%s2488 + $0xf8] sm:$0xff]
    %2521 = vmatpush.msra.mxu0 %v2504
    %2522 = vmatpush.msra.mxu0 %v2503
    %2523 = vmatpush.msra.mxu0 %v2502
    %2524 = vmatpush.msra.mxu0 %v2501
    %2525 = vmatpush.msra.mxu0 %v2500
    %2526 = vmatpush.msra.mxu0 %v2499
    %2527 = vmatpush.msra.mxu0 %v2498
    %2528 = vmatpush.msra.mxu0 %v2497
    %2529 = vmatpush.msra.mxu0 %v2496
    %2530 = vmatpush.msra.mxu0 %v2495
    %2531 = vmatpush.msra.mxu0 %v2494
    %2532 = vmatpush.msra.mxu0 %v2493
    %2533 = vmatpush.msra.mxu0 %v2492
    %2534 = vmatpush.msra.mxu0 %v2491
    %2535 = vmatpush.msra.mxu0 %v2490
    %2536 = vmatpush.msra.mxu0 %v2489
    %2537 = vmatmul.f32.gmra.mxu0 %v2486
    %v2538 = vpop.f32.mrf.mxu0
    %v2539 = vadd.f32 0.0, %v2538
    %2540 = vdwg.mxu0
    %2541 = vmatpush.msra.mxu0 %v2520
    %2542 = vmatpush.msra.mxu0 %v2519
    %2543 = vmatpush.msra.mxu0 %v2518
    %2544 = vmatpush.msra.mxu0 %v2517
    %2545 = vmatpush.msra.mxu0 %v2516
    %2546 = vmatpush.msra.mxu0 %v2515
    %2547 = vmatpush.msra.mxu0 %v2514
    %2548 = vmatpush.msra.mxu0 %v2513
    %2549 = vmatpush.msra.mxu0 %v2512
    %2550 = vmatpush.msra.mxu0 %v2511
    %2551 = vmatpush.msra.mxu0 %v2510
    %2552 = vmatpush.msra.mxu0 %v2509
    %2553 = vmatpush.msra.mxu0 %v2508
    %2554 = vmatpush.msra.mxu0 %v2507
    %2555 = vmatpush.msra.mxu0 %v2506
    %2556 = vmatpush.msra.mxu0 %v2505
    %2557 = vmatmul.f32.gmra.mxu0 %v2487
    %v2558 = vpop.f32.mrf.mxu0
    %v2559 = vadd.f32 %v2539, %v2558
    %2560 = vdwg.mxu0
    %v2561 = vadd.f32 %v2476, %v2559
    %v2562 = vrot.slane %v1245, 3
    %v2563 = vrot.slane %v1246, 3
    %v2566 = vrot.slane %v2315, 2
    %v2567 = vrot.slane %v2316, 2
    %v2570 = vsel %vm530, %v2562, %v2566
    %v2571 = vsel %vm530, %v2563, %v2567
    %s2572 = scalar_lea.vmem %s7, 768
    %v2573 = vld [vmem:[%s2572] sm:$0xff]
    %v2574 = vld [vmem:[%s2572 + $0x8] sm:$0xff]
    %v2575 = vld [vmem:[%s2572 + $0x10] sm:$0xff]
    %v2576 = vld [vmem:[%s2572 + $0x18] sm:$0xff]
    %v2577 = vld [vmem:[%s2572 + $0x20] sm:$0xff]
    %v2578 = vld [vmem:[%s2572 + $0x28] sm:$0xff]
    %v2579 = vld [vmem:[%s2572 + $0x30] sm:$0xff]
    %v2580 = vld [vmem:[%s2572 + $0x38] sm:$0xff]
    %v2581 = vld [vmem:[%s2572 + $0x40] sm:$0xff]
    %v2582 = vld [vmem:[%s2572 + $0x48] sm:$0xff]
    %v2583 = vld [vmem:[%s2572 + $0x50] sm:$0xff]
    %v2584 = vld [vmem:[%s2572 + $0x58] sm:$0xff]
    %v2585 = vld [vmem:[%s2572 + $0x60] sm:$0xff]
    %v2586 = vld [vmem:[%s2572 + $0x68] sm:$0xff]
    %v2587 = vld [vmem:[%s2572 + $0x70] sm:$0xff]
    %v2588 = vld [vmem:[%s2572 + $0x78] sm:$0xff]
    %v2589 = vld [vmem:[%s2572 + $0x80] sm:$0xff]
    %v2590 = vld [vmem:[%s2572 + $0x88] sm:$0xff]
    %v2591 = vld [vmem:[%s2572 + $0x90] sm:$0xff]
    %v2592 = vld [vmem:[%s2572 + $0x98] sm:$0xff]
    %v2593 = vld [vmem:[%s2572 + $0xa0] sm:$0xff]
    %v2594 = vld [vmem:[%s2572 + $0xa8] sm:$0xff]
    %v2595 = vld [vmem:[%s2572 + $0xb0] sm:$0xff]
    %v2596 = vld [vmem:[%s2572 + $0xb8] sm:$0xff]
    %v2597 = vld [vmem:[%s2572 + $0xc0] sm:$0xff]
    %v2598 = vld [vmem:[%s2572 + $0xc8] sm:$0xff]
    %v2599 = vld [vmem:[%s2572 + $0xd0] sm:$0xff]
    %v2600 = vld [vmem:[%s2572 + $0xd8] sm:$0xff]
    %v2601 = vld [vmem:[%s2572 + $0xe0] sm:$0xff]
    %v2602 = vld [vmem:[%s2572 + $0xe8] sm:$0xff]
    %v2603 = vld [vmem:[%s2572 + $0xf0] sm:$0xff]
    %v2604 = vld [vmem:[%s2572 + $0xf8] sm:$0xff]
    %2605 = vmatpush.msra.mxu0 %v2588
    %2606 = vmatpush.msra.mxu0 %v2587
    %2607 = vmatpush.msra.mxu0 %v2586
    %2608 = vmatpush.msra.mxu0 %v2585
    %2609 = vmatpush.msra.mxu0 %v2584
    %2610 = vmatpush.msra.mxu0 %v2583
    %2611 = vmatpush.msra.mxu0 %v2582
    %2612 = vmatpush.msra.mxu0 %v2581
    %2613 = vmatpush.msra.mxu0 %v2580
    %2614 = vmatpush.msra.mxu0 %v2579
    %2615 = vmatpush.msra.mxu0 %v2578
    %2616 = vmatpush.msra.mxu0 %v2577
    %2617 = vmatpush.msra.mxu0 %v2576
    %2618 = vmatpush.msra.mxu0 %v2575
    %2619 = vmatpush.msra.mxu0 %v2574
    %2620 = vmatpush.msra.mxu0 %v2573
    %2621 = vmatmul.f32.gmra.mxu0 %v2570
    %v2622 = vpop.f32.mrf.mxu0
    %v2623 = vadd.f32 0.0, %v2622
    %2624 = vdwg.mxu0
    %2625 = vmatpush.msra.mxu0 %v2604
    %2626 = vmatpush.msra.mxu0 %v2603
    %2627 = vmatpush.msra.mxu0 %v2602
    %2628 = vmatpush.msra.mxu0 %v2601
    %2629 = vmatpush.msra.mxu0 %v2600
    %2630 = vmatpush.msra.mxu0 %v2599
    %2631 = vmatpush.msra.mxu0 %v2598
    %2632 = vmatpush.msra.mxu0 %v2597
    %2633 = vmatpush.msra.mxu0 %v2596
    %2634 = vmatpush.msra.mxu0 %v2595
    %2635 = vmatpush.msra.mxu0 %v2594
    %2636 = vmatpush.msra.mxu0 %v2593
    %2637 = vmatpush.msra.mxu0 %v2592
    %2638 = vmatpush.msra.mxu0 %v2591
    %2639 = vmatpush.msra.mxu0 %v2590
    %2640 = vmatpush.msra.mxu0 %v2589
    %2641 = vmatmul.f32.gmra.mxu0 %v2571
    %v2642 = vpop.f32.mrf.mxu0
    %v2643 = vadd.f32 %v2623, %v2642
    %2644 = vdwg.mxu0
    %v2645 = vadd.f32 %v2561, %v2643
    %v2646 = vrot.slane %v1245, 4
    %v2647 = vrot.slane %v1246, 4
    %v2650 = vrot.slane %v2315, 3
    %v2651 = vrot.slane %v2316, 3
    %v2654 = vsel %vm530, %v2646, %v2650
    %v2655 = vsel %vm530, %v2647, %v2651
    %s2656 = scalar_lea.vmem %s7, 1024
    %v2657 = vld [vmem:[%s2656] sm:$0xff]
    %v2658 = vld [vmem:[%s2656 + $0x8] sm:$0xff]
    %v2659 = vld [vmem:[%s2656 + $0x10] sm:$0xff]
    %v2660 = vld [vmem:[%s2656 + $0x18] sm:$0xff]
    %v2661 = vld [vmem:[%s2656 + $0x20] sm:$0xff]
    %v2662 = vld [vmem:[%s2656 + $0x28] sm:$0xff]
    %v2663 = vld [vmem:[%s2656 + $0x30] sm:$0xff]
    %v2664 = vld [vmem:[%s2656 + $0x38] sm:$0xff]
    %v2665 = vld [vmem:[%s2656 + $0x40] sm:$0xff]
    %v2666 = vld [vmem:[%s2656 + $0x48] sm:$0xff]
    %v2667 = vld [vmem:[%s2656 + $0x50] sm:$0xff]
    %v2668 = vld [vmem:[%s2656 + $0x58] sm:$0xff]
    %v2669 = vld [vmem:[%s2656 + $0x60] sm:$0xff]
    %v2670 = vld [vmem:[%s2656 + $0x68] sm:$0xff]
    %v2671 = vld [vmem:[%s2656 + $0x70] sm:$0xff]
    %v2672 = vld [vmem:[%s2656 + $0x78] sm:$0xff]
    %v2673 = vld [vmem:[%s2656 + $0x80] sm:$0xff]
    %v2674 = vld [vmem:[%s2656 + $0x88] sm:$0xff]
    %v2675 = vld [vmem:[%s2656 + $0x90] sm:$0xff]
    %v2676 = vld [vmem:[%s2656 + $0x98] sm:$0xff]
    %v2677 = vld [vmem:[%s2656 + $0xa0] sm:$0xff]
    %v2678 = vld [vmem:[%s2656 + $0xa8] sm:$0xff]
    %v2679 = vld [vmem:[%s2656 + $0xb0] sm:$0xff]
    %v2680 = vld [vmem:[%s2656 + $0xb8] sm:$0xff]
    %v2681 = vld [vmem:[%s2656 + $0xc0] sm:$0xff]
    %v2682 = vld [vmem:[%s2656 + $0xc8] sm:$0xff]
    %v2683 = vld [vmem:[%s2656 + $0xd0] sm:$0xff]
    %v2684 = vld [vmem:[%s2656 + $0xd8] sm:$0xff]
    %v2685 = vld [vmem:[%s2656 + $0xe0] sm:$0xff]
    %v2686 = vld [vmem:[%s2656 + $0xe8] sm:$0xff]
    %v2687 = vld [vmem:[%s2656 + $0xf0] sm:$0xff]
    %v2688 = vld [vmem:[%s2656 + $0xf8] sm:$0xff]
    %2689 = vmatpush.msra.mxu0 %v2672
    %2690 = vmatpush.msra.mxu0 %v2671
    %2691 = vmatpush.msra.mxu0 %v2670
    %2692 = vmatpush.msra.mxu0 %v2669
    %2693 = vmatpush.msra.mxu0 %v2668
    %2694 = vmatpush.msra.mxu0 %v2667
    %2695 = vmatpush.msra.mxu0 %v2666
    %2696 = vmatpush.msra.mxu0 %v2665
    %2697 = vmatpush.msra.mxu0 %v2664
    %2698 = vmatpush.msra.mxu0 %v2663
    %2699 = vmatpush.msra.mxu0 %v2662
    %2700 = vmatpush.msra.mxu0 %v2661
    %2701 = vmatpush.msra.mxu0 %v2660
    %2702 = vmatpush.msra.mxu0 %v2659
    %2703 = vmatpush.msra.mxu0 %v2658
    %2704 = vmatpush.msra.mxu0 %v2657
    %2705 = vmatmul.f32.gmra.mxu0 %v2654
    %v2706 = vpop.f32.mrf.mxu0
    %v2707 = vadd.f32 0.0, %v2706
    %2708 = vdwg.mxu0
    %2709 = vmatpush.msra.mxu0 %v2688
    %2710 = vmatpush.msra.mxu0 %v2687
    %2711 = vmatpush.msra.mxu0 %v2686
    %2712 = vmatpush.msra.mxu0 %v2685
    %2713 = vmatpush.msra.mxu0 %v2684
    %2714 = vmatpush.msra.mxu0 %v2683
    %2715 = vmatpush.msra.mxu0 %v2682
    %2716 = vmatpush.msra.mxu0 %v2681
    %2717 = vmatpush.msra.mxu0 %v2680
    %2718 = vmatpush.msra.mxu0 %v2679
    %2719 = vmatpush.msra.mxu0 %v2678
    %2720 = vmatpush.msra.mxu0 %v2677
    %2721 = vmatpush.msra.mxu0 %v2676
    %2722 = vmatpush.msra.mxu0 %v2675
    %2723 = vmatpush.msra.mxu0 %v2674
    %2724 = vmatpush.msra.mxu0 %v2673
    %2725 = vmatmul.f32.gmra.mxu0 %v2655
    %v2726 = vpop.f32.mrf.mxu0
    %v2727 = vadd.f32 %v2707, %v2726
    %2728 = vdwg.mxu0
    %v2729 = vadd.f32 %v2645, %v2727
    %v2730 = vrot.slane %v1245, 5
    %v2731 = vrot.slane %v1246, 5
    %v2734 = vrot.slane %v2315, 4
    %v2735 = vrot.slane %v2316, 4
    %v2738 = vsel %vm530, %v2730, %v2734
    %v2739 = vsel %vm530, %v2731, %v2735
    %s2740 = scalar_lea.vmem %s7, 1280
    %v2741 = vld [vmem:[%s2740] sm:$0xff]
    %v2742 = vld [vmem:[%s2740 + $0x8] sm:$0xff]
    %v2743 = vld [vmem:[%s2740 + $0x10] sm:$0xff]
    %v2744 = vld [vmem:[%s2740 + $0x18] sm:$0xff]
    %v2745 = vld [vmem:[%s2740 + $0x20] sm:$0xff]
    %v2746 = vld [vmem:[%s2740 + $0x28] sm:$0xff]
    %v2747 = vld [vmem:[%s2740 + $0x30] sm:$0xff]
    %v2748 = vld [vmem:[%s2740 + $0x38] sm:$0xff]
    %v2749 = vld [vmem:[%s2740 + $0x40] sm:$0xff]
    %v2750 = vld [vmem:[%s2740 + $0x48] sm:$0xff]
    %v2751 = vld [vmem:[%s2740 + $0x50] sm:$0xff]
    %v2752 = vld [vmem:[%s2740 + $0x58] sm:$0xff]
    %v2753 = vld [vmem:[%s2740 + $0x60] sm:$0xff]
    %v2754 = vld [vmem:[%s2740 + $0x68] sm:$0xff]
    %v2755 = vld [vmem:[%s2740 + $0x70] sm:$0xff]
    %v2756 = vld [vmem:[%s2740 + $0x78] sm:$0xff]
    %v2757 = vld [vmem:[%s2740 + $0x80] sm:$0xff]
    %v2758 = vld [vmem:[%s2740 + $0x88] sm:$0xff]
    %v2759 = vld [vmem:[%s2740 + $0x90] sm:$0xff]
    %v2760 = vld [vmem:[%s2740 + $0x98] sm:$0xff]
    %v2761 = vld [vmem:[%s2740 + $0xa0] sm:$0xff]
    %v2762 = vld [vmem:[%s2740 + $0xa8] sm:$0xff]
    %v2763 = vld [vmem:[%s2740 + $0xb0] sm:$0xff]
    %v2764 = vld [vmem:[%s2740 + $0xb8] sm:$0xff]
    %v2765 = vld [vmem:[%s2740 + $0xc0] sm:$0xff]
    %v2766 = vld [vmem:[%s2740 + $0xc8] sm:$0xff]
    %v2767 = vld [vmem:[%s2740 + $0xd0] sm:$0xff]
    %v2768 = vld [vmem:[%s2740 + $0xd8] sm:$0xff]
    %v2769 = vld [vmem:[%s2740 + $0xe0] sm:$0xff]
    %v2770 = vld [vmem:[%s2740 + $0xe8] sm:$0xff]
    %v2771 = vld [vmem:[%s2740 + $0xf0] sm:$0xff]
    %v2772 = vld [vmem:[%s2740 + $0xf8] sm:$0xff]
    %2773 = vmatpush.msra.mxu0 %v2756
    %2774 = vmatpush.msra.mxu0 %v2755
    %2775 = vmatpush.msra.mxu0 %v2754
    %2776 = vmatpush.msra.mxu0 %v2753
    %2777 = vmatpush.msra.mxu0 %v2752
    %2778 = vmatpush.msra.mxu0 %v2751
    %2779 = vmatpush.msra.mxu0 %v2750
    %2780 = vmatpush.msra.mxu0 %v2749
    %2781 = vmatpush.msra.mxu0 %v2748
    %2782 = vmatpush.msra.mxu0 %v2747
    %2783 = vmatpush.msra.mxu0 %v2746
    %2784 = vmatpush.msra.mxu0 %v2745
    %2785 = vmatpush.msra.mxu0 %v2744
    %2786 = vmatpush.msra.mxu0 %v2743
    %2787 = vmatpush.msra.mxu0 %v2742
    %2788 = vmatpush.msra.mxu0 %v2741
    %2789 = vmatmul.f32.gmra.mxu0 %v2738
    %v2790 = vpop.f32.mrf.mxu0
    %v2791 = vadd.f32 0.0, %v2790
    %2792 = vdwg.mxu0
    %2793 = vmatpush.msra.mxu0 %v2772
    %2794 = vmatpush.msra.mxu0 %v2771
    %2795 = vmatpush.msra.mxu0 %v2770
    %2796 = vmatpush.msra.mxu0 %v2769
    %2797 = vmatpush.msra.mxu0 %v2768
    %2798 = vmatpush.msra.mxu0 %v2767
    %2799 = vmatpush.msra.mxu0 %v2766
    %2800 = vmatpush.msra.mxu0 %v2765
    %2801 = vmatpush.msra.mxu0 %v2764
    %2802 = vmatpush.msra.mxu0 %v2763
    %2803 = vmatpush.msra.mxu0 %v2762
    %2804 = vmatpush.msra.mxu0 %v2761
    %2805 = vmatpush.msra.mxu0 %v2760
    %2806 = vmatpush.msra.mxu0 %v2759
    %2807 = vmatpush.msra.mxu0 %v2758
    %2808 = vmatpush.msra.mxu0 %v2757
    %2809 = vmatmul.f32.gmra.mxu0 %v2739
    %v2810 = vpop.f32.mrf.mxu0
    %v2811 = vadd.f32 %v2791, %v2810
    %2812 = vdwg.mxu0
    %v2813 = vadd.f32 %v2729, %v2811
    %v2814 = vrot.slane %v1245, 6
    %v2815 = vrot.slane %v1246, 6
    %v2818 = vrot.slane %v2315, 5
    %v2819 = vrot.slane %v2316, 5
    %v2822 = vsel %vm530, %v2814, %v2818
    %v2823 = vsel %vm530, %v2815, %v2819
    %s2824 = scalar_lea.vmem %s7, 1536
    %v2825 = vld [vmem:[%s2824] sm:$0xff]
    %v2826 = vld [vmem:[%s2824 + $0x8] sm:$0xff]
    %v2827 = vld [vmem:[%s2824 + $0x10] sm:$0xff]
    %v2828 = vld [vmem:[%s2824 + $0x18] sm:$0xff]
    %v2829 = vld [vmem:[%s2824 + $0x20] sm:$0xff]
    %v2830 = vld [vmem:[%s2824 + $0x28] sm:$0xff]
    %v2831 = vld [vmem:[%s2824 + $0x30] sm:$0xff]
    %v2832 = vld [vmem:[%s2824 + $0x38] sm:$0xff]
    %v2833 = vld [vmem:[%s2824 + $0x40] sm:$0xff]
    %v2834 = vld [vmem:[%s2824 + $0x48] sm:$0xff]
    %v2835 = vld [vmem:[%s2824 + $0x50] sm:$0xff]
    %v2836 = vld [vmem:[%s2824 + $0x58] sm:$0xff]
    %v2837 = vld [vmem:[%s2824 + $0x60] sm:$0xff]
    %v2838 = vld [vmem:[%s2824 + $0x68] sm:$0xff]
    %v2839 = vld [vmem:[%s2824 + $0x70] sm:$0xff]
    %v2840 = vld [vmem:[%s2824 + $0x78] sm:$0xff]
    %v2841 = vld [vmem:[%s2824 + $0x80] sm:$0xff]
    %v2842 = vld [vmem:[%s2824 + $0x88] sm:$0xff]
    %v2843 = vld [vmem:[%s2824 + $0x90] sm:$0xff]
    %v2844 = vld [vmem:[%s2824 + $0x98] sm:$0xff]
    %v2845 = vld [vmem:[%s2824 + $0xa0] sm:$0xff]
    %v2846 = vld [vmem:[%s2824 + $0xa8] sm:$0xff]
    %v2847 = vld [vmem:[%s2824 + $0xb0] sm:$0xff]
    %v2848 = vld [vmem:[%s2824 + $0xb8] sm:$0xff]
    %v2849 = vld [vmem:[%s2824 + $0xc0] sm:$0xff]
    %v2850 = vld [vmem:[%s2824 + $0xc8] sm:$0xff]
    %v2851 = vld [vmem:[%s2824 + $0xd0] sm:$0xff]
    %v2852 = vld [vmem:[%s2824 + $0xd8] sm:$0xff]
    %v2853 = vld [vmem:[%s2824 + $0xe0] sm:$0xff]
    %v2854 = vld [vmem:[%s2824 + $0xe8] sm:$0xff]
    %v2855 = vld [vmem:[%s2824 + $0xf0] sm:$0xff]
    %v2856 = vld [vmem:[%s2824 + $0xf8] sm:$0xff]
    %2857 = vmatpush.msra.mxu0 %v2840
    %2858 = vmatpush.msra.mxu0 %v2839
    %2859 = vmatpush.msra.mxu0 %v2838
    %2860 = vmatpush.msra.mxu0 %v2837
    %2861 = vmatpush.msra.mxu0 %v2836
    %2862 = vmatpush.msra.mxu0 %v2835
    %2863 = vmatpush.msra.mxu0 %v2834
    %2864 = vmatpush.msra.mxu0 %v2833
    %2865 = vmatpush.msra.mxu0 %v2832
    %2866 = vmatpush.msra.mxu0 %v2831
    %2867 = vmatpush.msra.mxu0 %v2830
    %2868 = vmatpush.msra.mxu0 %v2829
    %2869 = vmatpush.msra.mxu0 %v2828
    %2870 = vmatpush.msra.mxu0 %v2827
    %2871 = vmatpush.msra.mxu0 %v2826
    %2872 = vmatpush.msra.mxu0 %v2825
    %2873 = vmatmul.f32.gmra.mxu0 %v2822
    %v2874 = vpop.f32.mrf.mxu0
    %v2875 = vadd.f32 0.0, %v2874
    %2876 = vdwg.mxu0
    %2877 = vmatpush.msra.mxu0 %v2856
    %2878 = vmatpush.msra.mxu0 %v2855
    %2879 = vmatpush.msra.mxu0 %v2854
    %2880 = vmatpush.msra.mxu0 %v2853
    %2881 = vmatpush.msra.mxu0 %v2852
    %2882 = vmatpush.msra.mxu0 %v2851
    %2883 = vmatpush.msra.mxu0 %v2850
    %2884 = vmatpush.msra.mxu0 %v2849
    %2885 = vmatpush.msra.mxu0 %v2848
    %2886 = vmatpush.msra.mxu0 %v2847
    %2887 = vmatpush.msra.mxu0 %v2846
    %2888 = vmatpush.msra.mxu0 %v2845
    %2889 = vmatpush.msra.mxu0 %v2844
    %2890 = vmatpush.msra.mxu0 %v2843
    %2891 = vmatpush.msra.mxu0 %v2842
    %2892 = vmatpush.msra.mxu0 %v2841
    %2893 = vmatmul.f32.gmra.mxu0 %v2823
    %v2894 = vpop.f32.mrf.mxu0
    %v2895 = vadd.f32 %v2875, %v2894
    %2896 = vdwg.mxu0
    %v2897 = vadd.f32 %v2813, %v2895
    %v2898 = vrot.slane %v1245, 7
    %v2899 = vrot.slane %v1246, 7
    %v2902 = vrot.slane %v2315, 6
    %v2903 = vrot.slane %v2316, 6
    %v2906 = vsel %vm530, %v2898, %v2902
    %v2907 = vsel %vm530, %v2899, %v2903
    %s2908 = scalar_lea.vmem %s7, 1792
    %v2909 = vld [vmem:[%s2908] sm:$0xff]
    %v2910 = vld [vmem:[%s2908 + $0x8] sm:$0xff]
    %v2911 = vld [vmem:[%s2908 + $0x10] sm:$0xff]
    %v2912 = vld [vmem:[%s2908 + $0x18] sm:$0xff]
    %v2913 = vld [vmem:[%s2908 + $0x20] sm:$0xff]
    %v2914 = vld [vmem:[%s2908 + $0x28] sm:$0xff]
    %v2915 = vld [vmem:[%s2908 + $0x30] sm:$0xff]
    %v2916 = vld [vmem:[%s2908 + $0x38] sm:$0xff]
    %v2917 = vld [vmem:[%s2908 + $0x40] sm:$0xff]
    %v2918 = vld [vmem:[%s2908 + $0x48] sm:$0xff]
    %v2919 = vld [vmem:[%s2908 + $0x50] sm:$0xff]
    %v2920 = vld [vmem:[%s2908 + $0x58] sm:$0xff]
    %v2921 = vld [vmem:[%s2908 + $0x60] sm:$0xff]
    %v2922 = vld [vmem:[%s2908 + $0x68] sm:$0xff]
    %v2923 = vld [vmem:[%s2908 + $0x70] sm:$0xff]
    %v2924 = vld [vmem:[%s2908 + $0x78] sm:$0xff]
    %v2925 = vld [vmem:[%s2908 + $0x80] sm:$0xff]
    %v2926 = vld [vmem:[%s2908 + $0x88] sm:$0xff]
    %v2927 = vld [vmem:[%s2908 + $0x90] sm:$0xff]
    %v2928 = vld [vmem:[%s2908 + $0x98] sm:$0xff]
    %v2929 = vld [vmem:[%s2908 + $0xa0] sm:$0xff]
    %v2930 = vld [vmem:[%s2908 + $0xa8] sm:$0xff]
    %v2931 = vld [vmem:[%s2908 + $0xb0] sm:$0xff]
    %v2932 = vld [vmem:[%s2908 + $0xb8] sm:$0xff]
    %v2933 = vld [vmem:[%s2908 + $0xc0] sm:$0xff]
    %v2934 = vld [vmem:[%s2908 + $0xc8] sm:$0xff]
    %v2935 = vld [vmem:[%s2908 + $0xd0] sm:$0xff]
    %v2936 = vld [vmem:[%s2908 + $0xd8] sm:$0xff]
    %v2937 = vld [vmem:[%s2908 + $0xe0] sm:$0xff]
    %v2938 = vld [vmem:[%s2908 + $0xe8] sm:$0xff]
    %v2939 = vld [vmem:[%s2908 + $0xf0] sm:$0xff]
    %v2940 = vld [vmem:[%s2908 + $0xf8] sm:$0xff]
    %2941 = vmatpush.msra.mxu0 %v2924
    %2942 = vmatpush.msra.mxu0 %v2923
    %2943 = vmatpush.msra.mxu0 %v2922
    %2944 = vmatpush.msra.mxu0 %v2921
    %2945 = vmatpush.msra.mxu0 %v2920
    %2946 = vmatpush.msra.mxu0 %v2919
    %2947 = vmatpush.msra.mxu0 %v2918
    %2948 = vmatpush.msra.mxu0 %v2917
    %2949 = vmatpush.msra.mxu0 %v2916
    %2950 = vmatpush.msra.mxu0 %v2915
    %2951 = vmatpush.msra.mxu0 %v2914
    %2952 = vmatpush.msra.mxu0 %v2913
    %2953 = vmatpush.msra.mxu0 %v2912
    %2954 = vmatpush.msra.mxu0 %v2911
    %2955 = vmatpush.msra.mxu0 %v2910
    %2956 = vmatpush.msra.mxu0 %v2909
    %2957 = vmatmul.f32.gmra.mxu0 %v2906
    %v2958 = vpop.f32.mrf.mxu0
    %v2959 = vadd.f32 0.0, %v2958
    %2960 = vdwg.mxu0
    %2961 = vmatpush.msra.mxu0 %v2940
    %2962 = vmatpush.msra.mxu0 %v2939
    %2963 = vmatpush.msra.mxu0 %v2938
    %2964 = vmatpush.msra.mxu0 %v2937
    %2965 = vmatpush.msra.mxu0 %v2936
    %2966 = vmatpush.msra.mxu0 %v2935
    %2967 = vmatpush.msra.mxu0 %v2934
    %2968 = vmatpush.msra.mxu0 %v2933
    %2969 = vmatpush.msra.mxu0 %v2932
    %2970 = vmatpush.msra.mxu0 %v2931
    %2971 = vmatpush.msra.mxu0 %v2930
    %2972 = vmatpush.msra.mxu0 %v2929
    %2973 = vmatpush.msra.mxu0 %v2928
    %2974 = vmatpush.msra.mxu0 %v2927
    %2975 = vmatpush.msra.mxu0 %v2926
    %2976 = vmatpush.msra.mxu0 %v2925
    %2977 = vmatmul.f32.gmra.mxu0 %v2907
    %v2978 = vpop.f32.mrf.mxu0
    %v2979 = vadd.f32 %v2959, %v2978
    %2980 = vdwg.mxu0
    %v2981 = vadd.f32 %v2897, %v2979
    %vm2982 = vcmask 58368
    %2983 = vst.msk [vmem:[#allocation2] sm:$0x3] %vm2982, %v2981
    // Predicated region
    $region34: #{tpu_custom_call.1} parent=1 // pred_check
      _
    $region35: #{tpu_custom_call.1} parent=1 // pred_check_branch
      %2985 = sbr.rel (0) target = $region37
    $region36: #{tpu_custom_call.1} parent=1 // pred_region
      %2987 = vsyncadd [#allocation3], 0
      %s2989 = sshll.u32 [#allocation2], 4
      %s2990 = int_to_ptr.vmem [resolvable:$true] %s2989
      %s2991 = sshll.u32 %s8, 4
      %s2992 = int_to_ptr.hbm [resolvable:$true] %s2991
      %2994 = dma.vmem_to_hbm [thread:$0]  %s2990, 32, %s2992, [#allocation3]
    $region37: #{tpu_custom_call.1} parent=1 // pred_fallthru
      _
    // Predicated region
    $region38: #{tpu_custom_call.1} parent=1 // pred_check
      _
    $region39: #{tpu_custom_call.1} parent=1 // pred_check_branch
      %2996 = sbr.rel (0) target = $region41
    $region40: #{tpu_custom_call.1} parent=1 // pred_region
      %2998 = dma.done [#allocation3], 32
    $region41: #{tpu_custom_call.1} parent=1 // pred_fallthru
      _
    %2999 = vsyncpa [#allocation3], 1

</llo_original>
